<compile_context>
chip_gen: v7x
topology: tpu7x:2x2x1
jax: 0.10.0
libtpu: 0.0.40
codegen_flags: <defaults>
</compile_context>

<pallas_src>
import functools

import jax
import jax.numpy as jnp
from jax.experimental import pallas as pl
from jax.experimental.pallas import tpu as pltpu


def _vecint_kernel(vec_ref, out_ref, *, H, W, nsteps, scale):
    """Fused VecInt forward for one batch element (block = (1, 2, H, W))."""
    v = vec_ref[...]                          # (1, 2, H, W) float32
    fy0 = v[0, 0] * scale                     # (H, W) row (y) displacement
    fx0 = v[0, 1] * scale                     # (H, W) col (x) displacement

    # Loop-invariant tensors, hoisted out of the step loop (JAX does not CSE
    # broadcast/iota inside the loop).
    row = jax.lax.broadcasted_iota(jnp.int32, (H, W), 0).astype(jnp.float32)
    col = jax.lax.broadcasted_iota(jnp.int32, (H, W), 1).astype(jnp.float32)
    y_iota = jax.lax.broadcasted_iota(jnp.int32, (H, W, H), 2)
    x_iota = jax.lax.broadcasted_iota(jnp.int32, (H, W, W), 2)

    def step(_, carry):
        fy, fx = carry
        # normalize -> un-normalize (align_corners=True) is the identity:
        iy = row + fy                         # (H, W) pixel-space sample y
        ix = col + fx                         # (H, W) pixel-space sample x
        y0f = jnp.floor(iy)
        x0f = jnp.floor(ix)
        wy1 = iy - y0f
        wx1 = ix - x0f
        wy0 = 1.0 - wy1
        wx0 = 1.0 - wx1
        y0 = y0f.astype(jnp.int32)
        x0 = x0f.astype(jnp.int32)

        # Factored bilinear weights.  ry[h, w, y] / cx[h, w, x] are the row /
        # column interpolation weights; out-of-bounds corner indices match no
        # iota entry -> zero weight (grid_sample padding_mode='zeros').
        ry = (jnp.where(y_iota == y0[..., None], wy0[..., None], 0.0)
              + jnp.where(y_iota == (y0 + 1)[..., None], wy1[..., None], 0.0))
        cx = (jnp.where(x_iota == x0[..., None], wx0[..., None], 0.0)
              + jnp.where(x_iota == (x0 + 1)[..., None], wx1[..., None], 0.0))

        def warp(src):
            # src: (H, W) channel of the *current* field (the sampling source).
            srcb = jnp.broadcast_to(src[None, :, :], (H, H, W))
            # s[h, w, x] = sum_y ry[h, w, y] * src[y, x]   (batched MXU matmul)
            s = jax.lax.dot_general(
                ry, srcb,
                dimension_numbers=(((2,), (1,)), ((0,), (0,))),
                preferred_element_type=jnp.float32)         # (H, W, W)
            # warped[h, w] = sum_x cx[h, w, x] * s[h, w, x]  (VPU mul + reduce)
            return jnp.sum(cx * s, axis=-1)                  # (H, W)

        # Both channels are sampled with the same flow (the current field).
        return (fy + warp(fy), fx + warp(fx))

    fy, fx = jax.lax.fori_loop(0, nsteps, step, (fy0, fx0))
    out_ref[0, 0, :, :] = fy
    out_ref[0, 1, :, :] = fx


def vecint_forward(vec, nsteps):
    """Pallas implementation of VecInt.forward. vec: (N, 2, H, W)."""
    assert nsteps >= 0
    N, C, H, W = vec.shape
    assert C == 2, "2-D flow field expected"
    scale = 1.0 / (2 ** nsteps)
    vec = vec.astype(jnp.float32)
    spec = pl.BlockSpec((1, C, H, W), lambda n: (n, 0, 0, 0))
    # NOTE: for much larger H, W, raise vmem_limit_bytes in CompilerParams;
    # at these sizes the (H, W, H)/(H, W, W) temporaries are only a few KiB.
    return pl.pallas_call(
        functools.partial(_vecint_kernel, H=H, W=W, nsteps=nsteps, scale=scale),
        out_shape=jax.ShapeDtypeStruct((N, C, H, W), jnp.float32),
        grid_spec=pltpu.PrefetchScalarGridSpec(
            num_scalar_prefetch=0,
            grid=(N,),
            in_specs=[spec],
            out_specs=spec,
        ),
        compiler_params=pltpu.CompilerParams(
            dimension_semantics=("parallel",)),
    )(vec)


# ---------------- pure-JAX reference (for correctness check only) -----------
def _ref_step(vec):
    N, C, H, W = vec.shape
    row = jnp.arange(H, dtype=jnp.float32)[:, None]
    col = jnp.arange(W, dtype=jnp.float32)[None, :]
    fy = vec[:, 0]
    fx = vec[:, 1]
    ny = 2.0 * ((row + fy) / (H - 1) - 0.5)
    nx = 2.0 * ((col + fx) / (W - 1) - 0.5)
    iy = (ny + 1.0) * 0.5 * (H - 1)
    ix = (nx + 1.0) * 0.5 * (W - 1)
    y0 = jnp.floor(iy)
    x0 = jnp.floor(ix)
    wy1 = iy - y0
    wx1 = ix - x0
    vec_flat = vec.reshape(N, C, H * W)
    warped = jnp.zeros_like(vec)
    for dy, wy in ((0, 1.0 - wy1), (1, wy1)):
        for dx, wx in ((0, 1.0 - wx1), (1, wx1)):
            yy = y0.astype(jnp.int32) + dy
            xx = x0.astype(jnp.int32) + dx
            valid = (yy >= 0) & (yy < H) & (xx >= 0) & (xx < W)
            yc = jnp.clip(yy, 0, H - 1)
            xc = jnp.clip(xx, 0, W - 1)
            idx = (yc * W + xc).reshape(N, 1, H * W)
            g = jnp.take_along_axis(vec_flat, idx, axis=2).reshape(N, C, H, W)
            w = jnp.where(valid, wy * wx, 0.0)[:, None]
            warped = warped + w * g
    return vec + warped


def _ref_vecint(vec, nsteps):
    vec = vec.astype(jnp.float32) * (1.0 / 2 ** nsteps)
    for _ in range(nsteps):
        vec = _ref_step(vec)
    return vec


if __name__ == "__main__":
    N, C, H, W = 2, 2, 16, 16
    nsteps = 5

    key = jax.random.PRNGKey(0)
    # deterministic synthetic vector field (moderate displacements)
    vec = 2.0 * jax.random.normal(key, (N, C, H, W), dtype=jnp.float32)

    out = jax.jit(lambda v: vecint_forward(v, nsteps))(vec)
    out = jax.block_until_ready(out)

    ref = jax.block_until_ready(_ref_vecint(vec, nsteps))
    assert out.shape == (N, C, H, W)
    assert jnp.allclose(out, ref, atol=1e-4, rtol=1e-4), (
        float(jnp.max(jnp.abs(out - ref))))

    print("KERNEL_OK")
</pallas_src>

<mosaic_0001>
module attributes {stable_mosaic.version = 11 : i64} {
  func.func @_vecint_kernel(%arg0: i32, %arg1: memref<1x2x16x16xf32, #tpu.memory_space<vmem>>, %arg2: memref<1x2x16x16xf32, #tpu.memory_space<vmem>>) attributes {dimension_semantics = [#tpu.dimension_semantics<parallel>], iteration_bounds = array<i64: 2>, scalar_prefetch = 0 : i64, scratch_operands = 0 : i64, tpu.core_type = #tpu.core_type<tc>, window_params = [{transform_indices = @transform_0, window_bounds = array<i64: 1, 2, 16, 16>}, {transform_indices = @transform_1, window_bounds = array<i64: 1, 2, 16, 16>}]} {
    %c0 = arith.constant 0 : index
    %c0_0 = arith.constant 0 : index
    %c0_1 = arith.constant 0 : index
    %c0_2 = arith.constant 0 : index
    %0 = vector.load %arg1[%c0, %c0_0, %c0_1, %c0_2] : memref<1x2x16x16xf32, #tpu.memory_space<vmem>>, vector<1x2x16x16xf32>
    %1 = vector.extract_strided_slice %0 {offsets = [0, 0, 0, 0], sizes = [1, 1, 16, 16], strides = [1, 1, 1, 1]} : vector<1x2x16x16xf32> to vector<1x1x16x16xf32>
    %2 = vector.shape_cast %1 : vector<1x1x16x16xf32> to vector<16x16xf32>
    %cst = arith.constant 3.125000e-02 : f32
    %3 = vector.broadcast %cst : f32 to vector<16x16xf32>
    %4 = arith.mulf %2, %3 : vector<16x16xf32>
    %5 = vector.extract_strided_slice %0 {offsets = [0, 1, 0, 0], sizes = [1, 1, 16, 16], strides = [1, 1, 1, 1]} : vector<1x2x16x16xf32> to vector<1x1x16x16xf32>
    %6 = vector.shape_cast %5 : vector<1x1x16x16xf32> to vector<16x16xf32>
    %cst_3 = arith.constant 3.125000e-02 : f32
    %7 = vector.broadcast %cst_3 : f32 to vector<16x16xf32>
    %8 = arith.mulf %6, %7 : vector<16x16xf32>
    %9 = tpu.iota {dimensions = array<i32: 0>} : vector<16x16xi32>
    %10 = arith.sitofp %9 : vector<16x16xi32> to vector<16x16xf32>
    %11 = tpu.iota {dimensions = array<i32: 1>} : vector<16x16xi32>
    %12 = arith.sitofp %11 : vector<16x16xi32> to vector<16x16xf32>
    %13 = tpu.iota {dimensions = array<i32: 2>} : vector<16x16x16xi32>
    %14 = tpu.iota {dimensions = array<i32: 2>} : vector<16x16x16xi32>
    %c0_i32 = arith.constant 0 : i32
    %c5_i32 = arith.constant 5 : i32
    %15 = arith.addi %c0_i32, %c5_i32 : i32
    %c1_i32 = arith.constant 1 : i32
    %16:2 = scf.for %arg3 = %c0_i32 to %15 step %c1_i32 iter_args(%arg4 = %4, %arg5 = %8) -> (vector<16x16xf32>, vector<16x16xf32>)  : i32 {
      %23 = arith.addf %10, %arg4 : vector<16x16xf32>
      %24 = arith.addf %12, %arg5 : vector<16x16xf32>
      %25 = math.floor %23 : vector<16x16xf32>
      %26 = math.floor %24 : vector<16x16xf32>
      %27 = arith.subf %23, %25 : vector<16x16xf32>
      %28 = arith.subf %24, %26 : vector<16x16xf32>
      %cst_11 = arith.constant 1.000000e+00 : f32
      %29 = vector.broadcast %cst_11 : f32 to vector<16x16xf32>
      %30 = arith.subf %29, %27 : vector<16x16xf32>
      %cst_12 = arith.constant 1.000000e+00 : f32
      %31 = vector.broadcast %cst_12 : f32 to vector<16x16xf32>
      %32 = arith.subf %31, %28 : vector<16x16xf32>
      %33 = arith.fptosi %25 : vector<16x16xf32> to vector<16x16xi32>
      %34 = arith.fptosi %26 : vector<16x16xf32> to vector<16x16xi32>
      %35 = vector.shape_cast %33 : vector<16x16xi32> to vector<16x16x1xi32>
      %36 = vector.broadcast %35 : vector<16x16x1xi32> to vector<16x16x16xi32>
      %37 = arith.cmpi eq, %13, %36 : vector<16x16x16xi32>
      %38 = vector.shape_cast %30 : vector<16x16xf32> to vector<16x16x1xf32>
      %cst_13 = arith.constant 0.000000e+00 : f32
      %39 = vector.shape_cast %38 : vector<16x16x1xf32> to vector<16x16x1xf32>
      %40 = vector.broadcast %39 : vector<16x16x1xf32> to vector<16x16x16xf32>
      %41 = vector.broadcast %cst_13 : f32 to vector<16x16x16xf32>
      %42 = arith.select %37, %40, %41 : vector<16x16x16xi1>, vector<16x16x16xf32>
      %c1_i32_14 = arith.constant 1 : i32
      %43 = vector.broadcast %c1_i32_14 : i32 to vector<16x16xi32>
      %44 = arith.addi %33, %43 : vector<16x16xi32>
      %45 = vector.shape_cast %44 : vector<16x16xi32> to vector<16x16x1xi32>
      %46 = vector.broadcast %45 : vector<16x16x1xi32> to vector<16x16x16xi32>
      %47 = arith.cmpi eq, %13, %46 : vector<16x16x16xi32>
      %48 = vector.shape_cast %27 : vector<16x16xf32> to vector<16x16x1xf32>
      %cst_15 = arith.constant 0.000000e+00 : f32
      %49 = vector.shape_cast %48 : vector<16x16x1xf32> to vector<16x16x1xf32>
      %50 = vector.broadcast %49 : vector<16x16x1xf32> to vector<16x16x16xf32>
      %51 = vector.broadcast %cst_15 : f32 to vector<16x16x16xf32>
      %52 = arith.select %47, %50, %51 : vector<16x16x16xi1>, vector<16x16x16xf32>
      %53 = arith.addf %42, %52 : vector<16x16x16xf32>
      %54 = vector.shape_cast %34 : vector<16x16xi32> to vector<16x16x1xi32>
      %55 = vector.broadcast %54 : vector<16x16x1xi32> to vector<16x16x16xi32>
      %56 = arith.cmpi eq, %14, %55 : vector<16x16x16xi32>
      %57 = vector.shape_cast %32 : vector<16x16xf32> to vector<16x16x1xf32>
      %cst_16 = arith.constant 0.000000e+00 : f32
      %58 = vector.shape_cast %57 : vector<16x16x1xf32> to vector<16x16x1xf32>
      %59 = vector.broadcast %58 : vector<16x16x1xf32> to vector<16x16x16xf32>
      %60 = vector.broadcast %cst_16 : f32 to vector<16x16x16xf32>
      %61 = arith.select %56, %59, %60 : vector<16x16x16xi1>, vector<16x16x16xf32>
      %c1_i32_17 = arith.constant 1 : i32
      %62 = vector.broadcast %c1_i32_17 : i32 to vector<16x16xi32>
      %63 = arith.addi %34, %62 : vector<16x16xi32>
      %64 = vector.shape_cast %63 : vector<16x16xi32> to vector<16x16x1xi32>
      %65 = vector.broadcast %64 : vector<16x16x1xi32> to vector<16x16x16xi32>
      %66 = arith.cmpi eq, %14, %65 : vector<16x16x16xi32>
      %67 = vector.shape_cast %28 : vector<16x16xf32> to vector<16x16x1xf32>
      %cst_18 = arith.constant 0.000000e+00 : f32
      %68 = vector.shape_cast %67 : vector<16x16x1xf32> to vector<16x16x1xf32>
      %69 = vector.broadcast %68 : vector<16x16x1xf32> to vector<16x16x16xf32>
      %70 = vector.broadcast %cst_18 : f32 to vector<16x16x16xf32>
      %71 = arith.select %66, %69, %70 : vector<16x16x16xi1>, vector<16x16x16xf32>
      %72 = arith.addf %61, %71 : vector<16x16x16xf32>
      %73 = vector.shape_cast %arg4 : vector<16x16xf32> to vector<1x16x16xf32>
      %74 = vector.shape_cast %73 : vector<1x16x16xf32> to vector<1x16x16xf32>
      %75 = vector.broadcast %74 : vector<1x16x16xf32> to vector<16x16x16xf32>
      %cst_19 = arith.constant dense<0.000000e+00> : vector<16x16x16xf32>
      %76 = tpu.matmul %53, %75, %cst_19 {dimension_numbers = #tpu.dot_dimension_numbers<[2], [1], [1], [2], [0, 0, 0, 1, 1, 2], [0], [0]>} : vector<16x16x16xf32>, vector<16x16x16xf32>, vector<16x16x16xf32> -> vector<16x16x16xf32>
      %77 = arith.mulf %72, %76 : vector<16x16x16xf32>
      %cst_20 = arith.constant dense<0.000000e+00> : vector<16x16xf32>
      %78 = vector.multi_reduction <add>, %77, %cst_20 [2] : vector<16x16x16xf32> to vector<16x16xf32>
      %79 = arith.addf %arg4, %78 : vector<16x16xf32>
      %80 = vector.shape_cast %arg5 : vector<16x16xf32> to vector<1x16x16xf32>
      %81 = vector.shape_cast %80 : vector<1x16x16xf32> to vector<1x16x16xf32>
      %82 = vector.broadcast %81 : vector<1x16x16xf32> to vector<16x16x16xf32>
      %cst_21 = arith.constant dense<0.000000e+00> : vector<16x16x16xf32>
      %83 = tpu.matmul %53, %82, %cst_21 {dimension_numbers = #tpu.dot_dimension_numbers<[2], [1], [1], [2], [0, 0, 0, 1, 1, 2], [0], [0]>} : vector<16x16x16xf32>, vector<16x16x16xf32>, vector<16x16x16xf32> -> vector<16x16x16xf32>
      %84 = arith.mulf %72, %83 : vector<16x16x16xf32>
      %cst_22 = arith.constant dense<0.000000e+00> : vector<16x16xf32>
      %85 = vector.multi_reduction <add>, %84, %cst_22 [2] : vector<16x16x16xf32> to vector<16x16xf32>
      %86 = arith.addf %arg5, %85 : vector<16x16xf32>
      scf.yield %79, %86 : vector<16x16xf32>, vector<16x16xf32>
    }
    %c0_4 = arith.constant 0 : index
    %c0_5 = arith.constant 0 : index
    %c0_6 = arith.constant 0 : index
    %c0_7 = arith.constant 0 : index
    %17 = vector.load %arg2[%c0_4, %c0_5, %c0_6, %c0_7] : memref<1x2x16x16xf32, #tpu.memory_space<vmem>>, vector<1x1x16x16xf32>
    %18 = vector.shape_cast %17 : vector<1x1x16x16xf32> to vector<16x16xf32>
    %19 = vector.shape_cast %16#0 : vector<16x16xf32> to vector<1x1x16x16xf32>
    tpu.vector_store %arg2[%c0_4, %c0_5, %c0_6, %c0_7], %19 {strides = array<i32>} : memref<1x2x16x16xf32, #tpu.memory_space<vmem>>, vector<1x1x16x16xf32>,
    %c0_8 = arith.constant 0 : index
    %c1 = arith.constant 1 : index
    %c0_9 = arith.constant 0 : index
    %c0_10 = arith.constant 0 : index
    %20 = vector.load %arg2[%c0_8, %c1, %c0_9, %c0_10] : memref<1x2x16x16xf32, #tpu.memory_space<vmem>>, vector<1x1x16x16xf32>
    %21 = vector.shape_cast %20 : vector<1x1x16x16xf32> to vector<16x16xf32>
    %22 = vector.shape_cast %16#1 : vector<16x16xf32> to vector<1x1x16x16xf32>
    tpu.vector_store %arg2[%c0_8, %c1, %c0_9, %c0_10], %22 {strides = array<i32>} : memref<1x2x16x16xf32, #tpu.memory_space<vmem>>, vector<1x1x16x16xf32>,
    return
  }
  func.func @transform_0(%arg0: i32) -> (i32, i32, i32, i32) {
    %c0_i32 = arith.constant 0 : i32
    %c0_i32_0 = arith.constant 0 : i32
    %c0_i32_1 = arith.constant 0 : i32
    %c0_i32_2 = arith.constant 0 : i32
    return %arg0, %c0_i32, %c0_i32_0, %c0_i32_1 : i32, i32, i32, i32
  }
  func.func @transform_1(%arg0: i32) -> (i32, i32, i32, i32) {
    %c0_i32 = arith.constant 0 : i32
    %c0_i32_0 = arith.constant 0 : i32
    %c0_i32_1 = arith.constant 0 : i32
    %c0_i32_2 = arith.constant 0 : i32
    return %arg0, %c0_i32, %c0_i32_0, %c0_i32_1 : i32, i32, i32, i32
  }
}

</mosaic_0001>

<llo_original>
// kernel: _lambda_.1
$region0: #{_lambda_.1}
  #allocation0 [shape = 'u32[]', space=smem, size = 0x4, offset = 0x4, fixed_abs, tag = 'smem constant byte address 0x4 - core index']
  #allocation1 [shape = 'u32[144,128]{1,0:T(1,128)}', space=vmem, size = 0x12000, scoped, tag = 'internal scratch']
  %s0 = inlined_call_operand.hbm [shape: f32[2,2,16,16], index: 0, kind: input, shape index: {}]
  %s1 = inlined_call_operand.hbm [shape: f32[2,2,16,16], index: 1, kind: output, shape index: {}]
  %s2 = sld [smem:[#allocation0]]
  $region48: #{_lambda_.1} parent=0
    _
  %s4 = ssub.s32 1, %s2
  %s5 = scalar_select 0, %s4, %s2
  $region1: #{_lambda_.1} parent=0
    #allocation2 [shape = 'u8[32768]{0}', space=vmem, size = 0x8000, scoped, tag = 'input window, operand 0']
    #allocation3 [shape = 's32[2]{0}', space=sflag, size = 0x8, scoped, tag = 'scoped memory for _lambda_.1']
    #allocation4 [shape = 's32[2]{0}', space=sflag, size = 0x8, scoped, tag = 'scoped memory for _lambda_.1']
    #allocation5 [shape = 'u8[32768]{0}', space=vmem, size = 0x8000, scoped, tag = 'output window, operand 0']
    %6 = vsyncpa [#allocation3], 0
    %s7 = scalar_lea.sflag [#allocation3], 1
    %8 = vsyncpa %s7, 0
    %9 = vsyncpa [#allocation4], 0
    %s10 = scalar_lea.sflag [#allocation4], 1
    %11 = vsyncpa %s10, 0
    loop: start=0, step=1, limit=4
    $region2: #{_lambda_.1} parent=1 // loop_pre_header
      _
    $region3: #{_lambda_.1} parent=1 // loop_header
      %s13 = sphi 0, %s17
      %p14 = scmp.ge.s32.totalorder %s13, 4
      %s23 = sphi 0, %s25
      %s26 = sphi 0, %s23
      %s27 = sphi 0, %s26
      %s43 = sphi 0, %s27
      %s49 = sphi 0, %s51
      %s52 = sphi 0, %s49
      %s53 = sphi 0, %s52
      %s69 = sphi 0, %s53
    $region4: #{_lambda_.1} parent=1 // loop_header_branch
      %16 = sbr.rel (%p14) target = $region8
    $region5: #{_lambda_.1} parent=1 // loop_body
      %s18 = ssub.s32 %s13, 1
      %s19 = ssub.s32 %s13, 2
      %s20 = sadd.s32 %s13, 1
      %s21 = ssub.s32 %s13, %s20
      %p22 = scmp.eq.s32.totalorder %s21, 0
      %s24 = sadd.s32 %s23, 1
      %s25 = scalar_select %p22, %s23, %s24
      %p28 = pneg %p22
      %p29 = scmp.eq.s32.totalorder %s13, 1
      %p30 = por %p28, %p29
      %p31 = scmp.ne.s32.totalorder %s23, %s26
      %p32 = scmp.eq.s32.totalorder %s13, 0
      %p33 = por %p31, %p32
      %p34 = scmp.ne.s32.totalorder %s23, %s26
      %p35 = scmp.eq.s32.totalorder %s18, 1
      %p36 = por %p34, %p35
      %p37 = scmp.ne.s32.totalorder %s26, %s27
      %p38 = scmp.eq.s32.totalorder %s18, 0
      %p39 = por %p37, %p38
      %p40 = scmp.ne.s32.totalorder %s26, %s27
      %p41 = scmp.eq.s32.totalorder %s19, 1
      %p42 = por %p40, %p41
      %p44 = scmp.ne.s32.totalorder %s27, %s43
      %p45 = scmp.eq.s32.totalorder %s19, 0
      %p46 = por %p44, %p45
      %s47 = ssub.s32 %s13, %s20
      %p48 = scmp.eq.s32.totalorder %s47, 0
      %s50 = sadd.s32 %s49, 1
      %s51 = scalar_select %p48, %s49, %s50
      %p54 = pneg %p48
      %p55 = scmp.eq.s32.totalorder %s13, 1
      %p56 = por %p54, %p55
      %p57 = scmp.ne.s32.totalorder %s49, %s52
      %p58 = scmp.eq.s32.totalorder %s13, 0
      %p59 = por %p57, %p58
      %p60 = scmp.ne.s32.totalorder %s49, %s52
      %p61 = scmp.eq.s32.totalorder %s18, 1
      %p62 = por %p60, %p61
      %p63 = scmp.ne.s32.totalorder %s52, %s53
      %p64 = scmp.eq.s32.totalorder %s18, 0
      %p65 = por %p63, %p64
      %p66 = scmp.ne.s32.totalorder %s52, %s53
      %p67 = scmp.eq.s32.totalorder %s19, 1
      %p68 = por %p66, %p67
      %p70 = scmp.ne.s32.totalorder %s53, %s69
      %p71 = scmp.eq.s32.totalorder %s19, 0
      %p72 = por %p70, %p71
      %p73 = scmp.le.s32.totalorder 1, %s13
      %p74 = scmp.lt.s32.totalorder %s13, 3
      %p75 = pnand %p73, %p74
      %p76 = pneg %p75
      // Predicated region
      $region9: #{_lambda_.1} parent=5 // pred_check
        _
      $region10: #{_lambda_.1} parent=5 // pred_check_branch
        %78 = sbr.rel (%p75) target = $region12
      $region11: #{_lambda_.1} parent=5 // pred_region
        %s79 = ssub.s32 %s13, 1
      $region12: #{_lambda_.1} parent=5 // pred_fallthru
        _
      %p80 = scmp.lt.s32.totalorder %s13, 2
      // Predicated region
      $region13: #{_lambda_.1} parent=5 // pred_check
        %p81 = pneg %p80
      $region14: #{_lambda_.1} parent=5 // pred_check_branch
        %83 = sbr.rel (%p81) target = $region16
      $region15: #{_lambda_.1} parent=5 // pred_region
        // Predicated region
        $region17: #{_lambda_.1} parent=15 // pred_check
          %p84 = pneg %p33
        $region18: #{_lambda_.1} parent=15 // pred_check_branch
          %86 = sbr.rel (%p84) target = $region20
        $region19: #{_lambda_.1} parent=15 // pred_region
          %s87 = sand.u32 %s23, 1
          %s88 = scalar_lea.sflag [#allocation3], %s87
          %s89 = sand.u32 %s23, 1
          %s90 = smul.addr %s89, 32
          %s91 = scalar_lea.vmem [#allocation2], %s90
          %s93 = ssub.s32 512, 512
          %94 = vsyncadd %s88, %s93
          %s95 = smul.addr %s13, 4
          %s96 = smul.addr %s95, 128
          %s97 = scalar_lea.hbm %s0, %s96
          %s98 = sshll.u32 %s91, 4
          %s99 = int_to_ptr.vmem [resolvable:$true] %s98
          %104 = dma.hbm_to_vmem [thread:$0]  %s97, 512, %s99, %s88, 128, 128, 8
        $region20: #{_lambda_.1} parent=15 // pred_fallthru
          _
      $region16: #{_lambda_.1} parent=5 // pred_fallthru
        _
      %p105 = scmp.le.s32.totalorder 1, %s13
      %p106 = scmp.lt.s32.totalorder %s13, 3
      %p107 = pnand %p105, %p106
      %p108 = pneg %p107
      // Predicated region
      $region21: #{_lambda_.1} parent=5 // pred_check
        _
      $region22: #{_lambda_.1} parent=5 // pred_check_branch
        %110 = sbr.rel (%p107) target = $region24
      $region23: #{_lambda_.1} parent=5 // pred_region
        %s111 = ssub.s32 %s13, 1
        %s112 = sand.u32 %s26, 1
        %s113 = scalar_lea.sflag [#allocation3], %s112
        %s114 = sand.u32 %s26, 1
        %s115 = smul.addr %s114, 32
        %s116 = scalar_lea.vmem [#allocation2], %s115
        // Predicated region
        $region25: #{_lambda_.1} parent=23 // pred_check
          %p117 = pneg %p39
        $region26: #{_lambda_.1} parent=23 // pred_check_branch
          %119 = sbr.rel (%p117) target = $region28
        $region27: #{_lambda_.1} parent=23 // pred_region
          %120 = dma.done %s113, 512
        $region28: #{_lambda_.1} parent=23 // pred_fallthru
          _
        %s121 = sand.u32 %s26, 1
        %s122 = scalar_lea.sflag [#allocation3], %s121
        %s123 = sand.u32 %s26, 1
        %s124 = smul.addr %s123, 32
        %s125 = scalar_lea.vmem [#allocation2], %s124
        %p126 = pneg %p39
        %p127 = pneg %p36
        %p128 = pneg %p65
        %p129 = pneg %p62
        %s130 = sand.u32 %s52, 1
        %s131 = scalar_lea.sflag [#allocation4], %s130
        %s132 = sand.u32 %s52, 1
        %s133 = smul.addr %s132, 32
        %s134 = scalar_lea.vmem [#allocation5], %s133
        %v135 = vld [vmem:[%s116] sm:$0xff]
        %v136 = vld [vmem:[%s116 + $0x8] sm:$0xff]
        %v137 = vld [vmem:[%s116 + $0x10] sm:$0xff]
        %v138 = vld [vmem:[%s116 + $0x18] sm:$0xff]
        %v139 = vmul.f32 %v135, 0.03125
        %v140 = vmul.f32 %v136, 0.03125
        %v141 = vmul.f32 %v137, 0.03125
        %v142 = vmul.f32 %v138, 0.03125
        %v143 = vlaneseq
        %v144 = vshrl.u32 %v143, 7
        %v145 = vadd.s32 %v144, 8
        %v146 = vcvt.s32.f32 %v144
        %v147 = vcvt.s32.f32 %v145
        %v148 = vlaneseq
        %v149 = vand.u32 %v148, 127
        %v150 = vcvt.s32.f32 %v149
        loop: start=0, step=1, limit=5
        $region29: #{_lambda_.1} parent=23 // loop_pre_header
          _
        $region30: #{_lambda_.1} parent=23 // loop_header
          %s152 = sphi 0, %s156
          %p153 = scmp.ge.s32.totalorder %s152, 5
          %v157 = vphi %v139, %v3539
          %v158 = vphi %v140, %v3540
          %v159 = vphi %v141, %v5061
          %v160 = vphi %v142, %v5062
        $region31: #{_lambda_.1} parent=23 // loop_header_branch
          %155 = sbr.rel (%p153) target = $region35
        $region32: #{_lambda_.1} parent=23 // loop_body
          %v161 = vadd.f32 %v146, %v157
          %v162 = vadd.f32 %v147, %v158
          %v163 = vadd.f32 %v150, %v159
          %v164 = vadd.f32 %v150, %v160
          %v165 = vfloor.f32 %v161
          %v166 = vfloor.f32 %v162
          %v167 = vfloor.f32 %v163
          %v168 = vfloor.f32 %v164
          %v169 = vsub.f32 %v161, %v165
          %v170 = vsub.f32 %v162, %v166
          %v171 = vsub.f32 %v163, %v167
          %v172 = vsub.f32 %v164, %v168
          %v173 = vsub.f32 1.0, %v169
          %v174 = vsub.f32 1.0, %v170
          %v175 = vsub.f32 1.0, %v171
          %v176 = vsub.f32 1.0, %v172
          %v177 = vcvt.f32.s32.to.zero.pseudo %v165
          %v178 = vcvt.f32.s32.to.zero.pseudo %v166
          %v179 = vcvt.f32.s32.to.zero.pseudo %v167
          %v180 = vcvt.f32.s32.to.zero.pseudo %v168
          %v181 = vlaneseq
          %v182 = vshrl.u32 %v181, 7
          %v183 = vsub.s32 0, %v182
          %v184 = vrot.slane %v177, %v183
          %186 = vbcast.lane.b32.xlu0 %v184, 256
          %v187 = vpop.permute.xlu0 %186
          %s189 = sor.u32 256, 8
          %190 = vbcast.lane.b32.xlu0 %v184, %s189
          %v191 = vpop.permute.xlu0 %190
          %v192 = vlaneseq
          %v193 = vshrl.u32 %v192, 7
          %v194 = vsub.s32 1, %v193
          %v195 = vrot.slane %v177, %v194
          %197 = vbcast.lane.b32.xlu0 %v195, 256
          %v198 = vpop.permute.xlu0 %197
          %s200 = sor.u32 256, 8
          %201 = vbcast.lane.b32.xlu0 %v195, %s200
          %v202 = vpop.permute.xlu0 %201
          %v203 = vlaneseq
          %v204 = vshrl.u32 %v203, 7
          %v205 = vsub.s32 2, %v204
          %v206 = vrot.slane %v177, %v205
          %208 = vbcast.lane.b32.xlu0 %v206, 256
          %v209 = vpop.permute.xlu0 %208
          %s211 = sor.u32 256, 8
          %212 = vbcast.lane.b32.xlu0 %v206, %s211
          %v213 = vpop.permute.xlu0 %212
          %v214 = vlaneseq
          %v215 = vshrl.u32 %v214, 7
          %v216 = vsub.s32 3, %v215
          %v217 = vrot.slane %v177, %v216
          %219 = vbcast.lane.b32.xlu0 %v217, 256
          %v220 = vpop.permute.xlu0 %219
          %s222 = sor.u32 256, 8
          %223 = vbcast.lane.b32.xlu0 %v217, %s222
          %v224 = vpop.permute.xlu0 %223
          %v225 = vlaneseq
          %v226 = vshrl.u32 %v225, 7
          %v227 = vsub.s32 4, %v226
          %v228 = vrot.slane %v177, %v227
          %230 = vbcast.lane.b32.xlu0 %v228, 256
          %v231 = vpop.permute.xlu0 %230
          %s233 = sor.u32 256, 8
          %234 = vbcast.lane.b32.xlu0 %v228, %s233
          %v235 = vpop.permute.xlu0 %234
          %v236 = vlaneseq
          %v237 = vshrl.u32 %v236, 7
          %v238 = vsub.s32 5, %v237
          %v239 = vrot.slane %v177, %v238
          %241 = vbcast.lane.b32.xlu0 %v239, 256
          %v242 = vpop.permute.xlu0 %241
          %s244 = sor.u32 256, 8
          %245 = vbcast.lane.b32.xlu0 %v239, %s244
          %v246 = vpop.permute.xlu0 %245
          %v247 = vlaneseq
          %v248 = vshrl.u32 %v247, 7
          %v249 = vsub.s32 6, %v248
          %v250 = vrot.slane %v177, %v249
          %252 = vbcast.lane.b32.xlu0 %v250, 256
          %v253 = vpop.permute.xlu0 %252
          %s255 = sor.u32 256, 8
          %256 = vbcast.lane.b32.xlu0 %v250, %s255
          %v257 = vpop.permute.xlu0 %256
          %v258 = vlaneseq
          %v259 = vshrl.u32 %v258, 7
          %v260 = vsub.s32 7, %v259
          %v261 = vrot.slane %v177, %v260
          %263 = vbcast.lane.b32.xlu0 %v261, 256
          %v264 = vpop.permute.xlu0 %263
          %s266 = sor.u32 256, 8
          %267 = vbcast.lane.b32.xlu0 %v261, %s266
          %v268 = vpop.permute.xlu0 %267
          %v269 = vlaneseq
          %v270 = vshrl.u32 %v269, 7
          %v271 = vsub.s32 0, %v270
          %v272 = vrot.slane %v178, %v271
          %274 = vbcast.lane.b32.xlu0 %v272, 256
          %v275 = vpop.permute.xlu0 %274
          %s277 = sor.u32 256, 8
          %278 = vbcast.lane.b32.xlu0 %v272, %s277
          %v279 = vpop.permute.xlu0 %278
          %v280 = vlaneseq
          %v281 = vshrl.u32 %v280, 7
          %v282 = vsub.s32 1, %v281
          %v283 = vrot.slane %v178, %v282
          %285 = vbcast.lane.b32.xlu0 %v283, 256
          %v286 = vpop.permute.xlu0 %285
          %s288 = sor.u32 256, 8
          %289 = vbcast.lane.b32.xlu0 %v283, %s288
          %v290 = vpop.permute.xlu0 %289
          %v291 = vlaneseq
          %v292 = vshrl.u32 %v291, 7
          %v293 = vsub.s32 2, %v292
          %v294 = vrot.slane %v178, %v293
          %296 = vbcast.lane.b32.xlu0 %v294, 256
          %v297 = vpop.permute.xlu0 %296
          %s299 = sor.u32 256, 8
          %300 = vbcast.lane.b32.xlu0 %v294, %s299
          %v301 = vpop.permute.xlu0 %300
          %v302 = vlaneseq
          %v303 = vshrl.u32 %v302, 7
          %v304 = vsub.s32 3, %v303
          %v305 = vrot.slane %v178, %v304
          %307 = vbcast.lane.b32.xlu0 %v305, 256
          %v308 = vpop.permute.xlu0 %307
          %s310 = sor.u32 256, 8
          %311 = vbcast.lane.b32.xlu0 %v305, %s310
          %v312 = vpop.permute.xlu0 %311
          %v313 = vlaneseq
          %v314 = vshrl.u32 %v313, 7
          %v315 = vsub.s32 4, %v314
          %v316 = vrot.slane %v178, %v315
          %318 = vbcast.lane.b32.xlu0 %v316, 256
          %v319 = vpop.permute.xlu0 %318
          %s321 = sor.u32 256, 8
          %322 = vbcast.lane.b32.xlu0 %v316, %s321
          %v323 = vpop.permute.xlu0 %322
          %v324 = vlaneseq
          %v325 = vshrl.u32 %v324, 7
          %v326 = vsub.s32 5, %v325
          %v327 = vrot.slane %v178, %v326
          %329 = vbcast.lane.b32.xlu0 %v327, 256
          %v330 = vpop.permute.xlu0 %329
          %s332 = sor.u32 256, 8
          %333 = vbcast.lane.b32.xlu0 %v327, %s332
          %v334 = vpop.permute.xlu0 %333
          %v335 = vlaneseq
          %v336 = vshrl.u32 %v335, 7
          %v337 = vsub.s32 6, %v336
          %v338 = vrot.slane %v178, %v337
          %340 = vbcast.lane.b32.xlu0 %v338, 256
          %v341 = vpop.permute.xlu0 %340
          %s343 = sor.u32 256, 8
          %344 = vbcast.lane.b32.xlu0 %v338, %s343
          %v345 = vpop.permute.xlu0 %344
          %v346 = vlaneseq
          %v347 = vshrl.u32 %v346, 7
          %v348 = vsub.s32 7, %v347
          %v349 = vrot.slane %v178, %v348
          %351 = vbcast.lane.b32.xlu0 %v349, 256
          %v352 = vpop.permute.xlu0 %351
          %s354 = sor.u32 256, 8
          %355 = vbcast.lane.b32.xlu0 %v349, %s354
          %v356 = vpop.permute.xlu0 %355
          %vm357 = vcmp.eq.s32.totalorder %v149, %v187
          %vm358 = vcmp.eq.s32.totalorder %v149, %v191
          %vm359 = vcmp.eq.s32.totalorder %v149, %v198
          %vm360 = vcmp.eq.s32.totalorder %v149, %v202
          %vm361 = vcmp.eq.s32.totalorder %v149, %v209
          %vm362 = vcmp.eq.s32.totalorder %v149, %v213
          %vm363 = vcmp.eq.s32.totalorder %v149, %v220
          %vm364 = vcmp.eq.s32.totalorder %v149, %v224
          %vm365 = vcmp.eq.s32.totalorder %v149, %v231
          %vm366 = vcmp.eq.s32.totalorder %v149, %v235
          %vm367 = vcmp.eq.s32.totalorder %v149, %v242
          %vm368 = vcmp.eq.s32.totalorder %v149, %v246
          %vm369 = vcmp.eq.s32.totalorder %v149, %v253
          %vm370 = vcmp.eq.s32.totalorder %v149, %v257
          %vm371 = vcmp.eq.s32.totalorder %v149, %v264
          %vm372 = vcmp.eq.s32.totalorder %v149, %v268
          %vm373 = vcmp.eq.s32.totalorder %v149, %v275
          %vm374 = vcmp.eq.s32.totalorder %v149, %v279
          %vm375 = vcmp.eq.s32.totalorder %v149, %v286
          %vm376 = vcmp.eq.s32.totalorder %v149, %v290
          %vm377 = vcmp.eq.s32.totalorder %v149, %v297
          %vm378 = vcmp.eq.s32.totalorder %v149, %v301
          %vm379 = vcmp.eq.s32.totalorder %v149, %v308
          %vm380 = vcmp.eq.s32.totalorder %v149, %v312
          %vm381 = vcmp.eq.s32.totalorder %v149, %v319
          %vm382 = vcmp.eq.s32.totalorder %v149, %v323
          %vm383 = vcmp.eq.s32.totalorder %v149, %v330
          %vm384 = vcmp.eq.s32.totalorder %v149, %v334
          %vm385 = vcmp.eq.s32.totalorder %v149, %v341
          %vm386 = vcmp.eq.s32.totalorder %v149, %v345
          %vm387 = vcmp.eq.s32.totalorder %v149, %v352
          %vm388 = vcmp.eq.s32.totalorder %v149, %v356
          %v389 = vlaneseq
          %v390 = vshrl.u32 %v389, 7
          %v391 = vsub.s32 0, %v390
          %v392 = vrot.slane %v173, %v391
          %394 = vbcast.lane.b32.xlu0 %v392, 256
          %v395 = vpop.permute.xlu0 %394
          %s397 = sor.u32 256, 8
          %398 = vbcast.lane.b32.xlu0 %v392, %s397
          %v399 = vpop.permute.xlu0 %398
          %v400 = vlaneseq
          %v401 = vshrl.u32 %v400, 7
          %v402 = vsub.s32 1, %v401
          %v403 = vrot.slane %v173, %v402
          %405 = vbcast.lane.b32.xlu0 %v403, 256
          %v406 = vpop.permute.xlu0 %405
          %s408 = sor.u32 256, 8
          %409 = vbcast.lane.b32.xlu0 %v403, %s408
          %v410 = vpop.permute.xlu0 %409
          %v411 = vlaneseq
          %v412 = vshrl.u32 %v411, 7
          %v413 = vsub.s32 2, %v412
          %v414 = vrot.slane %v173, %v413
          %416 = vbcast.lane.b32.xlu0 %v414, 256
          %v417 = vpop.permute.xlu0 %416
          %s419 = sor.u32 256, 8
          %420 = vbcast.lane.b32.xlu0 %v414, %s419
          %v421 = vpop.permute.xlu0 %420
          %v422 = vlaneseq
          %v423 = vshrl.u32 %v422, 7
          %v424 = vsub.s32 3, %v423
          %v425 = vrot.slane %v173, %v424
          %427 = vbcast.lane.b32.xlu0 %v425, 256
          %v428 = vpop.permute.xlu0 %427
          %s430 = sor.u32 256, 8
          %431 = vbcast.lane.b32.xlu0 %v425, %s430
          %v432 = vpop.permute.xlu0 %431
          %v433 = vlaneseq
          %v434 = vshrl.u32 %v433, 7
          %v435 = vsub.s32 4, %v434
          %v436 = vrot.slane %v173, %v435
          %438 = vbcast.lane.b32.xlu0 %v436, 256
          %v439 = vpop.permute.xlu0 %438
          %s441 = sor.u32 256, 8
          %442 = vbcast.lane.b32.xlu0 %v436, %s441
          %v443 = vpop.permute.xlu0 %442
          %v444 = vlaneseq
          %v445 = vshrl.u32 %v444, 7
          %v446 = vsub.s32 5, %v445
          %v447 = vrot.slane %v173, %v446
          %449 = vbcast.lane.b32.xlu0 %v447, 256
          %v450 = vpop.permute.xlu0 %449
          %s452 = sor.u32 256, 8
          %453 = vbcast.lane.b32.xlu0 %v447, %s452
          %v454 = vpop.permute.xlu0 %453
          %v455 = vlaneseq
          %v456 = vshrl.u32 %v455, 7
          %v457 = vsub.s32 6, %v456
          %v458 = vrot.slane %v173, %v457
          %460 = vbcast.lane.b32.xlu0 %v458, 256
          %v461 = vpop.permute.xlu0 %460
          %s463 = sor.u32 256, 8
          %464 = vbcast.lane.b32.xlu0 %v458, %s463
          %v465 = vpop.permute.xlu0 %464
          %v466 = vlaneseq
          %v467 = vshrl.u32 %v466, 7
          %v468 = vsub.s32 7, %v467
          %v469 = vrot.slane %v173, %v468
          %471 = vbcast.lane.b32.xlu0 %v469, 256
          %v472 = vpop.permute.xlu0 %471
          %s474 = sor.u32 256, 8
          %475 = vbcast.lane.b32.xlu0 %v469, %s474
          %v476 = vpop.permute.xlu0 %475
          %v477 = vlaneseq
          %v478 = vshrl.u32 %v477, 7
          %v479 = vsub.s32 0, %v478
          %v480 = vrot.slane %v174, %v479
          %482 = vbcast.lane.b32.xlu0 %v480, 256
          %v483 = vpop.permute.xlu0 %482
          %s485 = sor.u32 256, 8
          %486 = vbcast.lane.b32.xlu0 %v480, %s485
          %v487 = vpop.permute.xlu0 %486
          %v488 = vlaneseq
          %v489 = vshrl.u32 %v488, 7
          %v490 = vsub.s32 1, %v489
          %v491 = vrot.slane %v174, %v490
          %493 = vbcast.lane.b32.xlu0 %v491, 256
          %v494 = vpop.permute.xlu0 %493
          %s496 = sor.u32 256, 8
          %497 = vbcast.lane.b32.xlu0 %v491, %s496
          %v498 = vpop.permute.xlu0 %497
          %v499 = vlaneseq
          %v500 = vshrl.u32 %v499, 7
          %v501 = vsub.s32 2, %v500
          %v502 = vrot.slane %v174, %v501
          %504 = vbcast.lane.b32.xlu0 %v502, 256
          %v505 = vpop.permute.xlu0 %504
          %s507 = sor.u32 256, 8
          %508 = vbcast.lane.b32.xlu0 %v502, %s507
          %v509 = vpop.permute.xlu0 %508
          %v510 = vlaneseq
          %v511 = vshrl.u32 %v510, 7
          %v512 = vsub.s32 3, %v511
          %v513 = vrot.slane %v174, %v512
          %515 = vbcast.lane.b32.xlu0 %v513, 256
          %v516 = vpop.permute.xlu0 %515
          %s518 = sor.u32 256, 8
          %519 = vbcast.lane.b32.xlu0 %v513, %s518
          %v520 = vpop.permute.xlu0 %519
          %v521 = vlaneseq
          %v522 = vshrl.u32 %v521, 7
          %v523 = vsub.s32 4, %v522
          %v524 = vrot.slane %v174, %v523
          %526 = vbcast.lane.b32.xlu0 %v524, 256
          %v527 = vpop.permute.xlu0 %526
          %s529 = sor.u32 256, 8
          %530 = vbcast.lane.b32.xlu0 %v524, %s529
          %v531 = vpop.permute.xlu0 %530
          %v532 = vlaneseq
          %v533 = vshrl.u32 %v532, 7
          %v534 = vsub.s32 5, %v533
          %v535 = vrot.slane %v174, %v534
          %537 = vbcast.lane.b32.xlu0 %v535, 256
          %v538 = vpop.permute.xlu0 %537
          %s540 = sor.u32 256, 8
          %541 = vbcast.lane.b32.xlu0 %v535, %s540
          %v542 = vpop.permute.xlu0 %541
          %v543 = vlaneseq
          %v544 = vshrl.u32 %v543, 7
          %v545 = vsub.s32 6, %v544
          %v546 = vrot.slane %v174, %v545
          %548 = vbcast.lane.b32.xlu0 %v546, 256
          %v549 = vpop.permute.xlu0 %548
          %s551 = sor.u32 256, 8
          %552 = vbcast.lane.b32.xlu0 %v546, %s551
          %v553 = vpop.permute.xlu0 %552
          %v554 = vlaneseq
          %v555 = vshrl.u32 %v554, 7
          %v556 = vsub.s32 7, %v555
          %v557 = vrot.slane %v174, %v556
          %559 = vbcast.lane.b32.xlu0 %v557, 256
          %v560 = vpop.permute.xlu0 %559
          %s562 = sor.u32 256, 8
          %563 = vbcast.lane.b32.xlu0 %v557, %s562
          %v564 = vpop.permute.xlu0 %563
          %v565 = vsel %vm357, %v395, 0.0
          %v566 = vsel %vm358, %v399, 0.0
          %v567 = vsel %vm359, %v406, 0.0
          %v568 = vsel %vm360, %v410, 0.0
          %v569 = vsel %vm361, %v417, 0.0
          %v570 = vsel %vm362, %v421, 0.0
          %v571 = vsel %vm363, %v428, 0.0
          %v572 = vsel %vm364, %v432, 0.0
          %v573 = vsel %vm365, %v439, 0.0
          %v574 = vsel %vm366, %v443, 0.0
          %v575 = vsel %vm367, %v450, 0.0
          %v576 = vsel %vm368, %v454, 0.0
          %v577 = vsel %vm369, %v461, 0.0
          %v578 = vsel %vm370, %v465, 0.0
          %v579 = vsel %vm371, %v472, 0.0
          %v580 = vsel %vm372, %v476, 0.0
          %v581 = vsel %vm373, %v483, 0.0
          %v582 = vsel %vm374, %v487, 0.0
          %v583 = vsel %vm375, %v494, 0.0
          %v584 = vsel %vm376, %v498, 0.0
          %v585 = vsel %vm377, %v505, 0.0
          %v586 = vsel %vm378, %v509, 0.0
          %v587 = vsel %vm379, %v516, 0.0
          %v588 = vsel %vm380, %v520, 0.0
          %v589 = vsel %vm381, %v527, 0.0
          %v590 = vsel %vm382, %v531, 0.0
          %v591 = vsel %vm383, %v538, 0.0
          %v592 = vsel %vm384, %v542, 0.0
          %v593 = vsel %vm385, %v549, 0.0
          %v594 = vsel %vm386, %v553, 0.0
          %v595 = vsel %vm387, %v560, 0.0
          %v596 = vsel %vm388, %v564, 0.0
          %v597 = vadd.s32 %v177, 1
          %v598 = vadd.s32 %v178, 1
          %v599 = vlaneseq
          %v600 = vshrl.u32 %v599, 7
          %v601 = vsub.s32 0, %v600
          %v602 = vrot.slane %v597, %v601
          %604 = vbcast.lane.b32.xlu0 %v602, 256
          %v605 = vpop.permute.xlu0 %604
          %s607 = sor.u32 256, 8
          %608 = vbcast.lane.b32.xlu0 %v602, %s607
          %v609 = vpop.permute.xlu0 %608
          %v610 = vlaneseq
          %v611 = vshrl.u32 %v610, 7
          %v612 = vsub.s32 1, %v611
          %v613 = vrot.slane %v597, %v612
          %615 = vbcast.lane.b32.xlu0 %v613, 256
          %v616 = vpop.permute.xlu0 %615
          %s618 = sor.u32 256, 8
          %619 = vbcast.lane.b32.xlu0 %v613, %s618
          %v620 = vpop.permute.xlu0 %619
          %v621 = vlaneseq
          %v622 = vshrl.u32 %v621, 7
          %v623 = vsub.s32 2, %v622
          %v624 = vrot.slane %v597, %v623
          %626 = vbcast.lane.b32.xlu0 %v624, 256
          %v627 = vpop.permute.xlu0 %626
          %s629 = sor.u32 256, 8
          %630 = vbcast.lane.b32.xlu0 %v624, %s629
          %v631 = vpop.permute.xlu0 %630
          %v632 = vlaneseq
          %v633 = vshrl.u32 %v632, 7
          %v634 = vsub.s32 3, %v633
          %v635 = vrot.slane %v597, %v634
          %637 = vbcast.lane.b32.xlu0 %v635, 256
          %v638 = vpop.permute.xlu0 %637
          %s640 = sor.u32 256, 8
          %641 = vbcast.lane.b32.xlu0 %v635, %s640
          %v642 = vpop.permute.xlu0 %641
          %v643 = vlaneseq
          %v644 = vshrl.u32 %v643, 7
          %v645 = vsub.s32 4, %v644
          %v646 = vrot.slane %v597, %v645
          %648 = vbcast.lane.b32.xlu0 %v646, 256
          %v649 = vpop.permute.xlu0 %648
          %s651 = sor.u32 256, 8
          %652 = vbcast.lane.b32.xlu0 %v646, %s651
          %v653 = vpop.permute.xlu0 %652
          %v654 = vlaneseq
          %v655 = vshrl.u32 %v654, 7
          %v656 = vsub.s32 5, %v655
          %v657 = vrot.slane %v597, %v656
          %659 = vbcast.lane.b32.xlu0 %v657, 256
          %v660 = vpop.permute.xlu0 %659
          %s662 = sor.u32 256, 8
          %663 = vbcast.lane.b32.xlu0 %v657, %s662
          %v664 = vpop.permute.xlu0 %663
          %v665 = vlaneseq
          %v666 = vshrl.u32 %v665, 7
          %v667 = vsub.s32 6, %v666
          %v668 = vrot.slane %v597, %v667
          %670 = vbcast.lane.b32.xlu0 %v668, 256
          %v671 = vpop.permute.xlu0 %670
          %s673 = sor.u32 256, 8
          %674 = vbcast.lane.b32.xlu0 %v668, %s673
          %v675 = vpop.permute.xlu0 %674
          %v676 = vlaneseq
          %v677 = vshrl.u32 %v676, 7
          %v678 = vsub.s32 7, %v677
          %v679 = vrot.slane %v597, %v678
          %681 = vbcast.lane.b32.xlu0 %v679, 256
          %v682 = vpop.permute.xlu0 %681
          %s684 = sor.u32 256, 8
          %685 = vbcast.lane.b32.xlu0 %v679, %s684
          %v686 = vpop.permute.xlu0 %685
          %v687 = vlaneseq
          %v688 = vshrl.u32 %v687, 7
          %v689 = vsub.s32 0, %v688
          %v690 = vrot.slane %v598, %v689
          %692 = vbcast.lane.b32.xlu0 %v690, 256
          %v693 = vpop.permute.xlu0 %692
          %s695 = sor.u32 256, 8
          %696 = vbcast.lane.b32.xlu0 %v690, %s695
          %v697 = vpop.permute.xlu0 %696
          %v698 = vlaneseq
          %v699 = vshrl.u32 %v698, 7
          %v700 = vsub.s32 1, %v699
          %v701 = vrot.slane %v598, %v700
          %703 = vbcast.lane.b32.xlu0 %v701, 256
          %v704 = vpop.permute.xlu0 %703
          %s706 = sor.u32 256, 8
          %707 = vbcast.lane.b32.xlu0 %v701, %s706
          %v708 = vpop.permute.xlu0 %707
          %v709 = vlaneseq
          %v710 = vshrl.u32 %v709, 7
          %v711 = vsub.s32 2, %v710
          %v712 = vrot.slane %v598, %v711
          %714 = vbcast.lane.b32.xlu0 %v712, 256
          %v715 = vpop.permute.xlu0 %714
          %s717 = sor.u32 256, 8
          %718 = vbcast.lane.b32.xlu0 %v712, %s717
          %v719 = vpop.permute.xlu0 %718
          %v720 = vlaneseq
          %v721 = vshrl.u32 %v720, 7
          %v722 = vsub.s32 3, %v721
          %v723 = vrot.slane %v598, %v722
          %725 = vbcast.lane.b32.xlu0 %v723, 256
          %v726 = vpop.permute.xlu0 %725
          %s728 = sor.u32 256, 8
          %729 = vbcast.lane.b32.xlu0 %v723, %s728
          %v730 = vpop.permute.xlu0 %729
          %v731 = vlaneseq
          %v732 = vshrl.u32 %v731, 7
          %v733 = vsub.s32 4, %v732
          %v734 = vrot.slane %v598, %v733
          %736 = vbcast.lane.b32.xlu0 %v734, 256
          %v737 = vpop.permute.xlu0 %736
          %s739 = sor.u32 256, 8
          %740 = vbcast.lane.b32.xlu0 %v734, %s739
          %v741 = vpop.permute.xlu0 %740
          %v742 = vlaneseq
          %v743 = vshrl.u32 %v742, 7
          %v744 = vsub.s32 5, %v743
          %v745 = vrot.slane %v598, %v744
          %747 = vbcast.lane.b32.xlu0 %v745, 256
          %v748 = vpop.permute.xlu0 %747
          %s750 = sor.u32 256, 8
          %751 = vbcast.lane.b32.xlu0 %v745, %s750
          %v752 = vpop.permute.xlu0 %751
          %v753 = vlaneseq
          %v754 = vshrl.u32 %v753, 7
          %v755 = vsub.s32 6, %v754
          %v756 = vrot.slane %v598, %v755
          %758 = vbcast.lane.b32.xlu0 %v756, 256
          %v759 = vpop.permute.xlu0 %758
          %s761 = sor.u32 256, 8
          %762 = vbcast.lane.b32.xlu0 %v756, %s761
          %v763 = vpop.permute.xlu0 %762
          %v764 = vlaneseq
          %v765 = vshrl.u32 %v764, 7
          %v766 = vsub.s32 7, %v765
          %v767 = vrot.slane %v598, %v766
          %769 = vbcast.lane.b32.xlu0 %v767, 256
          %v770 = vpop.permute.xlu0 %769
          %s772 = sor.u32 256, 8
          %773 = vbcast.lane.b32.xlu0 %v767, %s772
          %v774 = vpop.permute.xlu0 %773
          %vm775 = vcmp.eq.s32.totalorder %v149, %v605
          %vm776 = vcmp.eq.s32.totalorder %v149, %v609
          %vm777 = vcmp.eq.s32.totalorder %v149, %v616
          %vm778 = vcmp.eq.s32.totalorder %v149, %v620
          %vm779 = vcmp.eq.s32.totalorder %v149, %v627
          %vm780 = vcmp.eq.s32.totalorder %v149, %v631
          %vm781 = vcmp.eq.s32.totalorder %v149, %v638
          %vm782 = vcmp.eq.s32.totalorder %v149, %v642
          %vm783 = vcmp.eq.s32.totalorder %v149, %v649
          %vm784 = vcmp.eq.s32.totalorder %v149, %v653
          %vm785 = vcmp.eq.s32.totalorder %v149, %v660
          %vm786 = vcmp.eq.s32.totalorder %v149, %v664
          %vm787 = vcmp.eq.s32.totalorder %v149, %v671
          %vm788 = vcmp.eq.s32.totalorder %v149, %v675
          %vm789 = vcmp.eq.s32.totalorder %v149, %v682
          %vm790 = vcmp.eq.s32.totalorder %v149, %v686
          %vm791 = vcmp.eq.s32.totalorder %v149, %v693
          %vm792 = vcmp.eq.s32.totalorder %v149, %v697
          %vm793 = vcmp.eq.s32.totalorder %v149, %v704
          %vm794 = vcmp.eq.s32.totalorder %v149, %v708
          %vm795 = vcmp.eq.s32.totalorder %v149, %v715
          %vm796 = vcmp.eq.s32.totalorder %v149, %v719
          %vm797 = vcmp.eq.s32.totalorder %v149, %v726
          %vm798 = vcmp.eq.s32.totalorder %v149, %v730
          %vm799 = vcmp.eq.s32.totalorder %v149, %v737
          %vm800 = vcmp.eq.s32.totalorder %v149, %v741
          %vm801 = vcmp.eq.s32.totalorder %v149, %v748
          %vm802 = vcmp.eq.s32.totalorder %v149, %v752
          %vm803 = vcmp.eq.s32.totalorder %v149, %v759
          %vm804 = vcmp.eq.s32.totalorder %v149, %v763
          %vm805 = vcmp.eq.s32.totalorder %v149, %v770
          %vm806 = vcmp.eq.s32.totalorder %v149, %v774
          %v807 = vlaneseq
          %v808 = vshrl.u32 %v807, 7
          %v809 = vsub.s32 0, %v808
          %v810 = vrot.slane %v169, %v809
          %812 = vbcast.lane.b32.xlu0 %v810, 256
          %v813 = vpop.permute.xlu0 %812
          %s815 = sor.u32 256, 8
          %816 = vbcast.lane.b32.xlu0 %v810, %s815
          %v817 = vpop.permute.xlu0 %816
          %v818 = vlaneseq
          %v819 = vshrl.u32 %v818, 7
          %v820 = vsub.s32 1, %v819
          %v821 = vrot.slane %v169, %v820
          %823 = vbcast.lane.b32.xlu0 %v821, 256
          %v824 = vpop.permute.xlu0 %823
          %s826 = sor.u32 256, 8
          %827 = vbcast.lane.b32.xlu0 %v821, %s826
          %v828 = vpop.permute.xlu0 %827
          %v829 = vlaneseq
          %v830 = vshrl.u32 %v829, 7
          %v831 = vsub.s32 2, %v830
          %v832 = vrot.slane %v169, %v831
          %834 = vbcast.lane.b32.xlu0 %v832, 256
          %v835 = vpop.permute.xlu0 %834
          %s837 = sor.u32 256, 8
          %838 = vbcast.lane.b32.xlu0 %v832, %s837
          %v839 = vpop.permute.xlu0 %838
          %v840 = vlaneseq
          %v841 = vshrl.u32 %v840, 7
          %v842 = vsub.s32 3, %v841
          %v843 = vrot.slane %v169, %v842
          %845 = vbcast.lane.b32.xlu0 %v843, 256
          %v846 = vpop.permute.xlu0 %845
          %s848 = sor.u32 256, 8
          %849 = vbcast.lane.b32.xlu0 %v843, %s848
          %v850 = vpop.permute.xlu0 %849
          %v851 = vlaneseq
          %v852 = vshrl.u32 %v851, 7
          %v853 = vsub.s32 4, %v852
          %v854 = vrot.slane %v169, %v853
          %856 = vbcast.lane.b32.xlu0 %v854, 256
          %v857 = vpop.permute.xlu0 %856
          %s859 = sor.u32 256, 8
          %860 = vbcast.lane.b32.xlu0 %v854, %s859
          %v861 = vpop.permute.xlu0 %860
          %v862 = vlaneseq
          %v863 = vshrl.u32 %v862, 7
          %v864 = vsub.s32 5, %v863
          %v865 = vrot.slane %v169, %v864
          %867 = vbcast.lane.b32.xlu0 %v865, 256
          %v868 = vpop.permute.xlu0 %867
          %s870 = sor.u32 256, 8
          %871 = vbcast.lane.b32.xlu0 %v865, %s870
          %v872 = vpop.permute.xlu0 %871
          %v873 = vlaneseq
          %v874 = vshrl.u32 %v873, 7
          %v875 = vsub.s32 6, %v874
          %v876 = vrot.slane %v169, %v875
          %878 = vbcast.lane.b32.xlu0 %v876, 256
          %v879 = vpop.permute.xlu0 %878
          %s881 = sor.u32 256, 8
          %882 = vbcast.lane.b32.xlu0 %v876, %s881
          %v883 = vpop.permute.xlu0 %882
          %v884 = vlaneseq
          %v885 = vshrl.u32 %v884, 7
          %v886 = vsub.s32 7, %v885
          %v887 = vrot.slane %v169, %v886
          %889 = vbcast.lane.b32.xlu0 %v887, 256
          %v890 = vpop.permute.xlu0 %889
          %s892 = sor.u32 256, 8
          %893 = vbcast.lane.b32.xlu0 %v887, %s892
          %v894 = vpop.permute.xlu0 %893
          %v895 = vlaneseq
          %v896 = vshrl.u32 %v895, 7
          %v897 = vsub.s32 0, %v896
          %v898 = vrot.slane %v170, %v897
          %900 = vbcast.lane.b32.xlu0 %v898, 256
          %v901 = vpop.permute.xlu0 %900
          %s903 = sor.u32 256, 8
          %904 = vbcast.lane.b32.xlu0 %v898, %s903
          %v905 = vpop.permute.xlu0 %904
          %v906 = vlaneseq
          %v907 = vshrl.u32 %v906, 7
          %v908 = vsub.s32 1, %v907
          %v909 = vrot.slane %v170, %v908
          %911 = vbcast.lane.b32.xlu0 %v909, 256
          %v912 = vpop.permute.xlu0 %911
          %s914 = sor.u32 256, 8
          %915 = vbcast.lane.b32.xlu0 %v909, %s914
          %v916 = vpop.permute.xlu0 %915
          %v917 = vlaneseq
          %v918 = vshrl.u32 %v917, 7
          %v919 = vsub.s32 2, %v918
          %v920 = vrot.slane %v170, %v919
          %922 = vbcast.lane.b32.xlu0 %v920, 256
          %v923 = vpop.permute.xlu0 %922
          %s925 = sor.u32 256, 8
          %926 = vbcast.lane.b32.xlu0 %v920, %s925
          %v927 = vpop.permute.xlu0 %926
          %v928 = vlaneseq
          %v929 = vshrl.u32 %v928, 7
          %v930 = vsub.s32 3, %v929
          %v931 = vrot.slane %v170, %v930
          %933 = vbcast.lane.b32.xlu0 %v931, 256
          %v934 = vpop.permute.xlu0 %933
          %s936 = sor.u32 256, 8
          %937 = vbcast.lane.b32.xlu0 %v931, %s936
          %v938 = vpop.permute.xlu0 %937
          %v939 = vlaneseq
          %v940 = vshrl.u32 %v939, 7
          %v941 = vsub.s32 4, %v940
          %v942 = vrot.slane %v170, %v941
          %944 = vbcast.lane.b32.xlu0 %v942, 256
          %v945 = vpop.permute.xlu0 %944
          %s947 = sor.u32 256, 8
          %948 = vbcast.lane.b32.xlu0 %v942, %s947
          %v949 = vpop.permute.xlu0 %948
          %v950 = vlaneseq
          %v951 = vshrl.u32 %v950, 7
          %v952 = vsub.s32 5, %v951
          %v953 = vrot.slane %v170, %v952
          %955 = vbcast.lane.b32.xlu0 %v953, 256
          %v956 = vpop.permute.xlu0 %955
          %s958 = sor.u32 256, 8
          %959 = vbcast.lane.b32.xlu0 %v953, %s958
          %v960 = vpop.permute.xlu0 %959
          %v961 = vlaneseq
          %v962 = vshrl.u32 %v961, 7
          %v963 = vsub.s32 6, %v962
          %v964 = vrot.slane %v170, %v963
          %966 = vbcast.lane.b32.xlu0 %v964, 256
          %v967 = vpop.permute.xlu0 %966
          %s969 = sor.u32 256, 8
          %970 = vbcast.lane.b32.xlu0 %v964, %s969
          %v971 = vpop.permute.xlu0 %970
          %v972 = vlaneseq
          %v973 = vshrl.u32 %v972, 7
          %v974 = vsub.s32 7, %v973
          %v975 = vrot.slane %v170, %v974
          %977 = vbcast.lane.b32.xlu0 %v975, 256
          %v978 = vpop.permute.xlu0 %977
          %s980 = sor.u32 256, 8
          %981 = vbcast.lane.b32.xlu0 %v975, %s980
          %v982 = vpop.permute.xlu0 %981
          %v983 = vsel %vm775, %v813, 0.0
          %v984 = vsel %vm776, %v817, 0.0
          %v985 = vsel %vm777, %v824, 0.0
          %v986 = vsel %vm778, %v828, 0.0
          %v987 = vsel %vm779, %v835, 0.0
          %v988 = vsel %vm780, %v839, 0.0
          %v989 = vsel %vm781, %v846, 0.0
          %v990 = vsel %vm782, %v850, 0.0
          %v991 = vsel %vm783, %v857, 0.0
          %v992 = vsel %vm784, %v861, 0.0
          %v993 = vsel %vm785, %v868, 0.0
          %v994 = vsel %vm786, %v872, 0.0
          %v995 = vsel %vm787, %v879, 0.0
          %v996 = vsel %vm788, %v883, 0.0
          %v997 = vsel %vm789, %v890, 0.0
          %v998 = vsel %vm790, %v894, 0.0
          %v999 = vsel %vm791, %v901, 0.0
          %v1000 = vsel %vm792, %v905, 0.0
          %v1001 = vsel %vm793, %v912, 0.0
          %v1002 = vsel %vm794, %v916, 0.0
          %v1003 = vsel %vm795, %v923, 0.0
          %v1004 = vsel %vm796, %v927, 0.0
          %v1005 = vsel %vm797, %v934, 0.0
          %v1006 = vsel %vm798, %v938, 0.0
          %v1007 = vsel %vm799, %v945, 0.0
          %v1008 = vsel %vm800, %v949, 0.0
          %v1009 = vsel %vm801, %v956, 0.0
          %v1010 = vsel %vm802, %v960, 0.0
          %v1011 = vsel %vm803, %v967, 0.0
          %v1012 = vsel %vm804, %v971, 0.0
          %v1013 = vsel %vm805, %v978, 0.0
          %v1014 = vsel %vm806, %v982, 0.0
          %v1015 = vadd.f32 %v565, %v983
          %v1016 = vadd.f32 %v566, %v984
          %v1017 = vadd.f32 %v567, %v985
          %v1018 = vadd.f32 %v568, %v986
          %v1019 = vadd.f32 %v569, %v987
          %v1020 = vadd.f32 %v570, %v988
          %v1021 = vadd.f32 %v571, %v989
          %v1022 = vadd.f32 %v572, %v990
          %v1023 = vadd.f32 %v573, %v991
          %v1024 = vadd.f32 %v574, %v992
          %v1025 = vadd.f32 %v575, %v993
          %v1026 = vadd.f32 %v576, %v994
          %v1027 = vadd.f32 %v577, %v995
          %v1028 = vadd.f32 %v578, %v996
          %v1029 = vadd.f32 %v579, %v997
          %v1030 = vadd.f32 %v580, %v998
          %v1031 = vadd.f32 %v581, %v999
          %v1032 = vadd.f32 %v582, %v1000
          %v1033 = vadd.f32 %v583, %v1001
          %v1034 = vadd.f32 %v584, %v1002
          %v1035 = vadd.f32 %v585, %v1003
          %v1036 = vadd.f32 %v586, %v1004
          %v1037 = vadd.f32 %v587, %v1005
          %v1038 = vadd.f32 %v588, %v1006
          %v1039 = vadd.f32 %v589, %v1007
          %v1040 = vadd.f32 %v590, %v1008
          %v1041 = vadd.f32 %v591, %v1009
          %v1042 = vadd.f32 %v592, %v1010
          %v1043 = vadd.f32 %v593, %v1011
          %v1044 = vadd.f32 %v594, %v1012
          %v1045 = vadd.f32 %v595, %v1013
          %v1046 = vadd.f32 %v596, %v1014
          %v1047 = vlaneseq
          %v1048 = vshrl.u32 %v1047, 7
          %v1049 = vsub.s32 0, %v1048
          %v1050 = vrot.slane %v179, %v1049
          %1052 = vbcast.lane.b32.xlu0 %v1050, 256
          %v1053 = vpop.permute.xlu0 %1052
          %s1055 = sor.u32 256, 8
          %1056 = vbcast.lane.b32.xlu0 %v1050, %s1055
          %v1057 = vpop.permute.xlu0 %1056
          %v1058 = vlaneseq
          %v1059 = vshrl.u32 %v1058, 7
          %v1060 = vsub.s32 1, %v1059
          %v1061 = vrot.slane %v179, %v1060
          %1063 = vbcast.lane.b32.xlu0 %v1061, 256
          %v1064 = vpop.permute.xlu0 %1063
          %s1066 = sor.u32 256, 8
          %1067 = vbcast.lane.b32.xlu0 %v1061, %s1066
          %v1068 = vpop.permute.xlu0 %1067
          %v1069 = vlaneseq
          %v1070 = vshrl.u32 %v1069, 7
          %v1071 = vsub.s32 2, %v1070
          %v1072 = vrot.slane %v179, %v1071
          %1074 = vbcast.lane.b32.xlu0 %v1072, 256
          %v1075 = vpop.permute.xlu0 %1074
          %s1077 = sor.u32 256, 8
          %1078 = vbcast.lane.b32.xlu0 %v1072, %s1077
          %v1079 = vpop.permute.xlu0 %1078
          %v1080 = vlaneseq
          %v1081 = vshrl.u32 %v1080, 7
          %v1082 = vsub.s32 3, %v1081
          %v1083 = vrot.slane %v179, %v1082
          %1085 = vbcast.lane.b32.xlu0 %v1083, 256
          %v1086 = vpop.permute.xlu0 %1085
          %s1088 = sor.u32 256, 8
          %1089 = vbcast.lane.b32.xlu0 %v1083, %s1088
          %v1090 = vpop.permute.xlu0 %1089
          %v1091 = vlaneseq
          %v1092 = vshrl.u32 %v1091, 7
          %v1093 = vsub.s32 4, %v1092
          %v1094 = vrot.slane %v179, %v1093
          %1096 = vbcast.lane.b32.xlu0 %v1094, 256
          %v1097 = vpop.permute.xlu0 %1096
          %s1099 = sor.u32 256, 8
          %1100 = vbcast.lane.b32.xlu0 %v1094, %s1099
          %v1101 = vpop.permute.xlu0 %1100
          %v1102 = vlaneseq
          %v1103 = vshrl.u32 %v1102, 7
          %v1104 = vsub.s32 5, %v1103
          %v1105 = vrot.slane %v179, %v1104
          %1107 = vbcast.lane.b32.xlu0 %v1105, 256
          %v1108 = vpop.permute.xlu0 %1107
          %s1110 = sor.u32 256, 8
          %1111 = vbcast.lane.b32.xlu0 %v1105, %s1110
          %v1112 = vpop.permute.xlu0 %1111
          %v1113 = vlaneseq
          %v1114 = vshrl.u32 %v1113, 7
          %v1115 = vsub.s32 6, %v1114
          %v1116 = vrot.slane %v179, %v1115
          %1118 = vbcast.lane.b32.xlu0 %v1116, 256
          %v1119 = vpop.permute.xlu0 %1118
          %s1121 = sor.u32 256, 8
          %1122 = vbcast.lane.b32.xlu0 %v1116, %s1121
          %v1123 = vpop.permute.xlu0 %1122
          %v1124 = vlaneseq
          %v1125 = vshrl.u32 %v1124, 7
          %v1126 = vsub.s32 7, %v1125
          %v1127 = vrot.slane %v179, %v1126
          %1129 = vbcast.lane.b32.xlu0 %v1127, 256
          %v1130 = vpop.permute.xlu0 %1129
          %s1132 = sor.u32 256, 8
          %1133 = vbcast.lane.b32.xlu0 %v1127, %s1132
          %v1134 = vpop.permute.xlu0 %1133
          %v1135 = vlaneseq
          %v1136 = vshrl.u32 %v1135, 7
          %v1137 = vsub.s32 0, %v1136
          %v1138 = vrot.slane %v180, %v1137
          %1140 = vbcast.lane.b32.xlu0 %v1138, 256
          %v1141 = vpop.permute.xlu0 %1140
          %s1143 = sor.u32 256, 8
          %1144 = vbcast.lane.b32.xlu0 %v1138, %s1143
          %v1145 = vpop.permute.xlu0 %1144
          %v1146 = vlaneseq
          %v1147 = vshrl.u32 %v1146, 7
          %v1148 = vsub.s32 1, %v1147
          %v1149 = vrot.slane %v180, %v1148
          %1151 = vbcast.lane.b32.xlu0 %v1149, 256
          %v1152 = vpop.permute.xlu0 %1151
          %s1154 = sor.u32 256, 8
          %1155 = vbcast.lane.b32.xlu0 %v1149, %s1154
          %v1156 = vpop.permute.xlu0 %1155
          %v1157 = vlaneseq
          %v1158 = vshrl.u32 %v1157, 7
          %v1159 = vsub.s32 2, %v1158
          %v1160 = vrot.slane %v180, %v1159
          %1162 = vbcast.lane.b32.xlu0 %v1160, 256
          %v1163 = vpop.permute.xlu0 %1162
          %s1165 = sor.u32 256, 8
          %1166 = vbcast.lane.b32.xlu0 %v1160, %s1165
          %v1167 = vpop.permute.xlu0 %1166
          %v1168 = vlaneseq
          %v1169 = vshrl.u32 %v1168, 7
          %v1170 = vsub.s32 3, %v1169
          %v1171 = vrot.slane %v180, %v1170
          %1173 = vbcast.lane.b32.xlu0 %v1171, 256
          %v1174 = vpop.permute.xlu0 %1173
          %s1176 = sor.u32 256, 8
          %1177 = vbcast.lane.b32.xlu0 %v1171, %s1176
          %v1178 = vpop.permute.xlu0 %1177
          %v1179 = vlaneseq
          %v1180 = vshrl.u32 %v1179, 7
          %v1181 = vsub.s32 4, %v1180
          %v1182 = vrot.slane %v180, %v1181
          %1184 = vbcast.lane.b32.xlu0 %v1182, 256
          %v1185 = vpop.permute.xlu0 %1184
          %s1187 = sor.u32 256, 8
          %1188 = vbcast.lane.b32.xlu0 %v1182, %s1187
          %v1189 = vpop.permute.xlu0 %1188
          %v1190 = vlaneseq
          %v1191 = vshrl.u32 %v1190, 7
          %v1192 = vsub.s32 5, %v1191
          %v1193 = vrot.slane %v180, %v1192
          %1195 = vbcast.lane.b32.xlu0 %v1193, 256
          %v1196 = vpop.permute.xlu0 %1195
          %s1198 = sor.u32 256, 8
          %1199 = vbcast.lane.b32.xlu0 %v1193, %s1198
          %v1200 = vpop.permute.xlu0 %1199
          %v1201 = vlaneseq
          %v1202 = vshrl.u32 %v1201, 7
          %v1203 = vsub.s32 6, %v1202
          %v1204 = vrot.slane %v180, %v1203
          %1206 = vbcast.lane.b32.xlu0 %v1204, 256
          %v1207 = vpop.permute.xlu0 %1206
          %s1209 = sor.u32 256, 8
          %1210 = vbcast.lane.b32.xlu0 %v1204, %s1209
          %v1211 = vpop.permute.xlu0 %1210
          %v1212 = vlaneseq
          %v1213 = vshrl.u32 %v1212, 7
          %v1214 = vsub.s32 7, %v1213
          %v1215 = vrot.slane %v180, %v1214
          %1217 = vbcast.lane.b32.xlu0 %v1215, 256
          %v1218 = vpop.permute.xlu0 %1217
          %s1220 = sor.u32 256, 8
          %1221 = vbcast.lane.b32.xlu0 %v1215, %s1220
          %v1222 = vpop.permute.xlu0 %1221
          %vm1223 = vcmp.eq.s32.totalorder %v149, %v1053
          %vm1224 = vcmp.eq.s32.totalorder %v149, %v1057
          %vm1225 = vcmp.eq.s32.totalorder %v149, %v1064
          %vm1226 = vcmp.eq.s32.totalorder %v149, %v1068
          %vm1227 = vcmp.eq.s32.totalorder %v149, %v1075
          %vm1228 = vcmp.eq.s32.totalorder %v149, %v1079
          %vm1229 = vcmp.eq.s32.totalorder %v149, %v1086
          %vm1230 = vcmp.eq.s32.totalorder %v149, %v1090
          %vm1231 = vcmp.eq.s32.totalorder %v149, %v1097
          %vm1232 = vcmp.eq.s32.totalorder %v149, %v1101
          %vm1233 = vcmp.eq.s32.totalorder %v149, %v1108
          %vm1234 = vcmp.eq.s32.totalorder %v149, %v1112
          %vm1235 = vcmp.eq.s32.totalorder %v149, %v1119
          %vm1236 = vcmp.eq.s32.totalorder %v149, %v1123
          %vm1237 = vcmp.eq.s32.totalorder %v149, %v1130
          %vm1238 = vcmp.eq.s32.totalorder %v149, %v1134
          %vm1239 = vcmp.eq.s32.totalorder %v149, %v1141
          %vm1240 = vcmp.eq.s32.totalorder %v149, %v1145
          %vm1241 = vcmp.eq.s32.totalorder %v149, %v1152
          %vm1242 = vcmp.eq.s32.totalorder %v149, %v1156
          %vm1243 = vcmp.eq.s32.totalorder %v149, %v1163
          %vm1244 = vcmp.eq.s32.totalorder %v149, %v1167
          %vm1245 = vcmp.eq.s32.totalorder %v149, %v1174
          %vm1246 = vcmp.eq.s32.totalorder %v149, %v1178
          %vm1247 = vcmp.eq.s32.totalorder %v149, %v1185
          %vm1248 = vcmp.eq.s32.totalorder %v149, %v1189
          %vm1249 = vcmp.eq.s32.totalorder %v149, %v1196
          %vm1250 = vcmp.eq.s32.totalorder %v149, %v1200
          %vm1251 = vcmp.eq.s32.totalorder %v149, %v1207
          %vm1252 = vcmp.eq.s32.totalorder %v149, %v1211
          %vm1253 = vcmp.eq.s32.totalorder %v149, %v1218
          %vm1254 = vcmp.eq.s32.totalorder %v149, %v1222
          %v1255 = vlaneseq
          %v1256 = vshrl.u32 %v1255, 7
          %v1257 = vsub.s32 0, %v1256
          %v1258 = vrot.slane %v175, %v1257
          %1260 = vbcast.lane.b32.xlu0 %v1258, 256
          %v1261 = vpop.permute.xlu0 %1260
          %s1263 = sor.u32 256, 8
          %1264 = vbcast.lane.b32.xlu0 %v1258, %s1263
          %v1265 = vpop.permute.xlu0 %1264
          %v1266 = vlaneseq
          %v1267 = vshrl.u32 %v1266, 7
          %v1268 = vsub.s32 1, %v1267
          %v1269 = vrot.slane %v175, %v1268
          %1271 = vbcast.lane.b32.xlu0 %v1269, 256
          %v1272 = vpop.permute.xlu0 %1271
          %s1274 = sor.u32 256, 8
          %1275 = vbcast.lane.b32.xlu0 %v1269, %s1274
          %v1276 = vpop.permute.xlu0 %1275
          %v1277 = vlaneseq
          %v1278 = vshrl.u32 %v1277, 7
          %v1279 = vsub.s32 2, %v1278
          %v1280 = vrot.slane %v175, %v1279
          %1282 = vbcast.lane.b32.xlu0 %v1280, 256
          %v1283 = vpop.permute.xlu0 %1282
          %s1285 = sor.u32 256, 8
          %1286 = vbcast.lane.b32.xlu0 %v1280, %s1285
          %v1287 = vpop.permute.xlu0 %1286
          %v1288 = vlaneseq
          %v1289 = vshrl.u32 %v1288, 7
          %v1290 = vsub.s32 3, %v1289
          %v1291 = vrot.slane %v175, %v1290
          %1293 = vbcast.lane.b32.xlu0 %v1291, 256
          %v1294 = vpop.permute.xlu0 %1293
          %s1296 = sor.u32 256, 8
          %1297 = vbcast.lane.b32.xlu0 %v1291, %s1296
          %v1298 = vpop.permute.xlu0 %1297
          %v1299 = vlaneseq
          %v1300 = vshrl.u32 %v1299, 7
          %v1301 = vsub.s32 4, %v1300
          %v1302 = vrot.slane %v175, %v1301
          %1304 = vbcast.lane.b32.xlu0 %v1302, 256
          %v1305 = vpop.permute.xlu0 %1304
          %s1307 = sor.u32 256, 8
          %1308 = vbcast.lane.b32.xlu0 %v1302, %s1307
          %v1309 = vpop.permute.xlu0 %1308
          %v1310 = vlaneseq
          %v1311 = vshrl.u32 %v1310, 7
          %v1312 = vsub.s32 5, %v1311
          %v1313 = vrot.slane %v175, %v1312
          %1315 = vbcast.lane.b32.xlu0 %v1313, 256
          %v1316 = vpop.permute.xlu0 %1315
          %s1318 = sor.u32 256, 8
          %1319 = vbcast.lane.b32.xlu0 %v1313, %s1318
          %v1320 = vpop.permute.xlu0 %1319
          %v1321 = vlaneseq
          %v1322 = vshrl.u32 %v1321, 7
          %v1323 = vsub.s32 6, %v1322
          %v1324 = vrot.slane %v175, %v1323
          %1326 = vbcast.lane.b32.xlu0 %v1324, 256
          %v1327 = vpop.permute.xlu0 %1326
          %s1329 = sor.u32 256, 8
          %1330 = vbcast.lane.b32.xlu0 %v1324, %s1329
          %v1331 = vpop.permute.xlu0 %1330
          %v1332 = vlaneseq
          %v1333 = vshrl.u32 %v1332, 7
          %v1334 = vsub.s32 7, %v1333
          %v1335 = vrot.slane %v175, %v1334
          %1337 = vbcast.lane.b32.xlu0 %v1335, 256
          %v1338 = vpop.permute.xlu0 %1337
          %s1340 = sor.u32 256, 8
          %1341 = vbcast.lane.b32.xlu0 %v1335, %s1340
          %v1342 = vpop.permute.xlu0 %1341
          %v1343 = vlaneseq
          %v1344 = vshrl.u32 %v1343, 7
          %v1345 = vsub.s32 0, %v1344
          %v1346 = vrot.slane %v176, %v1345
          %1348 = vbcast.lane.b32.xlu0 %v1346, 256
          %v1349 = vpop.permute.xlu0 %1348
          %s1351 = sor.u32 256, 8
          %1352 = vbcast.lane.b32.xlu0 %v1346, %s1351
          %v1353 = vpop.permute.xlu0 %1352
          %v1354 = vlaneseq
          %v1355 = vshrl.u32 %v1354, 7
          %v1356 = vsub.s32 1, %v1355
          %v1357 = vrot.slane %v176, %v1356
          %1359 = vbcast.lane.b32.xlu0 %v1357, 256
          %v1360 = vpop.permute.xlu0 %1359
          %s1362 = sor.u32 256, 8
          %1363 = vbcast.lane.b32.xlu0 %v1357, %s1362
          %v1364 = vpop.permute.xlu0 %1363
          %v1365 = vlaneseq
          %v1366 = vshrl.u32 %v1365, 7
          %v1367 = vsub.s32 2, %v1366
          %v1368 = vrot.slane %v176, %v1367
          %1370 = vbcast.lane.b32.xlu0 %v1368, 256
          %v1371 = vpop.permute.xlu0 %1370
          %s1373 = sor.u32 256, 8
          %1374 = vbcast.lane.b32.xlu0 %v1368, %s1373
          %v1375 = vpop.permute.xlu0 %1374
          %v1376 = vlaneseq
          %v1377 = vshrl.u32 %v1376, 7
          %v1378 = vsub.s32 3, %v1377
          %v1379 = vrot.slane %v176, %v1378
          %1381 = vbcast.lane.b32.xlu0 %v1379, 256
          %v1382 = vpop.permute.xlu0 %1381
          %s1384 = sor.u32 256, 8
          %1385 = vbcast.lane.b32.xlu0 %v1379, %s1384
          %v1386 = vpop.permute.xlu0 %1385
          %v1387 = vlaneseq
          %v1388 = vshrl.u32 %v1387, 7
          %v1389 = vsub.s32 4, %v1388
          %v1390 = vrot.slane %v176, %v1389
          %1392 = vbcast.lane.b32.xlu0 %v1390, 256
          %v1393 = vpop.permute.xlu0 %1392
          %s1395 = sor.u32 256, 8
          %1396 = vbcast.lane.b32.xlu0 %v1390, %s1395
          %v1397 = vpop.permute.xlu0 %1396
          %v1398 = vlaneseq
          %v1399 = vshrl.u32 %v1398, 7
          %v1400 = vsub.s32 5, %v1399
          %v1401 = vrot.slane %v176, %v1400
          %1403 = vbcast.lane.b32.xlu0 %v1401, 256
          %v1404 = vpop.permute.xlu0 %1403
          %s1406 = sor.u32 256, 8
          %1407 = vbcast.lane.b32.xlu0 %v1401, %s1406
          %v1408 = vpop.permute.xlu0 %1407
          %v1409 = vlaneseq
          %v1410 = vshrl.u32 %v1409, 7
          %v1411 = vsub.s32 6, %v1410
          %v1412 = vrot.slane %v176, %v1411
          %1414 = vbcast.lane.b32.xlu0 %v1412, 256
          %v1415 = vpop.permute.xlu0 %1414
          %s1417 = sor.u32 256, 8
          %1418 = vbcast.lane.b32.xlu0 %v1412, %s1417
          %v1419 = vpop.permute.xlu0 %1418
          %v1420 = vlaneseq
          %v1421 = vshrl.u32 %v1420, 7
          %v1422 = vsub.s32 7, %v1421
          %v1423 = vrot.slane %v176, %v1422
          %1425 = vbcast.lane.b32.xlu0 %v1423, 256
          %v1426 = vpop.permute.xlu0 %1425
          %s1428 = sor.u32 256, 8
          %1429 = vbcast.lane.b32.xlu0 %v1423, %s1428
          %v1430 = vpop.permute.xlu0 %1429
          %v1431 = vsel %vm1223, %v1261, 0.0
          %v1432 = vsel %vm1224, %v1265, 0.0
          %v1433 = vsel %vm1225, %v1272, 0.0
          %v1434 = vsel %vm1226, %v1276, 0.0
          %v1435 = vsel %vm1227, %v1283, 0.0
          %v1436 = vsel %vm1228, %v1287, 0.0
          %v1437 = vsel %vm1229, %v1294, 0.0
          %v1438 = vsel %vm1230, %v1298, 0.0
          %v1439 = vsel %vm1231, %v1305, 0.0
          %v1440 = vsel %vm1232, %v1309, 0.0
          %v1441 = vsel %vm1233, %v1316, 0.0
          %v1442 = vsel %vm1234, %v1320, 0.0
          %v1443 = vsel %vm1235, %v1327, 0.0
          %v1444 = vsel %vm1236, %v1331, 0.0
          %v1445 = vsel %vm1237, %v1338, 0.0
          %v1446 = vsel %vm1238, %v1342, 0.0
          %v1447 = vsel %vm1239, %v1349, 0.0
          %v1448 = vsel %vm1240, %v1353, 0.0
          %v1449 = vsel %vm1241, %v1360, 0.0
          %v1450 = vsel %vm1242, %v1364, 0.0
          %v1451 = vsel %vm1243, %v1371, 0.0
          %v1452 = vsel %vm1244, %v1375, 0.0
          %v1453 = vsel %vm1245, %v1382, 0.0
          %v1454 = vsel %vm1246, %v1386, 0.0
          %v1455 = vsel %vm1247, %v1393, 0.0
          %v1456 = vsel %vm1248, %v1397, 0.0
          %v1457 = vsel %vm1249, %v1404, 0.0
          %v1458 = vsel %vm1250, %v1408, 0.0
          %v1459 = vsel %vm1251, %v1415, 0.0
          %v1460 = vsel %vm1252, %v1419, 0.0
          %v1461 = vsel %vm1253, %v1426, 0.0
          %v1462 = vsel %vm1254, %v1430, 0.0
          %v1463 = vadd.s32 %v179, 1
          %v1464 = vadd.s32 %v180, 1
          %v1465 = vlaneseq
          %v1466 = vshrl.u32 %v1465, 7
          %v1467 = vsub.s32 0, %v1466
          %v1468 = vrot.slane %v1463, %v1467
          %1470 = vbcast.lane.b32.xlu0 %v1468, 256
          %v1471 = vpop.permute.xlu0 %1470
          %s1473 = sor.u32 256, 8
          %1474 = vbcast.lane.b32.xlu0 %v1468, %s1473
          %v1475 = vpop.permute.xlu0 %1474
          %v1476 = vlaneseq
          %v1477 = vshrl.u32 %v1476, 7
          %v1478 = vsub.s32 1, %v1477
          %v1479 = vrot.slane %v1463, %v1478
          %1481 = vbcast.lane.b32.xlu0 %v1479, 256
          %v1482 = vpop.permute.xlu0 %1481
          %s1484 = sor.u32 256, 8
          %1485 = vbcast.lane.b32.xlu0 %v1479, %s1484
          %v1486 = vpop.permute.xlu0 %1485
          %v1487 = vlaneseq
          %v1488 = vshrl.u32 %v1487, 7
          %v1489 = vsub.s32 2, %v1488
          %v1490 = vrot.slane %v1463, %v1489
          %1492 = vbcast.lane.b32.xlu0 %v1490, 256
          %v1493 = vpop.permute.xlu0 %1492
          %s1495 = sor.u32 256, 8
          %1496 = vbcast.lane.b32.xlu0 %v1490, %s1495
          %v1497 = vpop.permute.xlu0 %1496
          %v1498 = vlaneseq
          %v1499 = vshrl.u32 %v1498, 7
          %v1500 = vsub.s32 3, %v1499
          %v1501 = vrot.slane %v1463, %v1500
          %1503 = vbcast.lane.b32.xlu0 %v1501, 256
          %v1504 = vpop.permute.xlu0 %1503
          %s1506 = sor.u32 256, 8
          %1507 = vbcast.lane.b32.xlu0 %v1501, %s1506
          %v1508 = vpop.permute.xlu0 %1507
          %v1509 = vlaneseq
          %v1510 = vshrl.u32 %v1509, 7
          %v1511 = vsub.s32 4, %v1510
          %v1512 = vrot.slane %v1463, %v1511
          %1514 = vbcast.lane.b32.xlu0 %v1512, 256
          %v1515 = vpop.permute.xlu0 %1514
          %s1517 = sor.u32 256, 8
          %1518 = vbcast.lane.b32.xlu0 %v1512, %s1517
          %v1519 = vpop.permute.xlu0 %1518
          %v1520 = vlaneseq
          %v1521 = vshrl.u32 %v1520, 7
          %v1522 = vsub.s32 5, %v1521
          %v1523 = vrot.slane %v1463, %v1522
          %1525 = vbcast.lane.b32.xlu0 %v1523, 256
          %v1526 = vpop.permute.xlu0 %1525
          %s1528 = sor.u32 256, 8
          %1529 = vbcast.lane.b32.xlu0 %v1523, %s1528
          %v1530 = vpop.permute.xlu0 %1529
          %v1531 = vlaneseq
          %v1532 = vshrl.u32 %v1531, 7
          %v1533 = vsub.s32 6, %v1532
          %v1534 = vrot.slane %v1463, %v1533
          %1536 = vbcast.lane.b32.xlu0 %v1534, 256
          %v1537 = vpop.permute.xlu0 %1536
          %s1539 = sor.u32 256, 8
          %1540 = vbcast.lane.b32.xlu0 %v1534, %s1539
          %v1541 = vpop.permute.xlu0 %1540
          %v1542 = vlaneseq
          %v1543 = vshrl.u32 %v1542, 7
          %v1544 = vsub.s32 7, %v1543
          %v1545 = vrot.slane %v1463, %v1544
          %1547 = vbcast.lane.b32.xlu0 %v1545, 256
          %v1548 = vpop.permute.xlu0 %1547
          %s1550 = sor.u32 256, 8
          %1551 = vbcast.lane.b32.xlu0 %v1545, %s1550
          %v1552 = vpop.permute.xlu0 %1551
          %v1553 = vlaneseq
          %v1554 = vshrl.u32 %v1553, 7
          %v1555 = vsub.s32 0, %v1554
          %v1556 = vrot.slane %v1464, %v1555
          %1558 = vbcast.lane.b32.xlu0 %v1556, 256
          %v1559 = vpop.permute.xlu0 %1558
          %s1561 = sor.u32 256, 8
          %1562 = vbcast.lane.b32.xlu0 %v1556, %s1561
          %v1563 = vpop.permute.xlu0 %1562
          %v1564 = vlaneseq
          %v1565 = vshrl.u32 %v1564, 7
          %v1566 = vsub.s32 1, %v1565
          %v1567 = vrot.slane %v1464, %v1566
          %1569 = vbcast.lane.b32.xlu0 %v1567, 256
          %v1570 = vpop.permute.xlu0 %1569
          %s1572 = sor.u32 256, 8
          %1573 = vbcast.lane.b32.xlu0 %v1567, %s1572
          %v1574 = vpop.permute.xlu0 %1573
          %v1575 = vlaneseq
          %v1576 = vshrl.u32 %v1575, 7
          %v1577 = vsub.s32 2, %v1576
          %v1578 = vrot.slane %v1464, %v1577
          %1580 = vbcast.lane.b32.xlu0 %v1578, 256
          %v1581 = vpop.permute.xlu0 %1580
          %s1583 = sor.u32 256, 8
          %1584 = vbcast.lane.b32.xlu0 %v1578, %s1583
          %v1585 = vpop.permute.xlu0 %1584
          %v1586 = vlaneseq
          %v1587 = vshrl.u32 %v1586, 7
          %v1588 = vsub.s32 3, %v1587
          %v1589 = vrot.slane %v1464, %v1588
          %1591 = vbcast.lane.b32.xlu0 %v1589, 256
          %v1592 = vpop.permute.xlu0 %1591
          %s1594 = sor.u32 256, 8
          %1595 = vbcast.lane.b32.xlu0 %v1589, %s1594
          %v1596 = vpop.permute.xlu0 %1595
          %v1597 = vlaneseq
          %v1598 = vshrl.u32 %v1597, 7
          %v1599 = vsub.s32 4, %v1598
          %v1600 = vrot.slane %v1464, %v1599
          %1602 = vbcast.lane.b32.xlu0 %v1600, 256
          %v1603 = vpop.permute.xlu0 %1602
          %s1605 = sor.u32 256, 8
          %1606 = vbcast.lane.b32.xlu0 %v1600, %s1605
          %v1607 = vpop.permute.xlu0 %1606
          %v1608 = vlaneseq
          %v1609 = vshrl.u32 %v1608, 7
          %v1610 = vsub.s32 5, %v1609
          %v1611 = vrot.slane %v1464, %v1610
          %1613 = vbcast.lane.b32.xlu0 %v1611, 256
          %v1614 = vpop.permute.xlu0 %1613
          %s1616 = sor.u32 256, 8
          %1617 = vbcast.lane.b32.xlu0 %v1611, %s1616
          %v1618 = vpop.permute.xlu0 %1617
          %v1619 = vlaneseq
          %v1620 = vshrl.u32 %v1619, 7
          %v1621 = vsub.s32 6, %v1620
          %v1622 = vrot.slane %v1464, %v1621
          %1624 = vbcast.lane.b32.xlu0 %v1622, 256
          %v1625 = vpop.permute.xlu0 %1624
          %s1627 = sor.u32 256, 8
          %1628 = vbcast.lane.b32.xlu0 %v1622, %s1627
          %v1629 = vpop.permute.xlu0 %1628
          %v1630 = vlaneseq
          %v1631 = vshrl.u32 %v1630, 7
          %v1632 = vsub.s32 7, %v1631
          %v1633 = vrot.slane %v1464, %v1632
          %1635 = vbcast.lane.b32.xlu0 %v1633, 256
          %v1636 = vpop.permute.xlu0 %1635
          %s1638 = sor.u32 256, 8
          %1639 = vbcast.lane.b32.xlu0 %v1633, %s1638
          %v1640 = vpop.permute.xlu0 %1639
          %vm1641 = vcmp.eq.s32.totalorder %v149, %v1471
          %vm1642 = vcmp.eq.s32.totalorder %v149, %v1475
          %vm1643 = vcmp.eq.s32.totalorder %v149, %v1482
          %vm1644 = vcmp.eq.s32.totalorder %v149, %v1486
          %vm1645 = vcmp.eq.s32.totalorder %v149, %v1493
          %vm1646 = vcmp.eq.s32.totalorder %v149, %v1497
          %vm1647 = vcmp.eq.s32.totalorder %v149, %v1504
          %vm1648 = vcmp.eq.s32.totalorder %v149, %v1508
          %vm1649 = vcmp.eq.s32.totalorder %v149, %v1515
          %vm1650 = vcmp.eq.s32.totalorder %v149, %v1519
          %vm1651 = vcmp.eq.s32.totalorder %v149, %v1526
          %vm1652 = vcmp.eq.s32.totalorder %v149, %v1530
          %vm1653 = vcmp.eq.s32.totalorder %v149, %v1537
          %vm1654 = vcmp.eq.s32.totalorder %v149, %v1541
          %vm1655 = vcmp.eq.s32.totalorder %v149, %v1548
          %vm1656 = vcmp.eq.s32.totalorder %v149, %v1552
          %vm1657 = vcmp.eq.s32.totalorder %v149, %v1559
          %vm1658 = vcmp.eq.s32.totalorder %v149, %v1563
          %vm1659 = vcmp.eq.s32.totalorder %v149, %v1570
          %vm1660 = vcmp.eq.s32.totalorder %v149, %v1574
          %vm1661 = vcmp.eq.s32.totalorder %v149, %v1581
          %vm1662 = vcmp.eq.s32.totalorder %v149, %v1585
          %vm1663 = vcmp.eq.s32.totalorder %v149, %v1592
          %vm1664 = vcmp.eq.s32.totalorder %v149, %v1596
          %vm1665 = vcmp.eq.s32.totalorder %v149, %v1603
          %vm1666 = vcmp.eq.s32.totalorder %v149, %v1607
          %vm1667 = vcmp.eq.s32.totalorder %v149, %v1614
          %vm1668 = vcmp.eq.s32.totalorder %v149, %v1618
          %vm1669 = vcmp.eq.s32.totalorder %v149, %v1625
          %vm1670 = vcmp.eq.s32.totalorder %v149, %v1629
          %vm1671 = vcmp.eq.s32.totalorder %v149, %v1636
          %vm1672 = vcmp.eq.s32.totalorder %v149, %v1640
          %v1673 = vlaneseq
          %v1674 = vshrl.u32 %v1673, 7
          %v1675 = vsub.s32 0, %v1674
          %v1676 = vrot.slane %v171, %v1675
          %1678 = vbcast.lane.b32.xlu0 %v1676, 256
          %v1679 = vpop.permute.xlu0 %1678
          %s1681 = sor.u32 256, 8
          %1682 = vbcast.lane.b32.xlu0 %v1676, %s1681
          %v1683 = vpop.permute.xlu0 %1682
          %v1684 = vlaneseq
          %v1685 = vshrl.u32 %v1684, 7
          %v1686 = vsub.s32 1, %v1685
          %v1687 = vrot.slane %v171, %v1686
          %1689 = vbcast.lane.b32.xlu0 %v1687, 256
          %v1690 = vpop.permute.xlu0 %1689
          %s1692 = sor.u32 256, 8
          %1693 = vbcast.lane.b32.xlu0 %v1687, %s1692
          %v1694 = vpop.permute.xlu0 %1693
          %v1695 = vlaneseq
          %v1696 = vshrl.u32 %v1695, 7
          %v1697 = vsub.s32 2, %v1696
          %v1698 = vrot.slane %v171, %v1697
          %1700 = vbcast.lane.b32.xlu0 %v1698, 256
          %v1701 = vpop.permute.xlu0 %1700
          %s1703 = sor.u32 256, 8
          %1704 = vbcast.lane.b32.xlu0 %v1698, %s1703
          %v1705 = vpop.permute.xlu0 %1704
          %v1706 = vlaneseq
          %v1707 = vshrl.u32 %v1706, 7
          %v1708 = vsub.s32 3, %v1707
          %v1709 = vrot.slane %v171, %v1708
          %1711 = vbcast.lane.b32.xlu0 %v1709, 256
          %v1712 = vpop.permute.xlu0 %1711
          %s1714 = sor.u32 256, 8
          %1715 = vbcast.lane.b32.xlu0 %v1709, %s1714
          %v1716 = vpop.permute.xlu0 %1715
          %v1717 = vlaneseq
          %v1718 = vshrl.u32 %v1717, 7
          %v1719 = vsub.s32 4, %v1718
          %v1720 = vrot.slane %v171, %v1719
          %1722 = vbcast.lane.b32.xlu0 %v1720, 256
          %v1723 = vpop.permute.xlu0 %1722
          %s1725 = sor.u32 256, 8
          %1726 = vbcast.lane.b32.xlu0 %v1720, %s1725
          %v1727 = vpop.permute.xlu0 %1726
          %v1728 = vlaneseq
          %v1729 = vshrl.u32 %v1728, 7
          %v1730 = vsub.s32 5, %v1729
          %v1731 = vrot.slane %v171, %v1730
          %1733 = vbcast.lane.b32.xlu0 %v1731, 256
          %v1734 = vpop.permute.xlu0 %1733
          %s1736 = sor.u32 256, 8
          %1737 = vbcast.lane.b32.xlu0 %v1731, %s1736
          %v1738 = vpop.permute.xlu0 %1737
          %v1739 = vlaneseq
          %v1740 = vshrl.u32 %v1739, 7
          %v1741 = vsub.s32 6, %v1740
          %v1742 = vrot.slane %v171, %v1741
          %1744 = vbcast.lane.b32.xlu0 %v1742, 256
          %v1745 = vpop.permute.xlu0 %1744
          %s1747 = sor.u32 256, 8
          %1748 = vbcast.lane.b32.xlu0 %v1742, %s1747
          %v1749 = vpop.permute.xlu0 %1748
          %v1750 = vlaneseq
          %v1751 = vshrl.u32 %v1750, 7
          %v1752 = vsub.s32 7, %v1751
          %v1753 = vrot.slane %v171, %v1752
          %1755 = vbcast.lane.b32.xlu0 %v1753, 256
          %v1756 = vpop.permute.xlu0 %1755
          %s1758 = sor.u32 256, 8
          %1759 = vbcast.lane.b32.xlu0 %v1753, %s1758
          %v1760 = vpop.permute.xlu0 %1759
          %v1761 = vlaneseq
          %v1762 = vshrl.u32 %v1761, 7
          %v1763 = vsub.s32 0, %v1762
          %v1764 = vrot.slane %v172, %v1763
          %1766 = vbcast.lane.b32.xlu0 %v1764, 256
          %v1767 = vpop.permute.xlu0 %1766
          %s1769 = sor.u32 256, 8
          %1770 = vbcast.lane.b32.xlu0 %v1764, %s1769
          %v1771 = vpop.permute.xlu0 %1770
          %v1772 = vlaneseq
          %v1773 = vshrl.u32 %v1772, 7
          %v1774 = vsub.s32 1, %v1773
          %v1775 = vrot.slane %v172, %v1774
          %1777 = vbcast.lane.b32.xlu0 %v1775, 256
          %v1778 = vpop.permute.xlu0 %1777
          %s1780 = sor.u32 256, 8
          %1781 = vbcast.lane.b32.xlu0 %v1775, %s1780
          %v1782 = vpop.permute.xlu0 %1781
          %v1783 = vlaneseq
          %v1784 = vshrl.u32 %v1783, 7
          %v1785 = vsub.s32 2, %v1784
          %v1786 = vrot.slane %v172, %v1785
          %1788 = vbcast.lane.b32.xlu0 %v1786, 256
          %v1789 = vpop.permute.xlu0 %1788
          %s1791 = sor.u32 256, 8
          %1792 = vbcast.lane.b32.xlu0 %v1786, %s1791
          %v1793 = vpop.permute.xlu0 %1792
          %v1794 = vlaneseq
          %v1795 = vshrl.u32 %v1794, 7
          %v1796 = vsub.s32 3, %v1795
          %v1797 = vrot.slane %v172, %v1796
          %1799 = vbcast.lane.b32.xlu0 %v1797, 256
          %v1800 = vpop.permute.xlu0 %1799
          %s1802 = sor.u32 256, 8
          %1803 = vbcast.lane.b32.xlu0 %v1797, %s1802
          %v1804 = vpop.permute.xlu0 %1803
          %v1805 = vlaneseq
          %v1806 = vshrl.u32 %v1805, 7
          %v1807 = vsub.s32 4, %v1806
          %v1808 = vrot.slane %v172, %v1807
          %1810 = vbcast.lane.b32.xlu0 %v1808, 256
          %v1811 = vpop.permute.xlu0 %1810
          %s1813 = sor.u32 256, 8
          %1814 = vbcast.lane.b32.xlu0 %v1808, %s1813
          %v1815 = vpop.permute.xlu0 %1814
          %v1816 = vlaneseq
          %v1817 = vshrl.u32 %v1816, 7
          %v1818 = vsub.s32 5, %v1817
          %v1819 = vrot.slane %v172, %v1818
          %1821 = vbcast.lane.b32.xlu0 %v1819, 256
          %v1822 = vpop.permute.xlu0 %1821
          %s1824 = sor.u32 256, 8
          %1825 = vbcast.lane.b32.xlu0 %v1819, %s1824
          %v1826 = vpop.permute.xlu0 %1825
          %v1827 = vlaneseq
          %v1828 = vshrl.u32 %v1827, 7
          %v1829 = vsub.s32 6, %v1828
          %v1830 = vrot.slane %v172, %v1829
          %1832 = vbcast.lane.b32.xlu0 %v1830, 256
          %v1833 = vpop.permute.xlu0 %1832
          %s1835 = sor.u32 256, 8
          %1836 = vbcast.lane.b32.xlu0 %v1830, %s1835
          %v1837 = vpop.permute.xlu0 %1836
          %v1838 = vlaneseq
          %v1839 = vshrl.u32 %v1838, 7
          %v1840 = vsub.s32 7, %v1839
          %v1841 = vrot.slane %v172, %v1840
          %1843 = vbcast.lane.b32.xlu0 %v1841, 256
          %v1844 = vpop.permute.xlu0 %1843
          %s1846 = sor.u32 256, 8
          %1847 = vbcast.lane.b32.xlu0 %v1841, %s1846
          %v1848 = vpop.permute.xlu0 %1847
          %v1849 = vsel %vm1641, %v1679, 0.0
          %v1850 = vsel %vm1642, %v1683, 0.0
          %v1851 = vsel %vm1643, %v1690, 0.0
          %v1852 = vsel %vm1644, %v1694, 0.0
          %v1853 = vsel %vm1645, %v1701, 0.0
          %v1854 = vsel %vm1646, %v1705, 0.0
          %v1855 = vsel %vm1647, %v1712, 0.0
          %v1856 = vsel %vm1648, %v1716, 0.0
          %v1857 = vsel %vm1649, %v1723, 0.0
          %v1858 = vsel %vm1650, %v1727, 0.0
          %v1859 = vsel %vm1651, %v1734, 0.0
          %v1860 = vsel %vm1652, %v1738, 0.0
          %v1861 = vsel %vm1653, %v1745, 0.0
          %v1862 = vsel %vm1654, %v1749, 0.0
          %v1863 = vsel %vm1655, %v1756, 0.0
          %v1864 = vsel %vm1656, %v1760, 0.0
          %v1865 = vsel %vm1657, %v1767, 0.0
          %v1866 = vsel %vm1658, %v1771, 0.0
          %v1867 = vsel %vm1659, %v1778, 0.0
          %v1868 = vsel %vm1660, %v1782, 0.0
          %v1869 = vsel %vm1661, %v1789, 0.0
          %v1870 = vsel %vm1662, %v1793, 0.0
          %v1871 = vsel %vm1663, %v1800, 0.0
          %v1872 = vsel %vm1664, %v1804, 0.0
          %v1873 = vsel %vm1665, %v1811, 0.0
          %v1874 = vsel %vm1666, %v1815, 0.0
          %v1875 = vsel %vm1667, %v1822, 0.0
          %v1876 = vsel %vm1668, %v1826, 0.0
          %v1877 = vsel %vm1669, %v1833, 0.0
          %v1878 = vsel %vm1670, %v1837, 0.0
          %v1879 = vsel %vm1671, %v1844, 0.0
          %v1880 = vsel %vm1672, %v1848, 0.0
          %v1881 = vadd.f32 %v1431, %v1849
          %v1882 = vadd.f32 %v1432, %v1850
          %v1883 = vadd.f32 %v1433, %v1851
          %v1884 = vadd.f32 %v1434, %v1852
          %v1885 = vadd.f32 %v1435, %v1853
          %v1886 = vadd.f32 %v1436, %v1854
          %v1887 = vadd.f32 %v1437, %v1855
          %v1888 = vadd.f32 %v1438, %v1856
          %v1889 = vadd.f32 %v1439, %v1857
          %v1890 = vadd.f32 %v1440, %v1858
          %v1891 = vadd.f32 %v1441, %v1859
          %v1892 = vadd.f32 %v1442, %v1860
          %v1893 = vadd.f32 %v1443, %v1861
          %v1894 = vadd.f32 %v1444, %v1862
          %v1895 = vadd.f32 %v1445, %v1863
          %v1896 = vadd.f32 %v1446, %v1864
          %v1897 = vadd.f32 %v1447, %v1865
          %v1898 = vadd.f32 %v1448, %v1866
          %v1899 = vadd.f32 %v1449, %v1867
          %v1900 = vadd.f32 %v1450, %v1868
          %v1901 = vadd.f32 %v1451, %v1869
          %v1902 = vadd.f32 %v1452, %v1870
          %v1903 = vadd.f32 %v1453, %v1871
          %v1904 = vadd.f32 %v1454, %v1872
          %v1905 = vadd.f32 %v1455, %v1873
          %v1906 = vadd.f32 %v1456, %v1874
          %v1907 = vadd.f32 %v1457, %v1875
          %v1908 = vadd.f32 %v1458, %v1876
          %v1909 = vadd.f32 %v1459, %v1877
          %v1910 = vadd.f32 %v1460, %v1878
          %v1911 = vadd.f32 %v1461, %v1879
          %v1912 = vadd.f32 %v1462, %v1880
          %vm1913 = vcmask 130048
          %v1915 = vsel %vm1913, %v1015, 0
          %v1918 = vsel %vm1913, %v1016, 0
          %1920 = vmatprep.subr.mxu0 0.0
          %1921 = vmatpush1.msra.mxu0 %v157
          %1922 = vmatprep.subr.mxu0 0.0
          %1923 = vmatpush1.msra.mxu0 %v158
          %1924 = vmatprep.subr.mxu0 0.0
          %1925 = vmatpush1.msra.mxu0 0.0
          %1926 = vmatprep.subr.mxu0 0.0
          %1927 = vmatpush1.msra.mxu0 0.0
          %1928 = vmatprep.subr.mxu0 0.0
          %1929 = vmatpush1.msra.mxu0 0.0
          %1930 = vmatprep.subr.mxu0 0.0
          %1931 = vmatpush1.msra.mxu0 0.0
          %1932 = vmatprep.subr.mxu0 0.0
          %1933 = vmatpush1.msra.mxu0 0.0
          %1934 = vmatprep.subr.mxu0 0.0
          %1935 = vmatpush1.msra.mxu0 0.0
          %1936 = vmatprep.subr.mxu0 0.0
          %1937 = vmatpush1.msra.mxu0 0.0
          %1938 = vmatprep.subr.mxu0 0.0
          %1939 = vmatpush1.msra.mxu0 0.0
          %1940 = vmatprep.subr.mxu0 0.0
          %1941 = vmatpush1.msra.mxu0 0.0
          %1942 = vmatprep.subr.mxu0 0.0
          %1943 = vmatpush1.msra.mxu0 0.0
          %1944 = vmatprep.subr.mxu0 0.0
          %1945 = vmatpush1.msra.mxu0 0.0
          %1946 = vmatprep.subr.mxu0 0.0
          %1947 = vmatpush1.msra.mxu0 0.0
          %1948 = vmatprep.subr.mxu0 0.0
          %1949 = vmatpush1.msra.mxu0 0.0
          %1950 = vmatprep.subr.mxu0 0.0
          %1951 = vmatpush1.msra.mxu0 0.0
          %1952 = vmatprep.subr.mxu0 0.0
          %1953 = vmatpush1.msra.mxu0 0.0
          %1954 = vmatprep.subr.mxu0 0.0
          %1955 = vmatpush1.msra.mxu0 0.0
          %1956 = vmatprep.subr.mxu0 0.0
          %1957 = vmatpush1.msra.mxu0 0.0
          %1958 = vmatprep.subr.mxu0 0.0
          %1959 = vmatpush1.msra.mxu0 0.0
          %1960 = vmatprep.subr.mxu0 0.0
          %1961 = vmatpush1.msra.mxu0 0.0
          %1962 = vmatprep.subr.mxu0 0.0
          %1963 = vmatpush1.msra.mxu0 0.0
          %1964 = vmatprep.subr.mxu0 0.0
          %1965 = vmatpush1.msra.mxu0 0.0
          %1966 = vmatprep.subr.mxu0 0.0
          %1967 = vmatpush1.msra.mxu0 0.0
          %1968 = vmatprep.subr.mxu0 0.0
          %1969 = vmatpush1.msra.mxu0 0.0
          %1970 = vmatprep.subr.mxu0 0.0
          %1971 = vmatpush1.msra.mxu0 0.0
          %1972 = vmatprep.subr.mxu0 0.0
          %1973 = vmatpush1.msra.mxu0 0.0
          %1974 = vmatprep.subr.mxu0 0.0
          %1975 = vmatpush1.msra.mxu0 0.0
          %1976 = vmatprep.subr.mxu0 0.0
          %1977 = vmatpush1.msra.mxu0 0.0
          %1978 = vmatprep.subr.mxu0 0.0
          %1979 = vmatpush1.msra.mxu0 0.0
          %1980 = vmatprep.subr.mxu0 0.0
          %1981 = vmatpush1.msra.mxu0 0.0
          %1982 = vmatprep.subr.mxu0 0.0
          %1983 = vmatpush1.msra.mxu0 0.0
          %1984 = vmatprep.mubr.f32.mxu0 0.0
          %1985 = vmatmul.mubr.f32.gmra.mrb[0].mxu0 %v1915
          %v1986 = vpop.f32.mrb[0].mxu0
          %v1987 = vadd.f32 0.0, %v1986
          %v1988 = vpop.f32.mrb[0].mxu0
          %1989 = vmatprep.mubr.f32.mxu0 0.0
          %1990 = vmatmul.mubr.f32.gmra.mrb[0].mxu0 %v1918
          %v1991 = vpop.f32.mrb[0].mxu0
          %v1992 = vadd.f32 0.0, %v1991
          %v1993 = vpop.f32.mrb[0].mxu0
          %1994 = vdwg.mxu0
          %v1996 = vsel %vm1913, %v1017, 0
          %v1999 = vsel %vm1913, %v1018, 0
          %2001 = vmatprep.subr.mxu0 0.0
          %2002 = vmatpush1.msra.mxu0 %v157
          %2003 = vmatprep.subr.mxu0 0.0
          %2004 = vmatpush1.msra.mxu0 %v158
          %2005 = vmatprep.subr.mxu0 0.0
          %2006 = vmatpush1.msra.mxu0 0.0
          %2007 = vmatprep.subr.mxu0 0.0
          %2008 = vmatpush1.msra.mxu0 0.0
          %2009 = vmatprep.subr.mxu0 0.0
          %2010 = vmatpush1.msra.mxu0 0.0
          %2011 = vmatprep.subr.mxu0 0.0
          %2012 = vmatpush1.msra.mxu0 0.0
          %2013 = vmatprep.subr.mxu0 0.0
          %2014 = vmatpush1.msra.mxu0 0.0
          %2015 = vmatprep.subr.mxu0 0.0
          %2016 = vmatpush1.msra.mxu0 0.0
          %2017 = vmatprep.subr.mxu0 0.0
          %2018 = vmatpush1.msra.mxu0 0.0
          %2019 = vmatprep.subr.mxu0 0.0
          %2020 = vmatpush1.msra.mxu0 0.0
          %2021 = vmatprep.subr.mxu0 0.0
          %2022 = vmatpush1.msra.mxu0 0.0
          %2023 = vmatprep.subr.mxu0 0.0
          %2024 = vmatpush1.msra.mxu0 0.0
          %2025 = vmatprep.subr.mxu0 0.0
          %2026 = vmatpush1.msra.mxu0 0.0
          %2027 = vmatprep.subr.mxu0 0.0
          %2028 = vmatpush1.msra.mxu0 0.0
          %2029 = vmatprep.subr.mxu0 0.0
          %2030 = vmatpush1.msra.mxu0 0.0
          %2031 = vmatprep.subr.mxu0 0.0
          %2032 = vmatpush1.msra.mxu0 0.0
          %2033 = vmatprep.subr.mxu0 0.0
          %2034 = vmatpush1.msra.mxu0 0.0
          %2035 = vmatprep.subr.mxu0 0.0
          %2036 = vmatpush1.msra.mxu0 0.0
          %2037 = vmatprep.subr.mxu0 0.0
          %2038 = vmatpush1.msra.mxu0 0.0
          %2039 = vmatprep.subr.mxu0 0.0
          %2040 = vmatpush1.msra.mxu0 0.0
          %2041 = vmatprep.subr.mxu0 0.0
          %2042 = vmatpush1.msra.mxu0 0.0
          %2043 = vmatprep.subr.mxu0 0.0
          %2044 = vmatpush1.msra.mxu0 0.0
          %2045 = vmatprep.subr.mxu0 0.0
          %2046 = vmatpush1.msra.mxu0 0.0
          %2047 = vmatprep.subr.mxu0 0.0
          %2048 = vmatpush1.msra.mxu0 0.0
          %2049 = vmatprep.subr.mxu0 0.0
          %2050 = vmatpush1.msra.mxu0 0.0
          %2051 = vmatprep.subr.mxu0 0.0
          %2052 = vmatpush1.msra.mxu0 0.0
          %2053 = vmatprep.subr.mxu0 0.0
          %2054 = vmatpush1.msra.mxu0 0.0
          %2055 = vmatprep.subr.mxu0 0.0
          %2056 = vmatpush1.msra.mxu0 0.0
          %2057 = vmatprep.subr.mxu0 0.0
          %2058 = vmatpush1.msra.mxu0 0.0
          %2059 = vmatprep.subr.mxu0 0.0
          %2060 = vmatpush1.msra.mxu0 0.0
          %2061 = vmatprep.subr.mxu0 0.0
          %2062 = vmatpush1.msra.mxu0 0.0
          %2063 = vmatprep.subr.mxu0 0.0
          %2064 = vmatpush1.msra.mxu0 0.0
          %2065 = vmatprep.mubr.f32.mxu0 0.0
          %2066 = vmatmul.mubr.f32.gmra.mrb[0].mxu0 %v1996
          %v2067 = vpop.f32.mrb[0].mxu0
          %v2068 = vadd.f32 0.0, %v2067
          %v2069 = vpop.f32.mrb[0].mxu0
          %2070 = vmatprep.mubr.f32.mxu0 0.0
          %2071 = vmatmul.mubr.f32.gmra.mrb[0].mxu0 %v1999
          %v2072 = vpop.f32.mrb[0].mxu0
          %v2073 = vadd.f32 0.0, %v2072
          %v2074 = vpop.f32.mrb[0].mxu0
          %2075 = vdwg.mxu0
          %v2077 = vsel %vm1913, %v1019, 0
          %v2080 = vsel %vm1913, %v1020, 0
          %2082 = vmatprep.subr.mxu0 0.0
          %2083 = vmatpush1.msra.mxu0 %v157
          %2084 = vmatprep.subr.mxu0 0.0
          %2085 = vmatpush1.msra.mxu0 %v158
          %2086 = vmatprep.subr.mxu0 0.0
          %2087 = vmatpush1.msra.mxu0 0.0
          %2088 = vmatprep.subr.mxu0 0.0
          %2089 = vmatpush1.msra.mxu0 0.0
          %2090 = vmatprep.subr.mxu0 0.0
          %2091 = vmatpush1.msra.mxu0 0.0
          %2092 = vmatprep.subr.mxu0 0.0
          %2093 = vmatpush1.msra.mxu0 0.0
          %2094 = vmatprep.subr.mxu0 0.0
          %2095 = vmatpush1.msra.mxu0 0.0
          %2096 = vmatprep.subr.mxu0 0.0
          %2097 = vmatpush1.msra.mxu0 0.0
          %2098 = vmatprep.subr.mxu0 0.0
          %2099 = vmatpush1.msra.mxu0 0.0
          %2100 = vmatprep.subr.mxu0 0.0
          %2101 = vmatpush1.msra.mxu0 0.0
          %2102 = vmatprep.subr.mxu0 0.0
          %2103 = vmatpush1.msra.mxu0 0.0
          %2104 = vmatprep.subr.mxu0 0.0
          %2105 = vmatpush1.msra.mxu0 0.0
          %2106 = vmatprep.subr.mxu0 0.0
          %2107 = vmatpush1.msra.mxu0 0.0
          %2108 = vmatprep.subr.mxu0 0.0
          %2109 = vmatpush1.msra.mxu0 0.0
          %2110 = vmatprep.subr.mxu0 0.0
          %2111 = vmatpush1.msra.mxu0 0.0
          %2112 = vmatprep.subr.mxu0 0.0
          %2113 = vmatpush1.msra.mxu0 0.0
          %2114 = vmatprep.subr.mxu0 0.0
          %2115 = vmatpush1.msra.mxu0 0.0
          %2116 = vmatprep.subr.mxu0 0.0
          %2117 = vmatpush1.msra.mxu0 0.0
          %2118 = vmatprep.subr.mxu0 0.0
          %2119 = vmatpush1.msra.mxu0 0.0
          %2120 = vmatprep.subr.mxu0 0.0
          %2121 = vmatpush1.msra.mxu0 0.0
          %2122 = vmatprep.subr.mxu0 0.0
          %2123 = vmatpush1.msra.mxu0 0.0
          %2124 = vmatprep.subr.mxu0 0.0
          %2125 = vmatpush1.msra.mxu0 0.0
          %2126 = vmatprep.subr.mxu0 0.0
          %2127 = vmatpush1.msra.mxu0 0.0
          %2128 = vmatprep.subr.mxu0 0.0
          %2129 = vmatpush1.msra.mxu0 0.0
          %2130 = vmatprep.subr.mxu0 0.0
          %2131 = vmatpush1.msra.mxu0 0.0
          %2132 = vmatprep.subr.mxu0 0.0
          %2133 = vmatpush1.msra.mxu0 0.0
          %2134 = vmatprep.subr.mxu0 0.0
          %2135 = vmatpush1.msra.mxu0 0.0
          %2136 = vmatprep.subr.mxu0 0.0
          %2137 = vmatpush1.msra.mxu0 0.0
          %2138 = vmatprep.subr.mxu0 0.0
          %2139 = vmatpush1.msra.mxu0 0.0
          %2140 = vmatprep.subr.mxu0 0.0
          %2141 = vmatpush1.msra.mxu0 0.0
          %2142 = vmatprep.subr.mxu0 0.0
          %2143 = vmatpush1.msra.mxu0 0.0
          %2144 = vmatprep.subr.mxu0 0.0
          %2145 = vmatpush1.msra.mxu0 0.0
          %2146 = vmatprep.mubr.f32.mxu0 0.0
          %2147 = vmatmul.mubr.f32.gmra.mrb[0].mxu0 %v2077
          %v2148 = vpop.f32.mrb[0].mxu0
          %v2149 = vadd.f32 0.0, %v2148
          %v2150 = vpop.f32.mrb[0].mxu0
          %2151 = vmatprep.mubr.f32.mxu0 0.0
          %2152 = vmatmul.mubr.f32.gmra.mrb[0].mxu0 %v2080
          %v2153 = vpop.f32.mrb[0].mxu0
          %v2154 = vadd.f32 0.0, %v2153
          %v2155 = vpop.f32.mrb[0].mxu0
          %2156 = vdwg.mxu0
          %v2158 = vsel %vm1913, %v1021, 0
          %v2161 = vsel %vm1913, %v1022, 0
          %2163 = vmatprep.subr.mxu0 0.0
          %2164 = vmatpush1.msra.mxu0 %v157
          %2165 = vmatprep.subr.mxu0 0.0
          %2166 = vmatpush1.msra.mxu0 %v158
          %2167 = vmatprep.subr.mxu0 0.0
          %2168 = vmatpush1.msra.mxu0 0.0
          %2169 = vmatprep.subr.mxu0 0.0
          %2170 = vmatpush1.msra.mxu0 0.0
          %2171 = vmatprep.subr.mxu0 0.0
          %2172 = vmatpush1.msra.mxu0 0.0
          %2173 = vmatprep.subr.mxu0 0.0
          %2174 = vmatpush1.msra.mxu0 0.0
          %2175 = vmatprep.subr.mxu0 0.0
          %2176 = vmatpush1.msra.mxu0 0.0
          %2177 = vmatprep.subr.mxu0 0.0
          %2178 = vmatpush1.msra.mxu0 0.0
          %2179 = vmatprep.subr.mxu0 0.0
          %2180 = vmatpush1.msra.mxu0 0.0
          %2181 = vmatprep.subr.mxu0 0.0
          %2182 = vmatpush1.msra.mxu0 0.0
          %2183 = vmatprep.subr.mxu0 0.0
          %2184 = vmatpush1.msra.mxu0 0.0
          %2185 = vmatprep.subr.mxu0 0.0
          %2186 = vmatpush1.msra.mxu0 0.0
          %2187 = vmatprep.subr.mxu0 0.0
          %2188 = vmatpush1.msra.mxu0 0.0
          %2189 = vmatprep.subr.mxu0 0.0
          %2190 = vmatpush1.msra.mxu0 0.0
          %2191 = vmatprep.subr.mxu0 0.0
          %2192 = vmatpush1.msra.mxu0 0.0
          %2193 = vmatprep.subr.mxu0 0.0
          %2194 = vmatpush1.msra.mxu0 0.0
          %2195 = vmatprep.subr.mxu0 0.0
          %2196 = vmatpush1.msra.mxu0 0.0
          %2197 = vmatprep.subr.mxu0 0.0
          %2198 = vmatpush1.msra.mxu0 0.0
          %2199 = vmatprep.subr.mxu0 0.0
          %2200 = vmatpush1.msra.mxu0 0.0
          %2201 = vmatprep.subr.mxu0 0.0
          %2202 = vmatpush1.msra.mxu0 0.0
          %2203 = vmatprep.subr.mxu0 0.0
          %2204 = vmatpush1.msra.mxu0 0.0
          %2205 = vmatprep.subr.mxu0 0.0
          %2206 = vmatpush1.msra.mxu0 0.0
          %2207 = vmatprep.subr.mxu0 0.0
          %2208 = vmatpush1.msra.mxu0 0.0
          %2209 = vmatprep.subr.mxu0 0.0
          %2210 = vmatpush1.msra.mxu0 0.0
          %2211 = vmatprep.subr.mxu0 0.0
          %2212 = vmatpush1.msra.mxu0 0.0
          %2213 = vmatprep.subr.mxu0 0.0
          %2214 = vmatpush1.msra.mxu0 0.0
          %2215 = vmatprep.subr.mxu0 0.0
          %2216 = vmatpush1.msra.mxu0 0.0
          %2217 = vmatprep.subr.mxu0 0.0
          %2218 = vmatpush1.msra.mxu0 0.0
          %2219 = vmatprep.subr.mxu0 0.0
          %2220 = vmatpush1.msra.mxu0 0.0
          %2221 = vmatprep.subr.mxu0 0.0
          %2222 = vmatpush1.msra.mxu0 0.0
          %2223 = vmatprep.subr.mxu0 0.0
          %2224 = vmatpush1.msra.mxu0 0.0
          %2225 = vmatprep.subr.mxu0 0.0
          %2226 = vmatpush1.msra.mxu0 0.0
          %2227 = vmatprep.mubr.f32.mxu0 0.0
          %2228 = vmatmul.mubr.f32.gmra.mrb[0].mxu0 %v2158
          %v2229 = vpop.f32.mrb[0].mxu0
          %v2230 = vadd.f32 0.0, %v2229
          %v2231 = vpop.f32.mrb[0].mxu0
          %2232 = vmatprep.mubr.f32.mxu0 0.0
          %2233 = vmatmul.mubr.f32.gmra.mrb[0].mxu0 %v2161
          %v2234 = vpop.f32.mrb[0].mxu0
          %v2235 = vadd.f32 0.0, %v2234
          %v2236 = vpop.f32.mrb[0].mxu0
          %2237 = vdwg.mxu0
          %v2239 = vsel %vm1913, %v1023, 0
          %v2242 = vsel %vm1913, %v1024, 0
          %2244 = vmatprep.subr.mxu0 0.0
          %2245 = vmatpush1.msra.mxu0 %v157
          %2246 = vmatprep.subr.mxu0 0.0
          %2247 = vmatpush1.msra.mxu0 %v158
          %2248 = vmatprep.subr.mxu0 0.0
          %2249 = vmatpush1.msra.mxu0 0.0
          %2250 = vmatprep.subr.mxu0 0.0
          %2251 = vmatpush1.msra.mxu0 0.0
          %2252 = vmatprep.subr.mxu0 0.0
          %2253 = vmatpush1.msra.mxu0 0.0
          %2254 = vmatprep.subr.mxu0 0.0
          %2255 = vmatpush1.msra.mxu0 0.0
          %2256 = vmatprep.subr.mxu0 0.0
          %2257 = vmatpush1.msra.mxu0 0.0
          %2258 = vmatprep.subr.mxu0 0.0
          %2259 = vmatpush1.msra.mxu0 0.0
          %2260 = vmatprep.subr.mxu0 0.0
          %2261 = vmatpush1.msra.mxu0 0.0
          %2262 = vmatprep.subr.mxu0 0.0
          %2263 = vmatpush1.msra.mxu0 0.0
          %2264 = vmatprep.subr.mxu0 0.0
          %2265 = vmatpush1.msra.mxu0 0.0
          %2266 = vmatprep.subr.mxu0 0.0
          %2267 = vmatpush1.msra.mxu0 0.0
          %2268 = vmatprep.subr.mxu0 0.0
          %2269 = vmatpush1.msra.mxu0 0.0
          %2270 = vmatprep.subr.mxu0 0.0
          %2271 = vmatpush1.msra.mxu0 0.0
          %2272 = vmatprep.subr.mxu0 0.0
          %2273 = vmatpush1.msra.mxu0 0.0
          %2274 = vmatprep.subr.mxu0 0.0
          %2275 = vmatpush1.msra.mxu0 0.0
          %2276 = vmatprep.subr.mxu0 0.0
          %2277 = vmatpush1.msra.mxu0 0.0
          %2278 = vmatprep.subr.mxu0 0.0
          %2279 = vmatpush1.msra.mxu0 0.0
          %2280 = vmatprep.subr.mxu0 0.0
          %2281 = vmatpush1.msra.mxu0 0.0
          %2282 = vmatprep.subr.mxu0 0.0
          %2283 = vmatpush1.msra.mxu0 0.0
          %2284 = vmatprep.subr.mxu0 0.0
          %2285 = vmatpush1.msra.mxu0 0.0
          %2286 = vmatprep.subr.mxu0 0.0
          %2287 = vmatpush1.msra.mxu0 0.0
          %2288 = vmatprep.subr.mxu0 0.0
          %2289 = vmatpush1.msra.mxu0 0.0
          %2290 = vmatprep.subr.mxu0 0.0
          %2291 = vmatpush1.msra.mxu0 0.0
          %2292 = vmatprep.subr.mxu0 0.0
          %2293 = vmatpush1.msra.mxu0 0.0
          %2294 = vmatprep.subr.mxu0 0.0
          %2295 = vmatpush1.msra.mxu0 0.0
          %2296 = vmatprep.subr.mxu0 0.0
          %2297 = vmatpush1.msra.mxu0 0.0
          %2298 = vmatprep.subr.mxu0 0.0
          %2299 = vmatpush1.msra.mxu0 0.0
          %2300 = vmatprep.subr.mxu0 0.0
          %2301 = vmatpush1.msra.mxu0 0.0
          %2302 = vmatprep.subr.mxu0 0.0
          %2303 = vmatpush1.msra.mxu0 0.0
          %2304 = vmatprep.subr.mxu0 0.0
          %2305 = vmatpush1.msra.mxu0 0.0
          %2306 = vmatprep.subr.mxu0 0.0
          %2307 = vmatpush1.msra.mxu0 0.0
          %2308 = vmatprep.mubr.f32.mxu0 0.0
          %2309 = vmatmul.mubr.f32.gmra.mrb[0].mxu0 %v2239
          %v2310 = vpop.f32.mrb[0].mxu0
          %v2311 = vadd.f32 0.0, %v2310
          %v2312 = vpop.f32.mrb[0].mxu0
          %2313 = vmatprep.mubr.f32.mxu0 0.0
          %2314 = vmatmul.mubr.f32.gmra.mrb[0].mxu0 %v2242
          %v2315 = vpop.f32.mrb[0].mxu0
          %v2316 = vadd.f32 0.0, %v2315
          %v2317 = vpop.f32.mrb[0].mxu0
          %2318 = vdwg.mxu0
          %v2320 = vsel %vm1913, %v1025, 0
          %v2323 = vsel %vm1913, %v1026, 0
          %2325 = vmatprep.subr.mxu0 0.0
          %2326 = vmatpush1.msra.mxu0 %v157
          %2327 = vmatprep.subr.mxu0 0.0
          %2328 = vmatpush1.msra.mxu0 %v158
          %2329 = vmatprep.subr.mxu0 0.0
          %2330 = vmatpush1.msra.mxu0 0.0
          %2331 = vmatprep.subr.mxu0 0.0
          %2332 = vmatpush1.msra.mxu0 0.0
          %2333 = vmatprep.subr.mxu0 0.0
          %2334 = vmatpush1.msra.mxu0 0.0
          %2335 = vmatprep.subr.mxu0 0.0
          %2336 = vmatpush1.msra.mxu0 0.0
          %2337 = vmatprep.subr.mxu0 0.0
          %2338 = vmatpush1.msra.mxu0 0.0
          %2339 = vmatprep.subr.mxu0 0.0
          %2340 = vmatpush1.msra.mxu0 0.0
          %2341 = vmatprep.subr.mxu0 0.0
          %2342 = vmatpush1.msra.mxu0 0.0
          %2343 = vmatprep.subr.mxu0 0.0
          %2344 = vmatpush1.msra.mxu0 0.0
          %2345 = vmatprep.subr.mxu0 0.0
          %2346 = vmatpush1.msra.mxu0 0.0
          %2347 = vmatprep.subr.mxu0 0.0
          %2348 = vmatpush1.msra.mxu0 0.0
          %2349 = vmatprep.subr.mxu0 0.0
          %2350 = vmatpush1.msra.mxu0 0.0
          %2351 = vmatprep.subr.mxu0 0.0
          %2352 = vmatpush1.msra.mxu0 0.0
          %2353 = vmatprep.subr.mxu0 0.0
          %2354 = vmatpush1.msra.mxu0 0.0
          %2355 = vmatprep.subr.mxu0 0.0
          %2356 = vmatpush1.msra.mxu0 0.0
          %2357 = vmatprep.subr.mxu0 0.0
          %2358 = vmatpush1.msra.mxu0 0.0
          %2359 = vmatprep.subr.mxu0 0.0
          %2360 = vmatpush1.msra.mxu0 0.0
          %2361 = vmatprep.subr.mxu0 0.0
          %2362 = vmatpush1.msra.mxu0 0.0
          %2363 = vmatprep.subr.mxu0 0.0
          %2364 = vmatpush1.msra.mxu0 0.0
          %2365 = vmatprep.subr.mxu0 0.0
          %2366 = vmatpush1.msra.mxu0 0.0
          %2367 = vmatprep.subr.mxu0 0.0
          %2368 = vmatpush1.msra.mxu0 0.0
          %2369 = vmatprep.subr.mxu0 0.0
          %2370 = vmatpush1.msra.mxu0 0.0
          %2371 = vmatprep.subr.mxu0 0.0
          %2372 = vmatpush1.msra.mxu0 0.0
          %2373 = vmatprep.subr.mxu0 0.0
          %2374 = vmatpush1.msra.mxu0 0.0
          %2375 = vmatprep.subr.mxu0 0.0
          %2376 = vmatpush1.msra.mxu0 0.0
          %2377 = vmatprep.subr.mxu0 0.0
          %2378 = vmatpush1.msra.mxu0 0.0
          %2379 = vmatprep.subr.mxu0 0.0
          %2380 = vmatpush1.msra.mxu0 0.0
          %2381 = vmatprep.subr.mxu0 0.0
          %2382 = vmatpush1.msra.mxu0 0.0
          %2383 = vmatprep.subr.mxu0 0.0
          %2384 = vmatpush1.msra.mxu0 0.0
          %2385 = vmatprep.subr.mxu0 0.0
          %2386 = vmatpush1.msra.mxu0 0.0
          %2387 = vmatprep.subr.mxu0 0.0
          %2388 = vmatpush1.msra.mxu0 0.0
          %2389 = vmatprep.mubr.f32.mxu0 0.0
          %2390 = vmatmul.mubr.f32.gmra.mrb[0].mxu0 %v2320
          %v2391 = vpop.f32.mrb[0].mxu0
          %v2392 = vadd.f32 0.0, %v2391
          %v2393 = vpop.f32.mrb[0].mxu0
          %2394 = vmatprep.mubr.f32.mxu0 0.0
          %2395 = vmatmul.mubr.f32.gmra.mrb[0].mxu0 %v2323
          %v2396 = vpop.f32.mrb[0].mxu0
          %v2397 = vadd.f32 0.0, %v2396
          %v2398 = vpop.f32.mrb[0].mxu0
          %2399 = vdwg.mxu0
          %v2401 = vsel %vm1913, %v1027, 0
          %v2404 = vsel %vm1913, %v1028, 0
          %2406 = vmatprep.subr.mxu0 0.0
          %2407 = vmatpush1.msra.mxu0 %v157
          %2408 = vmatprep.subr.mxu0 0.0
          %2409 = vmatpush1.msra.mxu0 %v158
          %2410 = vmatprep.subr.mxu0 0.0
          %2411 = vmatpush1.msra.mxu0 0.0
          %2412 = vmatprep.subr.mxu0 0.0
          %2413 = vmatpush1.msra.mxu0 0.0
          %2414 = vmatprep.subr.mxu0 0.0
          %2415 = vmatpush1.msra.mxu0 0.0
          %2416 = vmatprep.subr.mxu0 0.0
          %2417 = vmatpush1.msra.mxu0 0.0
          %2418 = vmatprep.subr.mxu0 0.0
          %2419 = vmatpush1.msra.mxu0 0.0
          %2420 = vmatprep.subr.mxu0 0.0
          %2421 = vmatpush1.msra.mxu0 0.0
          %2422 = vmatprep.subr.mxu0 0.0
          %2423 = vmatpush1.msra.mxu0 0.0
          %2424 = vmatprep.subr.mxu0 0.0
          %2425 = vmatpush1.msra.mxu0 0.0
          %2426 = vmatprep.subr.mxu0 0.0
          %2427 = vmatpush1.msra.mxu0 0.0
          %2428 = vmatprep.subr.mxu0 0.0
          %2429 = vmatpush1.msra.mxu0 0.0
          %2430 = vmatprep.subr.mxu0 0.0
          %2431 = vmatpush1.msra.mxu0 0.0
          %2432 = vmatprep.subr.mxu0 0.0
          %2433 = vmatpush1.msra.mxu0 0.0
          %2434 = vmatprep.subr.mxu0 0.0
          %2435 = vmatpush1.msra.mxu0 0.0
          %2436 = vmatprep.subr.mxu0 0.0
          %2437 = vmatpush1.msra.mxu0 0.0
          %2438 = vmatprep.subr.mxu0 0.0
          %2439 = vmatpush1.msra.mxu0 0.0
          %2440 = vmatprep.subr.mxu0 0.0
          %2441 = vmatpush1.msra.mxu0 0.0
          %2442 = vmatprep.subr.mxu0 0.0
          %2443 = vmatpush1.msra.mxu0 0.0
          %2444 = vmatprep.subr.mxu0 0.0
          %2445 = vmatpush1.msra.mxu0 0.0
          %2446 = vmatprep.subr.mxu0 0.0
          %2447 = vmatpush1.msra.mxu0 0.0
          %2448 = vmatprep.subr.mxu0 0.0
          %2449 = vmatpush1.msra.mxu0 0.0
          %2450 = vmatprep.subr.mxu0 0.0
          %2451 = vmatpush1.msra.mxu0 0.0
          %2452 = vmatprep.subr.mxu0 0.0
          %2453 = vmatpush1.msra.mxu0 0.0
          %2454 = vmatprep.subr.mxu0 0.0
          %2455 = vmatpush1.msra.mxu0 0.0
          %2456 = vmatprep.subr.mxu0 0.0
          %2457 = vmatpush1.msra.mxu0 0.0
          %2458 = vmatprep.subr.mxu0 0.0
          %2459 = vmatpush1.msra.mxu0 0.0
          %2460 = vmatprep.subr.mxu0 0.0
          %2461 = vmatpush1.msra.mxu0 0.0
          %2462 = vmatprep.subr.mxu0 0.0
          %2463 = vmatpush1.msra.mxu0 0.0
          %2464 = vmatprep.subr.mxu0 0.0
          %2465 = vmatpush1.msra.mxu0 0.0
          %2466 = vmatprep.subr.mxu0 0.0
          %2467 = vmatpush1.msra.mxu0 0.0
          %2468 = vmatprep.subr.mxu0 0.0
          %2469 = vmatpush1.msra.mxu0 0.0
          %2470 = vmatprep.mubr.f32.mxu0 0.0
          %2471 = vmatmul.mubr.f32.gmra.mrb[0].mxu0 %v2401
          %v2472 = vpop.f32.mrb[0].mxu0
          %v2473 = vadd.f32 0.0, %v2472
          %v2474 = vpop.f32.mrb[0].mxu0
          %2475 = vmatprep.mubr.f32.mxu0 0.0
          %2476 = vmatmul.mubr.f32.gmra.mrb[0].mxu0 %v2404
          %v2477 = vpop.f32.mrb[0].mxu0
          %v2478 = vadd.f32 0.0, %v2477
          %v2479 = vpop.f32.mrb[0].mxu0
          %2480 = vdwg.mxu0
          %v2482 = vsel %vm1913, %v1029, 0
          %v2485 = vsel %vm1913, %v1030, 0
          %2487 = vmatprep.subr.mxu0 0.0
          %2488 = vmatpush1.msra.mxu0 %v157
          %2489 = vmatprep.subr.mxu0 0.0
          %2490 = vmatpush1.msra.mxu0 %v158
          %2491 = vmatprep.subr.mxu0 0.0
          %2492 = vmatpush1.msra.mxu0 0.0
          %2493 = vmatprep.subr.mxu0 0.0
          %2494 = vmatpush1.msra.mxu0 0.0
          %2495 = vmatprep.subr.mxu0 0.0
          %2496 = vmatpush1.msra.mxu0 0.0
          %2497 = vmatprep.subr.mxu0 0.0
          %2498 = vmatpush1.msra.mxu0 0.0
          %2499 = vmatprep.subr.mxu0 0.0
          %2500 = vmatpush1.msra.mxu0 0.0
          %2501 = vmatprep.subr.mxu0 0.0
          %2502 = vmatpush1.msra.mxu0 0.0
          %2503 = vmatprep.subr.mxu0 0.0
          %2504 = vmatpush1.msra.mxu0 0.0
          %2505 = vmatprep.subr.mxu0 0.0
          %2506 = vmatpush1.msra.mxu0 0.0
          %2507 = vmatprep.subr.mxu0 0.0
          %2508 = vmatpush1.msra.mxu0 0.0
          %2509 = vmatprep.subr.mxu0 0.0
          %2510 = vmatpush1.msra.mxu0 0.0
          %2511 = vmatprep.subr.mxu0 0.0
          %2512 = vmatpush1.msra.mxu0 0.0
          %2513 = vmatprep.subr.mxu0 0.0
          %2514 = vmatpush1.msra.mxu0 0.0
          %2515 = vmatprep.subr.mxu0 0.0
          %2516 = vmatpush1.msra.mxu0 0.0
          %2517 = vmatprep.subr.mxu0 0.0
          %2518 = vmatpush1.msra.mxu0 0.0
          %2519 = vmatprep.subr.mxu0 0.0
          %2520 = vmatpush1.msra.mxu0 0.0
          %2521 = vmatprep.subr.mxu0 0.0
          %2522 = vmatpush1.msra.mxu0 0.0
          %2523 = vmatprep.subr.mxu0 0.0
          %2524 = vmatpush1.msra.mxu0 0.0
          %2525 = vmatprep.subr.mxu0 0.0
          %2526 = vmatpush1.msra.mxu0 0.0
          %2527 = vmatprep.subr.mxu0 0.0
          %2528 = vmatpush1.msra.mxu0 0.0
          %2529 = vmatprep.subr.mxu0 0.0
          %2530 = vmatpush1.msra.mxu0 0.0
          %2531 = vmatprep.subr.mxu0 0.0
          %2532 = vmatpush1.msra.mxu0 0.0
          %2533 = vmatprep.subr.mxu0 0.0
          %2534 = vmatpush1.msra.mxu0 0.0
          %2535 = vmatprep.subr.mxu0 0.0
          %2536 = vmatpush1.msra.mxu0 0.0
          %2537 = vmatprep.subr.mxu0 0.0
          %2538 = vmatpush1.msra.mxu0 0.0
          %2539 = vmatprep.subr.mxu0 0.0
          %2540 = vmatpush1.msra.mxu0 0.0
          %2541 = vmatprep.subr.mxu0 0.0
          %2542 = vmatpush1.msra.mxu0 0.0
          %2543 = vmatprep.subr.mxu0 0.0
          %2544 = vmatpush1.msra.mxu0 0.0
          %2545 = vmatprep.subr.mxu0 0.0
          %2546 = vmatpush1.msra.mxu0 0.0
          %2547 = vmatprep.subr.mxu0 0.0
          %2548 = vmatpush1.msra.mxu0 0.0
          %2549 = vmatprep.subr.mxu0 0.0
          %2550 = vmatpush1.msra.mxu0 0.0
          %2551 = vmatprep.mubr.f32.mxu0 0.0
          %2552 = vmatmul.mubr.f32.gmra.mrb[0].mxu0 %v2482
          %v2553 = vpop.f32.mrb[0].mxu0
          %v2554 = vadd.f32 0.0, %v2553
          %v2555 = vpop.f32.mrb[0].mxu0
          %2556 = vmatprep.mubr.f32.mxu0 0.0
          %2557 = vmatmul.mubr.f32.gmra.mrb[0].mxu0 %v2485
          %v2558 = vpop.f32.mrb[0].mxu0
          %v2559 = vadd.f32 0.0, %v2558
          %v2560 = vpop.f32.mrb[0].mxu0
          %2561 = vdwg.mxu0
          %v2563 = vsel %vm1913, %v1031, 0
          %v2566 = vsel %vm1913, %v1032, 0
          %2568 = vmatprep.subr.mxu0 0.0
          %2569 = vmatpush1.msra.mxu0 %v157
          %2570 = vmatprep.subr.mxu0 0.0
          %2571 = vmatpush1.msra.mxu0 %v158
          %2572 = vmatprep.subr.mxu0 0.0
          %2573 = vmatpush1.msra.mxu0 0.0
          %2574 = vmatprep.subr.mxu0 0.0
          %2575 = vmatpush1.msra.mxu0 0.0
          %2576 = vmatprep.subr.mxu0 0.0
          %2577 = vmatpush1.msra.mxu0 0.0
          %2578 = vmatprep.subr.mxu0 0.0
          %2579 = vmatpush1.msra.mxu0 0.0
          %2580 = vmatprep.subr.mxu0 0.0
          %2581 = vmatpush1.msra.mxu0 0.0
          %2582 = vmatprep.subr.mxu0 0.0
          %2583 = vmatpush1.msra.mxu0 0.0
          %2584 = vmatprep.subr.mxu0 0.0
          %2585 = vmatpush1.msra.mxu0 0.0
          %2586 = vmatprep.subr.mxu0 0.0
          %2587 = vmatpush1.msra.mxu0 0.0
          %2588 = vmatprep.subr.mxu0 0.0
          %2589 = vmatpush1.msra.mxu0 0.0
          %2590 = vmatprep.subr.mxu0 0.0
          %2591 = vmatpush1.msra.mxu0 0.0
          %2592 = vmatprep.subr.mxu0 0.0
          %2593 = vmatpush1.msra.mxu0 0.0
          %2594 = vmatprep.subr.mxu0 0.0
          %2595 = vmatpush1.msra.mxu0 0.0
          %2596 = vmatprep.subr.mxu0 0.0
          %2597 = vmatpush1.msra.mxu0 0.0
          %2598 = vmatprep.subr.mxu0 0.0
          %2599 = vmatpush1.msra.mxu0 0.0
          %2600 = vmatprep.subr.mxu0 0.0
          %2601 = vmatpush1.msra.mxu0 0.0
          %2602 = vmatprep.subr.mxu0 0.0
          %2603 = vmatpush1.msra.mxu0 0.0
          %2604 = vmatprep.subr.mxu0 0.0
          %2605 = vmatpush1.msra.mxu0 0.0
          %2606 = vmatprep.subr.mxu0 0.0
          %2607 = vmatpush1.msra.mxu0 0.0
          %2608 = vmatprep.subr.mxu0 0.0
          %2609 = vmatpush1.msra.mxu0 0.0
          %2610 = vmatprep.subr.mxu0 0.0
          %2611 = vmatpush1.msra.mxu0 0.0
          %2612 = vmatprep.subr.mxu0 0.0
          %2613 = vmatpush1.msra.mxu0 0.0
          %2614 = vmatprep.subr.mxu0 0.0
          %2615 = vmatpush1.msra.mxu0 0.0
          %2616 = vmatprep.subr.mxu0 0.0
          %2617 = vmatpush1.msra.mxu0 0.0
          %2618 = vmatprep.subr.mxu0 0.0
          %2619 = vmatpush1.msra.mxu0 0.0
          %2620 = vmatprep.subr.mxu0 0.0
          %2621 = vmatpush1.msra.mxu0 0.0
          %2622 = vmatprep.subr.mxu0 0.0
          %2623 = vmatpush1.msra.mxu0 0.0
          %2624 = vmatprep.subr.mxu0 0.0
          %2625 = vmatpush1.msra.mxu0 0.0
          %2626 = vmatprep.subr.mxu0 0.0
          %2627 = vmatpush1.msra.mxu0 0.0
          %2628 = vmatprep.subr.mxu0 0.0
          %2629 = vmatpush1.msra.mxu0 0.0
          %2630 = vmatprep.subr.mxu0 0.0
          %2631 = vmatpush1.msra.mxu0 0.0
          %2632 = vmatprep.mubr.f32.mxu0 0.0
          %2633 = vmatmul.mubr.f32.gmra.mrb[0].mxu0 %v2563
          %v2634 = vpop.f32.mrb[0].mxu0
          %v2635 = vadd.f32 0.0, %v2634
          %v2636 = vpop.f32.mrb[0].mxu0
          %2637 = vmatprep.mubr.f32.mxu0 0.0
          %2638 = vmatmul.mubr.f32.gmra.mrb[0].mxu0 %v2566
          %v2639 = vpop.f32.mrb[0].mxu0
          %v2640 = vadd.f32 0.0, %v2639
          %v2641 = vpop.f32.mrb[0].mxu0
          %2642 = vdwg.mxu0
          %v2644 = vsel %vm1913, %v1033, 0
          %v2647 = vsel %vm1913, %v1034, 0
          %2649 = vmatprep.subr.mxu0 0.0
          %2650 = vmatpush1.msra.mxu0 %v157
          %2651 = vmatprep.subr.mxu0 0.0
          %2652 = vmatpush1.msra.mxu0 %v158
          %2653 = vmatprep.subr.mxu0 0.0
          %2654 = vmatpush1.msra.mxu0 0.0
          %2655 = vmatprep.subr.mxu0 0.0
          %2656 = vmatpush1.msra.mxu0 0.0
          %2657 = vmatprep.subr.mxu0 0.0
          %2658 = vmatpush1.msra.mxu0 0.0
          %2659 = vmatprep.subr.mxu0 0.0
          %2660 = vmatpush1.msra.mxu0 0.0
          %2661 = vmatprep.subr.mxu0 0.0
          %2662 = vmatpush1.msra.mxu0 0.0
          %2663 = vmatprep.subr.mxu0 0.0
          %2664 = vmatpush1.msra.mxu0 0.0
          %2665 = vmatprep.subr.mxu0 0.0
          %2666 = vmatpush1.msra.mxu0 0.0
          %2667 = vmatprep.subr.mxu0 0.0
          %2668 = vmatpush1.msra.mxu0 0.0
          %2669 = vmatprep.subr.mxu0 0.0
          %2670 = vmatpush1.msra.mxu0 0.0
          %2671 = vmatprep.subr.mxu0 0.0
          %2672 = vmatpush1.msra.mxu0 0.0
          %2673 = vmatprep.subr.mxu0 0.0
          %2674 = vmatpush1.msra.mxu0 0.0
          %2675 = vmatprep.subr.mxu0 0.0
          %2676 = vmatpush1.msra.mxu0 0.0
          %2677 = vmatprep.subr.mxu0 0.0
          %2678 = vmatpush1.msra.mxu0 0.0
          %2679 = vmatprep.subr.mxu0 0.0
          %2680 = vmatpush1.msra.mxu0 0.0
          %2681 = vmatprep.subr.mxu0 0.0
          %2682 = vmatpush1.msra.mxu0 0.0
          %2683 = vmatprep.subr.mxu0 0.0
          %2684 = vmatpush1.msra.mxu0 0.0
          %2685 = vmatprep.subr.mxu0 0.0
          %2686 = vmatpush1.msra.mxu0 0.0
          %2687 = vmatprep.subr.mxu0 0.0
          %2688 = vmatpush1.msra.mxu0 0.0
          %2689 = vmatprep.subr.mxu0 0.0
          %2690 = vmatpush1.msra.mxu0 0.0
          %2691 = vmatprep.subr.mxu0 0.0
          %2692 = vmatpush1.msra.mxu0 0.0
          %2693 = vmatprep.subr.mxu0 0.0
          %2694 = vmatpush1.msra.mxu0 0.0
          %2695 = vmatprep.subr.mxu0 0.0
          %2696 = vmatpush1.msra.mxu0 0.0
          %2697 = vmatprep.subr.mxu0 0.0
          %2698 = vmatpush1.msra.mxu0 0.0
          %2699 = vmatprep.subr.mxu0 0.0
          %2700 = vmatpush1.msra.mxu0 0.0
          %2701 = vmatprep.subr.mxu0 0.0
          %2702 = vmatpush1.msra.mxu0 0.0
          %2703 = vmatprep.subr.mxu0 0.0
          %2704 = vmatpush1.msra.mxu0 0.0
          %2705 = vmatprep.subr.mxu0 0.0
          %2706 = vmatpush1.msra.mxu0 0.0
          %2707 = vmatprep.subr.mxu0 0.0
          %2708 = vmatpush1.msra.mxu0 0.0
          %2709 = vmatprep.subr.mxu0 0.0
          %2710 = vmatpush1.msra.mxu0 0.0
          %2711 = vmatprep.subr.mxu0 0.0
          %2712 = vmatpush1.msra.mxu0 0.0
          %2713 = vmatprep.mubr.f32.mxu0 0.0
          %2714 = vmatmul.mubr.f32.gmra.mrb[0].mxu0 %v2644
          %v2715 = vpop.f32.mrb[0].mxu0
          %v2716 = vadd.f32 0.0, %v2715
          %v2717 = vpop.f32.mrb[0].mxu0
          %2718 = vmatprep.mubr.f32.mxu0 0.0
          %2719 = vmatmul.mubr.f32.gmra.mrb[0].mxu0 %v2647
          %v2720 = vpop.f32.mrb[0].mxu0
          %v2721 = vadd.f32 0.0, %v2720
          %v2722 = vpop.f32.mrb[0].mxu0
          %2723 = vdwg.mxu0
          %v2725 = vsel %vm1913, %v1035, 0
          %v2728 = vsel %vm1913, %v1036, 0
          %2730 = vmatprep.subr.mxu0 0.0
          %2731 = vmatpush1.msra.mxu0 %v157
          %2732 = vmatprep.subr.mxu0 0.0
          %2733 = vmatpush1.msra.mxu0 %v158
          %2734 = vmatprep.subr.mxu0 0.0
          %2735 = vmatpush1.msra.mxu0 0.0
          %2736 = vmatprep.subr.mxu0 0.0
          %2737 = vmatpush1.msra.mxu0 0.0
          %2738 = vmatprep.subr.mxu0 0.0
          %2739 = vmatpush1.msra.mxu0 0.0
          %2740 = vmatprep.subr.mxu0 0.0
          %2741 = vmatpush1.msra.mxu0 0.0
          %2742 = vmatprep.subr.mxu0 0.0
          %2743 = vmatpush1.msra.mxu0 0.0
          %2744 = vmatprep.subr.mxu0 0.0
          %2745 = vmatpush1.msra.mxu0 0.0
          %2746 = vmatprep.subr.mxu0 0.0
          %2747 = vmatpush1.msra.mxu0 0.0
          %2748 = vmatprep.subr.mxu0 0.0
          %2749 = vmatpush1.msra.mxu0 0.0
          %2750 = vmatprep.subr.mxu0 0.0
          %2751 = vmatpush1.msra.mxu0 0.0
          %2752 = vmatprep.subr.mxu0 0.0
          %2753 = vmatpush1.msra.mxu0 0.0
          %2754 = vmatprep.subr.mxu0 0.0
          %2755 = vmatpush1.msra.mxu0 0.0
          %2756 = vmatprep.subr.mxu0 0.0
          %2757 = vmatpush1.msra.mxu0 0.0
          %2758 = vmatprep.subr.mxu0 0.0
          %2759 = vmatpush1.msra.mxu0 0.0
          %2760 = vmatprep.subr.mxu0 0.0
          %2761 = vmatpush1.msra.mxu0 0.0
          %2762 = vmatprep.subr.mxu0 0.0
          %2763 = vmatpush1.msra.mxu0 0.0
          %2764 = vmatprep.subr.mxu0 0.0
          %2765 = vmatpush1.msra.mxu0 0.0
          %2766 = vmatprep.subr.mxu0 0.0
          %2767 = vmatpush1.msra.mxu0 0.0
          %2768 = vmatprep.subr.mxu0 0.0
          %2769 = vmatpush1.msra.mxu0 0.0
          %2770 = vmatprep.subr.mxu0 0.0
          %2771 = vmatpush1.msra.mxu0 0.0
          %2772 = vmatprep.subr.mxu0 0.0
          %2773 = vmatpush1.msra.mxu0 0.0
          %2774 = vmatprep.subr.mxu0 0.0
          %2775 = vmatpush1.msra.mxu0 0.0
          %2776 = vmatprep.subr.mxu0 0.0
          %2777 = vmatpush1.msra.mxu0 0.0
          %2778 = vmatprep.subr.mxu0 0.0
          %2779 = vmatpush1.msra.mxu0 0.0
          %2780 = vmatprep.subr.mxu0 0.0
          %2781 = vmatpush1.msra.mxu0 0.0
          %2782 = vmatprep.subr.mxu0 0.0
          %2783 = vmatpush1.msra.mxu0 0.0
          %2784 = vmatprep.subr.mxu0 0.0
          %2785 = vmatpush1.msra.mxu0 0.0
          %2786 = vmatprep.subr.mxu0 0.0
          %2787 = vmatpush1.msra.mxu0 0.0
          %2788 = vmatprep.subr.mxu0 0.0
          %2789 = vmatpush1.msra.mxu0 0.0
          %2790 = vmatprep.subr.mxu0 0.0
          %2791 = vmatpush1.msra.mxu0 0.0
          %2792 = vmatprep.subr.mxu0 0.0
          %2793 = vmatpush1.msra.mxu0 0.0
          %2794 = vmatprep.mubr.f32.mxu0 0.0
          %2795 = vmatmul.mubr.f32.gmra.mrb[0].mxu0 %v2725
          %v2796 = vpop.f32.mrb[0].mxu0
          %v2797 = vadd.f32 0.0, %v2796
          %v2798 = vpop.f32.mrb[0].mxu0
          %2799 = vmatprep.mubr.f32.mxu0 0.0
          %2800 = vmatmul.mubr.f32.gmra.mrb[0].mxu0 %v2728
          %v2801 = vpop.f32.mrb[0].mxu0
          %v2802 = vadd.f32 0.0, %v2801
          %v2803 = vpop.f32.mrb[0].mxu0
          %2804 = vdwg.mxu0
          %v2806 = vsel %vm1913, %v1037, 0
          %v2809 = vsel %vm1913, %v1038, 0
          %2811 = vmatprep.subr.mxu0 0.0
          %2812 = vmatpush1.msra.mxu0 %v157
          %2813 = vmatprep.subr.mxu0 0.0
          %2814 = vmatpush1.msra.mxu0 %v158
          %2815 = vmatprep.subr.mxu0 0.0
          %2816 = vmatpush1.msra.mxu0 0.0
          %2817 = vmatprep.subr.mxu0 0.0
          %2818 = vmatpush1.msra.mxu0 0.0
          %2819 = vmatprep.subr.mxu0 0.0
          %2820 = vmatpush1.msra.mxu0 0.0
          %2821 = vmatprep.subr.mxu0 0.0
          %2822 = vmatpush1.msra.mxu0 0.0
          %2823 = vmatprep.subr.mxu0 0.0
          %2824 = vmatpush1.msra.mxu0 0.0
          %2825 = vmatprep.subr.mxu0 0.0
          %2826 = vmatpush1.msra.mxu0 0.0
          %2827 = vmatprep.subr.mxu0 0.0
          %2828 = vmatpush1.msra.mxu0 0.0
          %2829 = vmatprep.subr.mxu0 0.0
          %2830 = vmatpush1.msra.mxu0 0.0
          %2831 = vmatprep.subr.mxu0 0.0
          %2832 = vmatpush1.msra.mxu0 0.0
          %2833 = vmatprep.subr.mxu0 0.0
          %2834 = vmatpush1.msra.mxu0 0.0
          %2835 = vmatprep.subr.mxu0 0.0
          %2836 = vmatpush1.msra.mxu0 0.0
          %2837 = vmatprep.subr.mxu0 0.0
          %2838 = vmatpush1.msra.mxu0 0.0
          %2839 = vmatprep.subr.mxu0 0.0
          %2840 = vmatpush1.msra.mxu0 0.0
          %2841 = vmatprep.subr.mxu0 0.0
          %2842 = vmatpush1.msra.mxu0 0.0
          %2843 = vmatprep.subr.mxu0 0.0
          %2844 = vmatpush1.msra.mxu0 0.0
          %2845 = vmatprep.subr.mxu0 0.0
          %2846 = vmatpush1.msra.mxu0 0.0
          %2847 = vmatprep.subr.mxu0 0.0
          %2848 = vmatpush1.msra.mxu0 0.0
          %2849 = vmatprep.subr.mxu0 0.0
          %2850 = vmatpush1.msra.mxu0 0.0
          %2851 = vmatprep.subr.mxu0 0.0
          %2852 = vmatpush1.msra.mxu0 0.0
          %2853 = vmatprep.subr.mxu0 0.0
          %2854 = vmatpush1.msra.mxu0 0.0
          %2855 = vmatprep.subr.mxu0 0.0
          %2856 = vmatpush1.msra.mxu0 0.0
          %2857 = vmatprep.subr.mxu0 0.0
          %2858 = vmatpush1.msra.mxu0 0.0
          %2859 = vmatprep.subr.mxu0 0.0
          %2860 = vmatpush1.msra.mxu0 0.0
          %2861 = vmatprep.subr.mxu0 0.0
          %2862 = vmatpush1.msra.mxu0 0.0
          %2863 = vmatprep.subr.mxu0 0.0
          %2864 = vmatpush1.msra.mxu0 0.0
          %2865 = vmatprep.subr.mxu0 0.0
          %2866 = vmatpush1.msra.mxu0 0.0
          %2867 = vmatprep.subr.mxu0 0.0
          %2868 = vmatpush1.msra.mxu0 0.0
          %2869 = vmatprep.subr.mxu0 0.0
          %2870 = vmatpush1.msra.mxu0 0.0
          %2871 = vmatprep.subr.mxu0 0.0
          %2872 = vmatpush1.msra.mxu0 0.0
          %2873 = vmatprep.subr.mxu0 0.0
          %2874 = vmatpush1.msra.mxu0 0.0
          %2875 = vmatprep.mubr.f32.mxu0 0.0
          %2876 = vmatmul.mubr.f32.gmra.mrb[0].mxu0 %v2806
          %v2877 = vpop.f32.mrb[0].mxu0
          %v2878 = vadd.f32 0.0, %v2877
          %v2879 = vpop.f32.mrb[0].mxu0
          %2880 = vmatprep.mubr.f32.mxu0 0.0
          %2881 = vmatmul.mubr.f32.gmra.mrb[0].mxu0 %v2809
          %v2882 = vpop.f32.mrb[0].mxu0
          %v2883 = vadd.f32 0.0, %v2882
          %v2884 = vpop.f32.mrb[0].mxu0
          %2885 = vdwg.mxu0
          %v2887 = vsel %vm1913, %v1039, 0
          %v2890 = vsel %vm1913, %v1040, 0
          %2892 = vmatprep.subr.mxu0 0.0
          %2893 = vmatpush1.msra.mxu0 %v157
          %2894 = vmatprep.subr.mxu0 0.0
          %2895 = vmatpush1.msra.mxu0 %v158
          %2896 = vmatprep.subr.mxu0 0.0
          %2897 = vmatpush1.msra.mxu0 0.0
          %2898 = vmatprep.subr.mxu0 0.0
          %2899 = vmatpush1.msra.mxu0 0.0
          %2900 = vmatprep.subr.mxu0 0.0
          %2901 = vmatpush1.msra.mxu0 0.0
          %2902 = vmatprep.subr.mxu0 0.0
          %2903 = vmatpush1.msra.mxu0 0.0
          %2904 = vmatprep.subr.mxu0 0.0
          %2905 = vmatpush1.msra.mxu0 0.0
          %2906 = vmatprep.subr.mxu0 0.0
          %2907 = vmatpush1.msra.mxu0 0.0
          %2908 = vmatprep.subr.mxu0 0.0
          %2909 = vmatpush1.msra.mxu0 0.0
          %2910 = vmatprep.subr.mxu0 0.0
          %2911 = vmatpush1.msra.mxu0 0.0
          %2912 = vmatprep.subr.mxu0 0.0
          %2913 = vmatpush1.msra.mxu0 0.0
          %2914 = vmatprep.subr.mxu0 0.0
          %2915 = vmatpush1.msra.mxu0 0.0
          %2916 = vmatprep.subr.mxu0 0.0
          %2917 = vmatpush1.msra.mxu0 0.0
          %2918 = vmatprep.subr.mxu0 0.0
          %2919 = vmatpush1.msra.mxu0 0.0
          %2920 = vmatprep.subr.mxu0 0.0
          %2921 = vmatpush1.msra.mxu0 0.0
          %2922 = vmatprep.subr.mxu0 0.0
          %2923 = vmatpush1.msra.mxu0 0.0
          %2924 = vmatprep.subr.mxu0 0.0
          %2925 = vmatpush1.msra.mxu0 0.0
          %2926 = vmatprep.subr.mxu0 0.0
          %2927 = vmatpush1.msra.mxu0 0.0
          %2928 = vmatprep.subr.mxu0 0.0
          %2929 = vmatpush1.msra.mxu0 0.0
          %2930 = vmatprep.subr.mxu0 0.0
          %2931 = vmatpush1.msra.mxu0 0.0
          %2932 = vmatprep.subr.mxu0 0.0
          %2933 = vmatpush1.msra.mxu0 0.0
          %2934 = vmatprep.subr.mxu0 0.0
          %2935 = vmatpush1.msra.mxu0 0.0
          %2936 = vmatprep.subr.mxu0 0.0
          %2937 = vmatpush1.msra.mxu0 0.0
          %2938 = vmatprep.subr.mxu0 0.0
          %2939 = vmatpush1.msra.mxu0 0.0
          %2940 = vmatprep.subr.mxu0 0.0
          %2941 = vmatpush1.msra.mxu0 0.0
          %2942 = vmatprep.subr.mxu0 0.0
          %2943 = vmatpush1.msra.mxu0 0.0
          %2944 = vmatprep.subr.mxu0 0.0
          %2945 = vmatpush1.msra.mxu0 0.0
          %2946 = vmatprep.subr.mxu0 0.0
          %2947 = vmatpush1.msra.mxu0 0.0
          %2948 = vmatprep.subr.mxu0 0.0
          %2949 = vmatpush1.msra.mxu0 0.0
          %2950 = vmatprep.subr.mxu0 0.0
          %2951 = vmatpush1.msra.mxu0 0.0
          %2952 = vmatprep.subr.mxu0 0.0
          %2953 = vmatpush1.msra.mxu0 0.0
          %2954 = vmatprep.subr.mxu0 0.0
          %2955 = vmatpush1.msra.mxu0 0.0
          %2956 = vmatprep.mubr.f32.mxu0 0.0
          %2957 = vmatmul.mubr.f32.gmra.mrb[0].mxu0 %v2887
          %v2958 = vpop.f32.mrb[0].mxu0
          %v2959 = vadd.f32 0.0, %v2958
          %v2960 = vpop.f32.mrb[0].mxu0
          %2961 = vmatprep.mubr.f32.mxu0 0.0
          %2962 = vmatmul.mubr.f32.gmra.mrb[0].mxu0 %v2890
          %v2963 = vpop.f32.mrb[0].mxu0
          %v2964 = vadd.f32 0.0, %v2963
          %v2965 = vpop.f32.mrb[0].mxu0
          %2966 = vdwg.mxu0
          %v2968 = vsel %vm1913, %v1041, 0
          %v2971 = vsel %vm1913, %v1042, 0
          %2973 = vmatprep.subr.mxu0 0.0
          %2974 = vmatpush1.msra.mxu0 %v157
          %2975 = vmatprep.subr.mxu0 0.0
          %2976 = vmatpush1.msra.mxu0 %v158
          %2977 = vmatprep.subr.mxu0 0.0
          %2978 = vmatpush1.msra.mxu0 0.0
          %2979 = vmatprep.subr.mxu0 0.0
          %2980 = vmatpush1.msra.mxu0 0.0
          %2981 = vmatprep.subr.mxu0 0.0
          %2982 = vmatpush1.msra.mxu0 0.0
          %2983 = vmatprep.subr.mxu0 0.0
          %2984 = vmatpush1.msra.mxu0 0.0
          %2985 = vmatprep.subr.mxu0 0.0
          %2986 = vmatpush1.msra.mxu0 0.0
          %2987 = vmatprep.subr.mxu0 0.0
          %2988 = vmatpush1.msra.mxu0 0.0
          %2989 = vmatprep.subr.mxu0 0.0
          %2990 = vmatpush1.msra.mxu0 0.0
          %2991 = vmatprep.subr.mxu0 0.0
          %2992 = vmatpush1.msra.mxu0 0.0
          %2993 = vmatprep.subr.mxu0 0.0
          %2994 = vmatpush1.msra.mxu0 0.0
          %2995 = vmatprep.subr.mxu0 0.0
          %2996 = vmatpush1.msra.mxu0 0.0
          %2997 = vmatprep.subr.mxu0 0.0
          %2998 = vmatpush1.msra.mxu0 0.0
          %2999 = vmatprep.subr.mxu0 0.0
          %3000 = vmatpush1.msra.mxu0 0.0
          %3001 = vmatprep.subr.mxu0 0.0
          %3002 = vmatpush1.msra.mxu0 0.0
          %3003 = vmatprep.subr.mxu0 0.0
          %3004 = vmatpush1.msra.mxu0 0.0
          %3005 = vmatprep.subr.mxu0 0.0
          %3006 = vmatpush1.msra.mxu0 0.0
          %3007 = vmatprep.subr.mxu0 0.0
          %3008 = vmatpush1.msra.mxu0 0.0
          %3009 = vmatprep.subr.mxu0 0.0
          %3010 = vmatpush1.msra.mxu0 0.0
          %3011 = vmatprep.subr.mxu0 0.0
          %3012 = vmatpush1.msra.mxu0 0.0
          %3013 = vmatprep.subr.mxu0 0.0
          %3014 = vmatpush1.msra.mxu0 0.0
          %3015 = vmatprep.subr.mxu0 0.0
          %3016 = vmatpush1.msra.mxu0 0.0
          %3017 = vmatprep.subr.mxu0 0.0
          %3018 = vmatpush1.msra.mxu0 0.0
          %3019 = vmatprep.subr.mxu0 0.0
          %3020 = vmatpush1.msra.mxu0 0.0
          %3021 = vmatprep.subr.mxu0 0.0
          %3022 = vmatpush1.msra.mxu0 0.0
          %3023 = vmatprep.subr.mxu0 0.0
          %3024 = vmatpush1.msra.mxu0 0.0
          %3025 = vmatprep.subr.mxu0 0.0
          %3026 = vmatpush1.msra.mxu0 0.0
          %3027 = vmatprep.subr.mxu0 0.0
          %3028 = vmatpush1.msra.mxu0 0.0
          %3029 = vmatprep.subr.mxu0 0.0
          %3030 = vmatpush1.msra.mxu0 0.0
          %3031 = vmatprep.subr.mxu0 0.0
          %3032 = vmatpush1.msra.mxu0 0.0
          %3033 = vmatprep.subr.mxu0 0.0
          %3034 = vmatpush1.msra.mxu0 0.0
          %3035 = vmatprep.subr.mxu0 0.0
          %3036 = vmatpush1.msra.mxu0 0.0
          %3037 = vmatprep.mubr.f32.mxu0 0.0
          %3038 = vmatmul.mubr.f32.gmra.mrb[0].mxu0 %v2968
          %v3039 = vpop.f32.mrb[0].mxu0
          %v3040 = vadd.f32 0.0, %v3039
          %v3041 = vpop.f32.mrb[0].mxu0
          %3042 = vmatprep.mubr.f32.mxu0 0.0
          %3043 = vmatmul.mubr.f32.gmra.mrb[0].mxu0 %v2971
          %v3044 = vpop.f32.mrb[0].mxu0
          %v3045 = vadd.f32 0.0, %v3044
          %v3046 = vpop.f32.mrb[0].mxu0
          %3047 = vdwg.mxu0
          %v3049 = vsel %vm1913, %v1043, 0
          %v3052 = vsel %vm1913, %v1044, 0
          %3054 = vmatprep.subr.mxu0 0.0
          %3055 = vmatpush1.msra.mxu0 %v157
          %3056 = vmatprep.subr.mxu0 0.0
          %3057 = vmatpush1.msra.mxu0 %v158
          %3058 = vmatprep.subr.mxu0 0.0
          %3059 = vmatpush1.msra.mxu0 0.0
          %3060 = vmatprep.subr.mxu0 0.0
          %3061 = vmatpush1.msra.mxu0 0.0
          %3062 = vmatprep.subr.mxu0 0.0
          %3063 = vmatpush1.msra.mxu0 0.0
          %3064 = vmatprep.subr.mxu0 0.0
          %3065 = vmatpush1.msra.mxu0 0.0
          %3066 = vmatprep.subr.mxu0 0.0
          %3067 = vmatpush1.msra.mxu0 0.0
          %3068 = vmatprep.subr.mxu0 0.0
          %3069 = vmatpush1.msra.mxu0 0.0
          %3070 = vmatprep.subr.mxu0 0.0
          %3071 = vmatpush1.msra.mxu0 0.0
          %3072 = vmatprep.subr.mxu0 0.0
          %3073 = vmatpush1.msra.mxu0 0.0
          %3074 = vmatprep.subr.mxu0 0.0
          %3075 = vmatpush1.msra.mxu0 0.0
          %3076 = vmatprep.subr.mxu0 0.0
          %3077 = vmatpush1.msra.mxu0 0.0
          %3078 = vmatprep.subr.mxu0 0.0
          %3079 = vmatpush1.msra.mxu0 0.0
          %3080 = vmatprep.subr.mxu0 0.0
          %3081 = vmatpush1.msra.mxu0 0.0
          %3082 = vmatprep.subr.mxu0 0.0
          %3083 = vmatpush1.msra.mxu0 0.0
          %3084 = vmatprep.subr.mxu0 0.0
          %3085 = vmatpush1.msra.mxu0 0.0
          %3086 = vmatprep.subr.mxu0 0.0
          %3087 = vmatpush1.msra.mxu0 0.0
          %3088 = vmatprep.subr.mxu0 0.0
          %3089 = vmatpush1.msra.mxu0 0.0
          %3090 = vmatprep.subr.mxu0 0.0
          %3091 = vmatpush1.msra.mxu0 0.0
          %3092 = vmatprep.subr.mxu0 0.0
          %3093 = vmatpush1.msra.mxu0 0.0
          %3094 = vmatprep.subr.mxu0 0.0
          %3095 = vmatpush1.msra.mxu0 0.0
          %3096 = vmatprep.subr.mxu0 0.0
          %3097 = vmatpush1.msra.mxu0 0.0
          %3098 = vmatprep.subr.mxu0 0.0
          %3099 = vmatpush1.msra.mxu0 0.0
          %3100 = vmatprep.subr.mxu0 0.0
          %3101 = vmatpush1.msra.mxu0 0.0
          %3102 = vmatprep.subr.mxu0 0.0
          %3103 = vmatpush1.msra.mxu0 0.0
          %3104 = vmatprep.subr.mxu0 0.0
          %3105 = vmatpush1.msra.mxu0 0.0
          %3106 = vmatprep.subr.mxu0 0.0
          %3107 = vmatpush1.msra.mxu0 0.0
          %3108 = vmatprep.subr.mxu0 0.0
          %3109 = vmatpush1.msra.mxu0 0.0
          %3110 = vmatprep.subr.mxu0 0.0
          %3111 = vmatpush1.msra.mxu0 0.0
          %3112 = vmatprep.subr.mxu0 0.0
          %3113 = vmatpush1.msra.mxu0 0.0
          %3114 = vmatprep.subr.mxu0 0.0
          %3115 = vmatpush1.msra.mxu0 0.0
          %3116 = vmatprep.subr.mxu0 0.0
          %3117 = vmatpush1.msra.mxu0 0.0
          %3118 = vmatprep.mubr.f32.mxu0 0.0
          %3119 = vmatmul.mubr.f32.gmra.mrb[0].mxu0 %v3049
          %v3120 = vpop.f32.mrb[0].mxu0
          %v3121 = vadd.f32 0.0, %v3120
          %v3122 = vpop.f32.mrb[0].mxu0
          %3123 = vmatprep.mubr.f32.mxu0 0.0
          %3124 = vmatmul.mubr.f32.gmra.mrb[0].mxu0 %v3052
          %v3125 = vpop.f32.mrb[0].mxu0
          %v3126 = vadd.f32 0.0, %v3125
          %v3127 = vpop.f32.mrb[0].mxu0
          %3128 = vdwg.mxu0
          %v3130 = vsel %vm1913, %v1045, 0
          %v3133 = vsel %vm1913, %v1046, 0
          %3135 = vmatprep.subr.mxu0 0.0
          %3136 = vmatpush1.msra.mxu0 %v157
          %3137 = vmatprep.subr.mxu0 0.0
          %3138 = vmatpush1.msra.mxu0 %v158
          %3139 = vmatprep.subr.mxu0 0.0
          %3140 = vmatpush1.msra.mxu0 0.0
          %3141 = vmatprep.subr.mxu0 0.0
          %3142 = vmatpush1.msra.mxu0 0.0
          %3143 = vmatprep.subr.mxu0 0.0
          %3144 = vmatpush1.msra.mxu0 0.0
          %3145 = vmatprep.subr.mxu0 0.0
          %3146 = vmatpush1.msra.mxu0 0.0
          %3147 = vmatprep.subr.mxu0 0.0
          %3148 = vmatpush1.msra.mxu0 0.0
          %3149 = vmatprep.subr.mxu0 0.0
          %3150 = vmatpush1.msra.mxu0 0.0
          %3151 = vmatprep.subr.mxu0 0.0
          %3152 = vmatpush1.msra.mxu0 0.0
          %3153 = vmatprep.subr.mxu0 0.0
          %3154 = vmatpush1.msra.mxu0 0.0
          %3155 = vmatprep.subr.mxu0 0.0
          %3156 = vmatpush1.msra.mxu0 0.0
          %3157 = vmatprep.subr.mxu0 0.0
          %3158 = vmatpush1.msra.mxu0 0.0
          %3159 = vmatprep.subr.mxu0 0.0
          %3160 = vmatpush1.msra.mxu0 0.0
          %3161 = vmatprep.subr.mxu0 0.0
          %3162 = vmatpush1.msra.mxu0 0.0
          %3163 = vmatprep.subr.mxu0 0.0
          %3164 = vmatpush1.msra.mxu0 0.0
          %3165 = vmatprep.subr.mxu0 0.0
          %3166 = vmatpush1.msra.mxu0 0.0
          %3167 = vmatprep.subr.mxu0 0.0
          %3168 = vmatpush1.msra.mxu0 0.0
          %3169 = vmatprep.subr.mxu0 0.0
          %3170 = vmatpush1.msra.mxu0 0.0
          %3171 = vmatprep.subr.mxu0 0.0
          %3172 = vmatpush1.msra.mxu0 0.0
          %3173 = vmatprep.subr.mxu0 0.0
          %3174 = vmatpush1.msra.mxu0 0.0
          %3175 = vmatprep.subr.mxu0 0.0
          %3176 = vmatpush1.msra.mxu0 0.0
          %3177 = vmatprep.subr.mxu0 0.0
          %3178 = vmatpush1.msra.mxu0 0.0
          %3179 = vmatprep.subr.mxu0 0.0
          %3180 = vmatpush1.msra.mxu0 0.0
          %3181 = vmatprep.subr.mxu0 0.0
          %3182 = vmatpush1.msra.mxu0 0.0
          %3183 = vmatprep.subr.mxu0 0.0
          %3184 = vmatpush1.msra.mxu0 0.0
          %3185 = vmatprep.subr.mxu0 0.0
          %3186 = vmatpush1.msra.mxu0 0.0
          %3187 = vmatprep.subr.mxu0 0.0
          %3188 = vmatpush1.msra.mxu0 0.0
          %3189 = vmatprep.subr.mxu0 0.0
          %3190 = vmatpush1.msra.mxu0 0.0
          %3191 = vmatprep.subr.mxu0 0.0
          %3192 = vmatpush1.msra.mxu0 0.0
          %3193 = vmatprep.subr.mxu0 0.0
          %3194 = vmatpush1.msra.mxu0 0.0
          %3195 = vmatprep.subr.mxu0 0.0
          %3196 = vmatpush1.msra.mxu0 0.0
          %3197 = vmatprep.subr.mxu0 0.0
          %3198 = vmatpush1.msra.mxu0 0.0
          %3199 = vmatprep.mubr.f32.mxu0 0.0
          %3200 = vmatmul.mubr.f32.gmra.mrb[0].mxu0 %v3130
          %v3201 = vpop.f32.mrb[0].mxu0
          %v3202 = vadd.f32 0.0, %v3201
          %v3203 = vpop.f32.mrb[0].mxu0
          %3204 = vmatprep.mubr.f32.mxu0 0.0
          %3205 = vmatmul.mubr.f32.gmra.mrb[0].mxu0 %v3133
          %v3206 = vpop.f32.mrb[0].mxu0
          %v3207 = vadd.f32 0.0, %v3206
          %v3208 = vpop.f32.mrb[0].mxu0
          %3209 = vdwg.mxu0
          %v3210 = vmul.f32 %v1881, %v1987
          %v3211 = vmul.f32 %v1882, %v1992
          %v3212 = vmul.f32 %v1883, %v2068
          %v3213 = vmul.f32 %v1884, %v2073
          %v3214 = vmul.f32 %v1885, %v2149
          %v3215 = vmul.f32 %v1886, %v2154
          %v3216 = vmul.f32 %v1887, %v2230
          %v3217 = vmul.f32 %v1888, %v2235
          %v3218 = vmul.f32 %v1889, %v2311
          %v3219 = vmul.f32 %v1890, %v2316
          %v3220 = vmul.f32 %v1891, %v2392
          %v3221 = vmul.f32 %v1892, %v2397
          %v3222 = vmul.f32 %v1893, %v2473
          %v3223 = vmul.f32 %v1894, %v2478
          %v3224 = vmul.f32 %v1895, %v2554
          %v3225 = vmul.f32 %v1896, %v2559
          %v3226 = vmul.f32 %v1897, %v2635
          %v3227 = vmul.f32 %v1898, %v2640
          %v3228 = vmul.f32 %v1899, %v2716
          %v3229 = vmul.f32 %v1900, %v2721
          %v3230 = vmul.f32 %v1901, %v2797
          %v3231 = vmul.f32 %v1902, %v2802
          %v3232 = vmul.f32 %v1903, %v2878
          %v3233 = vmul.f32 %v1904, %v2883
          %v3234 = vmul.f32 %v1905, %v2959
          %v3235 = vmul.f32 %v1906, %v2964
          %v3236 = vmul.f32 %v1907, %v3040
          %v3237 = vmul.f32 %v1908, %v3045
          %v3238 = vmul.f32 %v1909, %v3121
          %v3239 = vmul.f32 %v1910, %v3126
          %v3240 = vmul.f32 %v1911, %v3202
          %v3241 = vmul.f32 %v1912, %v3207
          %v3242 = vsel %vm1913, %v3210, 0.0
          %3243 = vadd.xlane.f32.xlu0 %v3242
          %v3244 = vpop.xlane.xlu0 %3243
          %v3245 = vsel %vm1913, %v3211, 0.0
          %3246 = vadd.xlane.f32.xlu0 %v3245
          %v3247 = vpop.xlane.xlu0 %3246
          %v3248 = vsel %vm1913, %v3212, 0.0
          %3249 = vadd.xlane.f32.xlu0 %v3248
          %v3250 = vpop.xlane.xlu0 %3249
          %v3251 = vsel %vm1913, %v3213, 0.0
          %3252 = vadd.xlane.f32.xlu0 %v3251
          %v3253 = vpop.xlane.xlu0 %3252
          %v3254 = vsel %vm1913, %v3214, 0.0
          %3255 = vadd.xlane.f32.xlu0 %v3254
          %v3256 = vpop.xlane.xlu0 %3255
          %v3257 = vsel %vm1913, %v3215, 0.0
          %3258 = vadd.xlane.f32.xlu0 %v3257
          %v3259 = vpop.xlane.xlu0 %3258
          %v3260 = vsel %vm1913, %v3216, 0.0
          %3261 = vadd.xlane.f32.xlu0 %v3260
          %v3262 = vpop.xlane.xlu0 %3261
          %v3263 = vsel %vm1913, %v3217, 0.0
          %3264 = vadd.xlane.f32.xlu0 %v3263
          %v3265 = vpop.xlane.xlu0 %3264
          %v3266 = vsel %vm1913, %v3218, 0.0
          %3267 = vadd.xlane.f32.xlu0 %v3266
          %v3268 = vpop.xlane.xlu0 %3267
          %v3269 = vsel %vm1913, %v3219, 0.0
          %3270 = vadd.xlane.f32.xlu0 %v3269
          %v3271 = vpop.xlane.xlu0 %3270
          %v3272 = vsel %vm1913, %v3220, 0.0
          %3273 = vadd.xlane.f32.xlu0 %v3272
          %v3274 = vpop.xlane.xlu0 %3273
          %v3275 = vsel %vm1913, %v3221, 0.0
          %3276 = vadd.xlane.f32.xlu0 %v3275
          %v3277 = vpop.xlane.xlu0 %3276
          %v3278 = vsel %vm1913, %v3222, 0.0
          %3279 = vadd.xlane.f32.xlu0 %v3278
          %v3280 = vpop.xlane.xlu0 %3279
          %v3281 = vsel %vm1913, %v3223, 0.0
          %3282 = vadd.xlane.f32.xlu0 %v3281
          %v3283 = vpop.xlane.xlu0 %3282
          %v3284 = vsel %vm1913, %v3224, 0.0
          %3285 = vadd.xlane.f32.xlu0 %v3284
          %v3286 = vpop.xlane.xlu0 %3285
          %v3287 = vsel %vm1913, %v3225, 0.0
          %3288 = vadd.xlane.f32.xlu0 %v3287
          %v3289 = vpop.xlane.xlu0 %3288
          %v3290 = vsel %vm1913, %v3226, 0.0
          %3291 = vadd.xlane.f32.xlu0 %v3290
          %v3292 = vpop.xlane.xlu0 %3291
          %v3293 = vsel %vm1913, %v3227, 0.0
          %3294 = vadd.xlane.f32.xlu0 %v3293
          %v3295 = vpop.xlane.xlu0 %3294
          %v3296 = vsel %vm1913, %v3228, 0.0
          %3297 = vadd.xlane.f32.xlu0 %v3296
          %v3298 = vpop.xlane.xlu0 %3297
          %v3299 = vsel %vm1913, %v3229, 0.0
          %3300 = vadd.xlane.f32.xlu0 %v3299
          %v3301 = vpop.xlane.xlu0 %3300
          %v3302 = vsel %vm1913, %v3230, 0.0
          %3303 = vadd.xlane.f32.xlu0 %v3302
          %v3304 = vpop.xlane.xlu0 %3303
          %v3305 = vsel %vm1913, %v3231, 0.0
          %3306 = vadd.xlane.f32.xlu0 %v3305
          %v3307 = vpop.xlane.xlu0 %3306
          %v3308 = vsel %vm1913, %v3232, 0.0
          %3309 = vadd.xlane.f32.xlu0 %v3308
          %v3310 = vpop.xlane.xlu0 %3309
          %v3311 = vsel %vm1913, %v3233, 0.0
          %3312 = vadd.xlane.f32.xlu0 %v3311
          %v3313 = vpop.xlane.xlu0 %3312
          %v3314 = vsel %vm1913, %v3234, 0.0
          %3315 = vadd.xlane.f32.xlu0 %v3314
          %v3316 = vpop.xlane.xlu0 %3315
          %v3317 = vsel %vm1913, %v3235, 0.0
          %3318 = vadd.xlane.f32.xlu0 %v3317
          %v3319 = vpop.xlane.xlu0 %3318
          %v3320 = vsel %vm1913, %v3236, 0.0
          %3321 = vadd.xlane.f32.xlu0 %v3320
          %v3322 = vpop.xlane.xlu0 %3321
          %v3323 = vsel %vm1913, %v3237, 0.0
          %3324 = vadd.xlane.f32.xlu0 %v3323
          %v3325 = vpop.xlane.xlu0 %3324
          %v3326 = vsel %vm1913, %v3238, 0.0
          %3327 = vadd.xlane.f32.xlu0 %v3326
          %v3328 = vpop.xlane.xlu0 %3327
          %v3329 = vsel %vm1913, %v3239, 0.0
          %3330 = vadd.xlane.f32.xlu0 %v3329
          %v3331 = vpop.xlane.xlu0 %3330
          %v3332 = vsel %vm1913, %v3240, 0.0
          %3333 = vadd.xlane.f32.xlu0 %v3332
          %v3334 = vpop.xlane.xlu0 %3333
          %v3335 = vsel %vm1913, %v3241, 0.0
          %3336 = vadd.xlane.f32.xlu0 %v3335
          %v3337 = vpop.xlane.xlu0 %3336
          %v3370 = vlaneseq
          %v3371 = vshrl.u32 %v3370, 7
          %v3372 = vsub.s32 %v149, %v3371
          %v3373 = vrot.slane %v3244, %v3372
          %v3374 = vadd.s32 %v149, 4294967288
          %v3375 = vlaneseq
          %v3376 = vshrl.u32 %v3375, 7
          %v3377 = vsub.s32 %v3374, %v3376
          %v3378 = vrot.slane %v3247, %v3377
          %vm3379 = vcmask 130112
          %v3380 = vsel %vm3379, %v3378, %v3373
          %v3381 = vlaneseq
          %v3382 = vshrl.u32 %v3381, 7
          %v3383 = vsub.s32 %v149, %v3382
          %v3384 = vrot.slane %v3250, %v3383
          %v3385 = vlaneseq
          %v3386 = vshrl.u32 %v3385, 7
          %v3387 = vsub.s32 %v3374, %v3386
          %v3388 = vrot.slane %v3253, %v3387
          %v3389 = vsel %vm3379, %v3388, %v3384
          %v3390 = vlaneseq
          %v3391 = vshrl.u32 %v3390, 7
          %v3392 = vsub.s32 %v149, %v3391
          %v3393 = vrot.slane %v3256, %v3392
          %v3394 = vlaneseq
          %v3395 = vshrl.u32 %v3394, 7
          %v3396 = vsub.s32 %v3374, %v3395
          %v3397 = vrot.slane %v3259, %v3396
          %v3398 = vsel %vm3379, %v3397, %v3393
          %v3399 = vlaneseq
          %v3400 = vshrl.u32 %v3399, 7
          %v3401 = vsub.s32 %v149, %v3400
          %v3402 = vrot.slane %v3262, %v3401
          %v3403 = vlaneseq
          %v3404 = vshrl.u32 %v3403, 7
          %v3405 = vsub.s32 %v3374, %v3404
          %v3406 = vrot.slane %v3265, %v3405
          %v3407 = vsel %vm3379, %v3406, %v3402
          %v3408 = vlaneseq
          %v3409 = vshrl.u32 %v3408, 7
          %v3410 = vsub.s32 %v149, %v3409
          %v3411 = vrot.slane %v3268, %v3410
          %v3412 = vlaneseq
          %v3413 = vshrl.u32 %v3412, 7
          %v3414 = vsub.s32 %v3374, %v3413
          %v3415 = vrot.slane %v3271, %v3414
          %v3416 = vsel %vm3379, %v3415, %v3411
          %v3417 = vlaneseq
          %v3418 = vshrl.u32 %v3417, 7
          %v3419 = vsub.s32 %v149, %v3418
          %v3420 = vrot.slane %v3274, %v3419
          %v3421 = vlaneseq
          %v3422 = vshrl.u32 %v3421, 7
          %v3423 = vsub.s32 %v3374, %v3422
          %v3424 = vrot.slane %v3277, %v3423
          %v3425 = vsel %vm3379, %v3424, %v3420
          %v3426 = vlaneseq
          %v3427 = vshrl.u32 %v3426, 7
          %v3428 = vsub.s32 %v149, %v3427
          %v3429 = vrot.slane %v3280, %v3428
          %v3430 = vlaneseq
          %v3431 = vshrl.u32 %v3430, 7
          %v3432 = vsub.s32 %v3374, %v3431
          %v3433 = vrot.slane %v3283, %v3432
          %v3434 = vsel %vm3379, %v3433, %v3429
          %v3435 = vlaneseq
          %v3436 = vshrl.u32 %v3435, 7
          %v3437 = vsub.s32 %v149, %v3436
          %v3438 = vrot.slane %v3286, %v3437
          %v3439 = vlaneseq
          %v3440 = vshrl.u32 %v3439, 7
          %v3441 = vsub.s32 %v3374, %v3440
          %v3442 = vrot.slane %v3289, %v3441
          %v3443 = vsel %vm3379, %v3442, %v3438
          %v3444 = vlaneseq
          %v3445 = vshrl.u32 %v3444, 7
          %v3446 = vsub.s32 %v149, %v3445
          %v3447 = vrot.slane %v3292, %v3446
          %v3448 = vlaneseq
          %v3449 = vshrl.u32 %v3448, 7
          %v3450 = vsub.s32 %v3374, %v3449
          %v3451 = vrot.slane %v3295, %v3450
          %v3452 = vsel %vm3379, %v3451, %v3447
          %v3453 = vlaneseq
          %v3454 = vshrl.u32 %v3453, 7
          %v3455 = vsub.s32 %v149, %v3454
          %v3456 = vrot.slane %v3298, %v3455
          %v3457 = vlaneseq
          %v3458 = vshrl.u32 %v3457, 7
          %v3459 = vsub.s32 %v3374, %v3458
          %v3460 = vrot.slane %v3301, %v3459
          %v3461 = vsel %vm3379, %v3460, %v3456
          %v3462 = vlaneseq
          %v3463 = vshrl.u32 %v3462, 7
          %v3464 = vsub.s32 %v149, %v3463
          %v3465 = vrot.slane %v3304, %v3464
          %v3466 = vlaneseq
          %v3467 = vshrl.u32 %v3466, 7
          %v3468 = vsub.s32 %v3374, %v3467
          %v3469 = vrot.slane %v3307, %v3468
          %v3470 = vsel %vm3379, %v3469, %v3465
          %v3471 = vlaneseq
          %v3472 = vshrl.u32 %v3471, 7
          %v3473 = vsub.s32 %v149, %v3472
          %v3474 = vrot.slane %v3310, %v3473
          %v3475 = vlaneseq
          %v3476 = vshrl.u32 %v3475, 7
          %v3477 = vsub.s32 %v3374, %v3476
          %v3478 = vrot.slane %v3313, %v3477
          %v3479 = vsel %vm3379, %v3478, %v3474
          %v3480 = vlaneseq
          %v3481 = vshrl.u32 %v3480, 7
          %v3482 = vsub.s32 %v149, %v3481
          %v3483 = vrot.slane %v3316, %v3482
          %v3484 = vlaneseq
          %v3485 = vshrl.u32 %v3484, 7
          %v3486 = vsub.s32 %v3374, %v3485
          %v3487 = vrot.slane %v3319, %v3486
          %v3488 = vsel %vm3379, %v3487, %v3483
          %v3489 = vlaneseq
          %v3490 = vshrl.u32 %v3489, 7
          %v3491 = vsub.s32 %v149, %v3490
          %v3492 = vrot.slane %v3322, %v3491
          %v3493 = vlaneseq
          %v3494 = vshrl.u32 %v3493, 7
          %v3495 = vsub.s32 %v3374, %v3494
          %v3496 = vrot.slane %v3325, %v3495
          %v3497 = vsel %vm3379, %v3496, %v3492
          %v3498 = vlaneseq
          %v3499 = vshrl.u32 %v3498, 7
          %v3500 = vsub.s32 %v149, %v3499
          %v3501 = vrot.slane %v3328, %v3500
          %v3502 = vlaneseq
          %v3503 = vshrl.u32 %v3502, 7
          %v3504 = vsub.s32 %v3374, %v3503
          %v3505 = vrot.slane %v3331, %v3504
          %v3506 = vsel %vm3379, %v3505, %v3501
          %v3507 = vlaneseq
          %v3508 = vshrl.u32 %v3507, 7
          %v3509 = vsub.s32 %v149, %v3508
          %v3510 = vrot.slane %v3334, %v3509
          %v3511 = vlaneseq
          %v3512 = vshrl.u32 %v3511, 7
          %v3513 = vsub.s32 %v3374, %v3512
          %v3514 = vrot.slane %v3337, %v3513
          %v3515 = vsel %vm3379, %v3514, %v3510
          %vm3516 = vcmask 1041409
          %v3517 = vsel %vm3516, %v3389, %v3380
          %vm3518 = vcmask 1042434
          %v3519 = vsel %vm3518, %v3398, %v3517
          %vm3520 = vcmask 1043459
          %v3521 = vsel %vm3520, %v3407, %v3519
          %vm3522 = vcmask 1044484
          %v3523 = vsel %vm3522, %v3416, %v3521
          %vm3524 = vcmask 1045509
          %v3525 = vsel %vm3524, %v3425, %v3523
          %vm3526 = vcmask 1046534
          %v3527 = vsel %vm3526, %v3434, %v3525
          %vm3528 = vcmask 1047559
          %v3529 = vsel %vm3528, %v3443, %v3527
          %v3530 = vsel %vm3516, %v3461, %v3452
          %v3531 = vsel %vm3518, %v3470, %v3530
          %v3532 = vsel %vm3520, %v3479, %v3531
          %v3533 = vsel %vm3522, %v3488, %v3532
          %v3534 = vsel %vm3524, %v3497, %v3533
          %v3535 = vsel %vm3526, %v3506, %v3534
          %v3536 = vsel %vm3528, %v3515, %v3535
          %v3539 = vadd.f32 %v157, %v3529
          %v3540 = vadd.f32 %v158, %v3536
          %3541 = vmatprep.subr.mxu0 0.0
          %3542 = vmatpush1.msra.mxu0 %v159
          %3543 = vmatprep.subr.mxu0 0.0
          %3544 = vmatpush1.msra.mxu0 %v160
          %3545 = vmatprep.subr.mxu0 0.0
          %3546 = vmatpush1.msra.mxu0 0.0
          %3547 = vmatprep.subr.mxu0 0.0
          %3548 = vmatpush1.msra.mxu0 0.0
          %3549 = vmatprep.subr.mxu0 0.0
          %3550 = vmatpush1.msra.mxu0 0.0
          %3551 = vmatprep.subr.mxu0 0.0
          %3552 = vmatpush1.msra.mxu0 0.0
          %3553 = vmatprep.subr.mxu0 0.0
          %3554 = vmatpush1.msra.mxu0 0.0
          %3555 = vmatprep.subr.mxu0 0.0
          %3556 = vmatpush1.msra.mxu0 0.0
          %3557 = vmatprep.subr.mxu0 0.0
          %3558 = vmatpush1.msra.mxu0 0.0
          %3559 = vmatprep.subr.mxu0 0.0
          %3560 = vmatpush1.msra.mxu0 0.0
          %3561 = vmatprep.subr.mxu0 0.0
          %3562 = vmatpush1.msra.mxu0 0.0
          %3563 = vmatprep.subr.mxu0 0.0
          %3564 = vmatpush1.msra.mxu0 0.0
          %3565 = vmatprep.subr.mxu0 0.0
          %3566 = vmatpush1.msra.mxu0 0.0
          %3567 = vmatprep.subr.mxu0 0.0
          %3568 = vmatpush1.msra.mxu0 0.0
          %3569 = vmatprep.subr.mxu0 0.0
          %3570 = vmatpush1.msra.mxu0 0.0
          %3571 = vmatprep.subr.mxu0 0.0
          %3572 = vmatpush1.msra.mxu0 0.0
          %3573 = vmatprep.subr.mxu0 0.0
          %3574 = vmatpush1.msra.mxu0 0.0
          %3575 = vmatprep.subr.mxu0 0.0
          %3576 = vmatpush1.msra.mxu0 0.0
          %3577 = vmatprep.subr.mxu0 0.0
          %3578 = vmatpush1.msra.mxu0 0.0
          %3579 = vmatprep.subr.mxu0 0.0
          %3580 = vmatpush1.msra.mxu0 0.0
          %3581 = vmatprep.subr.mxu0 0.0
          %3582 = vmatpush1.msra.mxu0 0.0
          %3583 = vmatprep.subr.mxu0 0.0
          %3584 = vmatpush1.msra.mxu0 0.0
          %3585 = vmatprep.subr.mxu0 0.0
          %3586 = vmatpush1.msra.mxu0 0.0
          %3587 = vmatprep.subr.mxu0 0.0
          %3588 = vmatpush1.msra.mxu0 0.0
          %3589 = vmatprep.subr.mxu0 0.0
          %3590 = vmatpush1.msra.mxu0 0.0
          %3591 = vmatprep.subr.mxu0 0.0
          %3592 = vmatpush1.msra.mxu0 0.0
          %3593 = vmatprep.subr.mxu0 0.0
          %3594 = vmatpush1.msra.mxu0 0.0
          %3595 = vmatprep.subr.mxu0 0.0
          %3596 = vmatpush1.msra.mxu0 0.0
          %3597 = vmatprep.subr.mxu0 0.0
          %3598 = vmatpush1.msra.mxu0 0.0
          %3599 = vmatprep.subr.mxu0 0.0
          %3600 = vmatpush1.msra.mxu0 0.0
          %3601 = vmatprep.subr.mxu0 0.0
          %3602 = vmatpush1.msra.mxu0 0.0
          %3603 = vmatprep.subr.mxu0 0.0
          %3604 = vmatpush1.msra.mxu0 0.0
          %3605 = vmatprep.mubr.f32.mxu0 0.0
          %3606 = vmatmul.mubr.f32.gmra.mrb[0].mxu0 %v1915
          %v3607 = vpop.f32.mrb[0].mxu0
          %v3608 = vadd.f32 0.0, %v3607
          %v3609 = vpop.f32.mrb[0].mxu0
          %3610 = vmatprep.mubr.f32.mxu0 0.0
          %3611 = vmatmul.mubr.f32.gmra.mrb[0].mxu0 %v1918
          %v3612 = vpop.f32.mrb[0].mxu0
          %v3613 = vadd.f32 0.0, %v3612
          %v3614 = vpop.f32.mrb[0].mxu0
          %3615 = vdwg.mxu0
          %3616 = vmatprep.subr.mxu0 0.0
          %3617 = vmatpush1.msra.mxu0 %v159
          %3618 = vmatprep.subr.mxu0 0.0
          %3619 = vmatpush1.msra.mxu0 %v160
          %3620 = vmatprep.subr.mxu0 0.0
          %3621 = vmatpush1.msra.mxu0 0.0
          %3622 = vmatprep.subr.mxu0 0.0
          %3623 = vmatpush1.msra.mxu0 0.0
          %3624 = vmatprep.subr.mxu0 0.0
          %3625 = vmatpush1.msra.mxu0 0.0
          %3626 = vmatprep.subr.mxu0 0.0
          %3627 = vmatpush1.msra.mxu0 0.0
          %3628 = vmatprep.subr.mxu0 0.0
          %3629 = vmatpush1.msra.mxu0 0.0
          %3630 = vmatprep.subr.mxu0 0.0
          %3631 = vmatpush1.msra.mxu0 0.0
          %3632 = vmatprep.subr.mxu0 0.0
          %3633 = vmatpush1.msra.mxu0 0.0
          %3634 = vmatprep.subr.mxu0 0.0
          %3635 = vmatpush1.msra.mxu0 0.0
          %3636 = vmatprep.subr.mxu0 0.0
          %3637 = vmatpush1.msra.mxu0 0.0
          %3638 = vmatprep.subr.mxu0 0.0
          %3639 = vmatpush1.msra.mxu0 0.0
          %3640 = vmatprep.subr.mxu0 0.0
          %3641 = vmatpush1.msra.mxu0 0.0
          %3642 = vmatprep.subr.mxu0 0.0
          %3643 = vmatpush1.msra.mxu0 0.0
          %3644 = vmatprep.subr.mxu0 0.0
          %3645 = vmatpush1.msra.mxu0 0.0
          %3646 = vmatprep.subr.mxu0 0.0
          %3647 = vmatpush1.msra.mxu0 0.0
          %3648 = vmatprep.subr.mxu0 0.0
          %3649 = vmatpush1.msra.mxu0 0.0
          %3650 = vmatprep.subr.mxu0 0.0
          %3651 = vmatpush1.msra.mxu0 0.0
          %3652 = vmatprep.subr.mxu0 0.0
          %3653 = vmatpush1.msra.mxu0 0.0
          %3654 = vmatprep.subr.mxu0 0.0
          %3655 = vmatpush1.msra.mxu0 0.0
          %3656 = vmatprep.subr.mxu0 0.0
          %3657 = vmatpush1.msra.mxu0 0.0
          %3658 = vmatprep.subr.mxu0 0.0
          %3659 = vmatpush1.msra.mxu0 0.0
          %3660 = vmatprep.subr.mxu0 0.0
          %3661 = vmatpush1.msra.mxu0 0.0
          %3662 = vmatprep.subr.mxu0 0.0
          %3663 = vmatpush1.msra.mxu0 0.0
          %3664 = vmatprep.subr.mxu0 0.0
          %3665 = vmatpush1.msra.mxu0 0.0
          %3666 = vmatprep.subr.mxu0 0.0
          %3667 = vmatpush1.msra.mxu0 0.0
          %3668 = vmatprep.subr.mxu0 0.0
          %3669 = vmatpush1.msra.mxu0 0.0
          %3670 = vmatprep.subr.mxu0 0.0
          %3671 = vmatpush1.msra.mxu0 0.0
          %3672 = vmatprep.subr.mxu0 0.0
          %3673 = vmatpush1.msra.mxu0 0.0
          %3674 = vmatprep.subr.mxu0 0.0
          %3675 = vmatpush1.msra.mxu0 0.0
          %3676 = vmatprep.subr.mxu0 0.0
          %3677 = vmatpush1.msra.mxu0 0.0
          %3678 = vmatprep.subr.mxu0 0.0
          %3679 = vmatpush1.msra.mxu0 0.0
          %3680 = vmatprep.mubr.f32.mxu0 0.0
          %3681 = vmatmul.mubr.f32.gmra.mrb[0].mxu0 %v1996
          %v3682 = vpop.f32.mrb[0].mxu0
          %v3683 = vadd.f32 0.0, %v3682
          %v3684 = vpop.f32.mrb[0].mxu0
          %3685 = vmatprep.mubr.f32.mxu0 0.0
          %3686 = vmatmul.mubr.f32.gmra.mrb[0].mxu0 %v1999
          %v3687 = vpop.f32.mrb[0].mxu0
          %v3688 = vadd.f32 0.0, %v3687
          %v3689 = vpop.f32.mrb[0].mxu0
          %3690 = vdwg.mxu0
          %3691 = vmatprep.subr.mxu0 0.0
          %3692 = vmatpush1.msra.mxu0 %v159
          %3693 = vmatprep.subr.mxu0 0.0
          %3694 = vmatpush1.msra.mxu0 %v160
          %3695 = vmatprep.subr.mxu0 0.0
          %3696 = vmatpush1.msra.mxu0 0.0
          %3697 = vmatprep.subr.mxu0 0.0
          %3698 = vmatpush1.msra.mxu0 0.0
          %3699 = vmatprep.subr.mxu0 0.0
          %3700 = vmatpush1.msra.mxu0 0.0
          %3701 = vmatprep.subr.mxu0 0.0
          %3702 = vmatpush1.msra.mxu0 0.0
          %3703 = vmatprep.subr.mxu0 0.0
          %3704 = vmatpush1.msra.mxu0 0.0
          %3705 = vmatprep.subr.mxu0 0.0
          %3706 = vmatpush1.msra.mxu0 0.0
          %3707 = vmatprep.subr.mxu0 0.0
          %3708 = vmatpush1.msra.mxu0 0.0
          %3709 = vmatprep.subr.mxu0 0.0
          %3710 = vmatpush1.msra.mxu0 0.0
          %3711 = vmatprep.subr.mxu0 0.0
          %3712 = vmatpush1.msra.mxu0 0.0
          %3713 = vmatprep.subr.mxu0 0.0
          %3714 = vmatpush1.msra.mxu0 0.0
          %3715 = vmatprep.subr.mxu0 0.0
          %3716 = vmatpush1.msra.mxu0 0.0
          %3717 = vmatprep.subr.mxu0 0.0
          %3718 = vmatpush1.msra.mxu0 0.0
          %3719 = vmatprep.subr.mxu0 0.0
          %3720 = vmatpush1.msra.mxu0 0.0
          %3721 = vmatprep.subr.mxu0 0.0
          %3722 = vmatpush1.msra.mxu0 0.0
          %3723 = vmatprep.subr.mxu0 0.0
          %3724 = vmatpush1.msra.mxu0 0.0
          %3725 = vmatprep.subr.mxu0 0.0
          %3726 = vmatpush1.msra.mxu0 0.0
          %3727 = vmatprep.subr.mxu0 0.0
          %3728 = vmatpush1.msra.mxu0 0.0
          %3729 = vmatprep.subr.mxu0 0.0
          %3730 = vmatpush1.msra.mxu0 0.0
          %3731 = vmatprep.subr.mxu0 0.0
          %3732 = vmatpush1.msra.mxu0 0.0
          %3733 = vmatprep.subr.mxu0 0.0
          %3734 = vmatpush1.msra.mxu0 0.0
          %3735 = vmatprep.subr.mxu0 0.0
          %3736 = vmatpush1.msra.mxu0 0.0
          %3737 = vmatprep.subr.mxu0 0.0
          %3738 = vmatpush1.msra.mxu0 0.0
          %3739 = vmatprep.subr.mxu0 0.0
          %3740 = vmatpush1.msra.mxu0 0.0
          %3741 = vmatprep.subr.mxu0 0.0
          %3742 = vmatpush1.msra.mxu0 0.0
          %3743 = vmatprep.subr.mxu0 0.0
          %3744 = vmatpush1.msra.mxu0 0.0
          %3745 = vmatprep.subr.mxu0 0.0
          %3746 = vmatpush1.msra.mxu0 0.0
          %3747 = vmatprep.subr.mxu0 0.0
          %3748 = vmatpush1.msra.mxu0 0.0
          %3749 = vmatprep.subr.mxu0 0.0
          %3750 = vmatpush1.msra.mxu0 0.0
          %3751 = vmatprep.subr.mxu0 0.0
          %3752 = vmatpush1.msra.mxu0 0.0
          %3753 = vmatprep.subr.mxu0 0.0
          %3754 = vmatpush1.msra.mxu0 0.0
          %3755 = vmatprep.mubr.f32.mxu0 0.0
          %3756 = vmatmul.mubr.f32.gmra.mrb[0].mxu0 %v2077
          %v3757 = vpop.f32.mrb[0].mxu0
          %v3758 = vadd.f32 0.0, %v3757
          %v3759 = vpop.f32.mrb[0].mxu0
          %3760 = vmatprep.mubr.f32.mxu0 0.0
          %3761 = vmatmul.mubr.f32.gmra.mrb[0].mxu0 %v2080
          %v3762 = vpop.f32.mrb[0].mxu0
          %v3763 = vadd.f32 0.0, %v3762
          %v3764 = vpop.f32.mrb[0].mxu0
          %3765 = vdwg.mxu0
          %3766 = vmatprep.subr.mxu0 0.0
          %3767 = vmatpush1.msra.mxu0 %v159
          %3768 = vmatprep.subr.mxu0 0.0
          %3769 = vmatpush1.msra.mxu0 %v160
          %3770 = vmatprep.subr.mxu0 0.0
          %3771 = vmatpush1.msra.mxu0 0.0
          %3772 = vmatprep.subr.mxu0 0.0
          %3773 = vmatpush1.msra.mxu0 0.0
          %3774 = vmatprep.subr.mxu0 0.0
          %3775 = vmatpush1.msra.mxu0 0.0
          %3776 = vmatprep.subr.mxu0 0.0
          %3777 = vmatpush1.msra.mxu0 0.0
          %3778 = vmatprep.subr.mxu0 0.0
          %3779 = vmatpush1.msra.mxu0 0.0
          %3780 = vmatprep.subr.mxu0 0.0
          %3781 = vmatpush1.msra.mxu0 0.0
          %3782 = vmatprep.subr.mxu0 0.0
          %3783 = vmatpush1.msra.mxu0 0.0
          %3784 = vmatprep.subr.mxu0 0.0
          %3785 = vmatpush1.msra.mxu0 0.0
          %3786 = vmatprep.subr.mxu0 0.0
          %3787 = vmatpush1.msra.mxu0 0.0
          %3788 = vmatprep.subr.mxu0 0.0
          %3789 = vmatpush1.msra.mxu0 0.0
          %3790 = vmatprep.subr.mxu0 0.0
          %3791 = vmatpush1.msra.mxu0 0.0
          %3792 = vmatprep.subr.mxu0 0.0
          %3793 = vmatpush1.msra.mxu0 0.0
          %3794 = vmatprep.subr.mxu0 0.0
          %3795 = vmatpush1.msra.mxu0 0.0
          %3796 = vmatprep.subr.mxu0 0.0
          %3797 = vmatpush1.msra.mxu0 0.0
          %3798 = vmatprep.subr.mxu0 0.0
          %3799 = vmatpush1.msra.mxu0 0.0
          %3800 = vmatprep.subr.mxu0 0.0
          %3801 = vmatpush1.msra.mxu0 0.0
          %3802 = vmatprep.subr.mxu0 0.0
          %3803 = vmatpush1.msra.mxu0 0.0
          %3804 = vmatprep.subr.mxu0 0.0
          %3805 = vmatpush1.msra.mxu0 0.0
          %3806 = vmatprep.subr.mxu0 0.0
          %3807 = vmatpush1.msra.mxu0 0.0
          %3808 = vmatprep.subr.mxu0 0.0
          %3809 = vmatpush1.msra.mxu0 0.0
          %3810 = vmatprep.subr.mxu0 0.0
          %3811 = vmatpush1.msra.mxu0 0.0
          %3812 = vmatprep.subr.mxu0 0.0
          %3813 = vmatpush1.msra.mxu0 0.0
          %3814 = vmatprep.subr.mxu0 0.0
          %3815 = vmatpush1.msra.mxu0 0.0
          %3816 = vmatprep.subr.mxu0 0.0
          %3817 = vmatpush1.msra.mxu0 0.0
          %3818 = vmatprep.subr.mxu0 0.0
          %3819 = vmatpush1.msra.mxu0 0.0
          %3820 = vmatprep.subr.mxu0 0.0
          %3821 = vmatpush1.msra.mxu0 0.0
          %3822 = vmatprep.subr.mxu0 0.0
          %3823 = vmatpush1.msra.mxu0 0.0
          %3824 = vmatprep.subr.mxu0 0.0
          %3825 = vmatpush1.msra.mxu0 0.0
          %3826 = vmatprep.subr.mxu0 0.0
          %3827 = vmatpush1.msra.mxu0 0.0
          %3828 = vmatprep.subr.mxu0 0.0
          %3829 = vmatpush1.msra.mxu0 0.0
          %3830 = vmatprep.mubr.f32.mxu0 0.0
          %3831 = vmatmul.mubr.f32.gmra.mrb[0].mxu0 %v2158
          %v3832 = vpop.f32.mrb[0].mxu0
          %v3833 = vadd.f32 0.0, %v3832
          %v3834 = vpop.f32.mrb[0].mxu0
          %3835 = vmatprep.mubr.f32.mxu0 0.0
          %3836 = vmatmul.mubr.f32.gmra.mrb[0].mxu0 %v2161
          %v3837 = vpop.f32.mrb[0].mxu0
          %v3838 = vadd.f32 0.0, %v3837
          %v3839 = vpop.f32.mrb[0].mxu0
          %3840 = vdwg.mxu0
          %3841 = vmatprep.subr.mxu0 0.0
          %3842 = vmatpush1.msra.mxu0 %v159
          %3843 = vmatprep.subr.mxu0 0.0
          %3844 = vmatpush1.msra.mxu0 %v160
          %3845 = vmatprep.subr.mxu0 0.0
          %3846 = vmatpush1.msra.mxu0 0.0
          %3847 = vmatprep.subr.mxu0 0.0
          %3848 = vmatpush1.msra.mxu0 0.0
          %3849 = vmatprep.subr.mxu0 0.0
          %3850 = vmatpush1.msra.mxu0 0.0
          %3851 = vmatprep.subr.mxu0 0.0
          %3852 = vmatpush1.msra.mxu0 0.0
          %3853 = vmatprep.subr.mxu0 0.0
          %3854 = vmatpush1.msra.mxu0 0.0
          %3855 = vmatprep.subr.mxu0 0.0
          %3856 = vmatpush1.msra.mxu0 0.0
          %3857 = vmatprep.subr.mxu0 0.0
          %3858 = vmatpush1.msra.mxu0 0.0
          %3859 = vmatprep.subr.mxu0 0.0
          %3860 = vmatpush1.msra.mxu0 0.0
          %3861 = vmatprep.subr.mxu0 0.0
          %3862 = vmatpush1.msra.mxu0 0.0
          %3863 = vmatprep.subr.mxu0 0.0
          %3864 = vmatpush1.msra.mxu0 0.0
          %3865 = vmatprep.subr.mxu0 0.0
          %3866 = vmatpush1.msra.mxu0 0.0
          %3867 = vmatprep.subr.mxu0 0.0
          %3868 = vmatpush1.msra.mxu0 0.0
          %3869 = vmatprep.subr.mxu0 0.0
          %3870 = vmatpush1.msra.mxu0 0.0
          %3871 = vmatprep.subr.mxu0 0.0
          %3872 = vmatpush1.msra.mxu0 0.0
          %3873 = vmatprep.subr.mxu0 0.0
          %3874 = vmatpush1.msra.mxu0 0.0
          %3875 = vmatprep.subr.mxu0 0.0
          %3876 = vmatpush1.msra.mxu0 0.0
          %3877 = vmatprep.subr.mxu0 0.0
          %3878 = vmatpush1.msra.mxu0 0.0
          %3879 = vmatprep.subr.mxu0 0.0
          %3880 = vmatpush1.msra.mxu0 0.0
          %3881 = vmatprep.subr.mxu0 0.0
          %3882 = vmatpush1.msra.mxu0 0.0
          %3883 = vmatprep.subr.mxu0 0.0
          %3884 = vmatpush1.msra.mxu0 0.0
          %3885 = vmatprep.subr.mxu0 0.0
          %3886 = vmatpush1.msra.mxu0 0.0
          %3887 = vmatprep.subr.mxu0 0.0
          %3888 = vmatpush1.msra.mxu0 0.0
          %3889 = vmatprep.subr.mxu0 0.0
          %3890 = vmatpush1.msra.mxu0 0.0
          %3891 = vmatprep.subr.mxu0 0.0
          %3892 = vmatpush1.msra.mxu0 0.0
          %3893 = vmatprep.subr.mxu0 0.0
          %3894 = vmatpush1.msra.mxu0 0.0
          %3895 = vmatprep.subr.mxu0 0.0
          %3896 = vmatpush1.msra.mxu0 0.0
          %3897 = vmatprep.subr.mxu0 0.0
          %3898 = vmatpush1.msra.mxu0 0.0
          %3899 = vmatprep.subr.mxu0 0.0
          %3900 = vmatpush1.msra.mxu0 0.0
          %3901 = vmatprep.subr.mxu0 0.0
          %3902 = vmatpush1.msra.mxu0 0.0
          %3903 = vmatprep.subr.mxu0 0.0
          %3904 = vmatpush1.msra.mxu0 0.0
          %3905 = vmatprep.mubr.f32.mxu0 0.0
          %3906 = vmatmul.mubr.f32.gmra.mrb[0].mxu0 %v2239
          %v3907 = vpop.f32.mrb[0].mxu0
          %v3908 = vadd.f32 0.0, %v3907
          %v3909 = vpop.f32.mrb[0].mxu0
          %3910 = vmatprep.mubr.f32.mxu0 0.0
          %3911 = vmatmul.mubr.f32.gmra.mrb[0].mxu0 %v2242
          %v3912 = vpop.f32.mrb[0].mxu0
          %v3913 = vadd.f32 0.0, %v3912
          %v3914 = vpop.f32.mrb[0].mxu0
          %3915 = vdwg.mxu0
          %3916 = vmatprep.subr.mxu0 0.0
          %3917 = vmatpush1.msra.mxu0 %v159
          %3918 = vmatprep.subr.mxu0 0.0
          %3919 = vmatpush1.msra.mxu0 %v160
          %3920 = vmatprep.subr.mxu0 0.0
          %3921 = vmatpush1.msra.mxu0 0.0
          %3922 = vmatprep.subr.mxu0 0.0
          %3923 = vmatpush1.msra.mxu0 0.0
          %3924 = vmatprep.subr.mxu0 0.0
          %3925 = vmatpush1.msra.mxu0 0.0
          %3926 = vmatprep.subr.mxu0 0.0
          %3927 = vmatpush1.msra.mxu0 0.0
          %3928 = vmatprep.subr.mxu0 0.0
          %3929 = vmatpush1.msra.mxu0 0.0
          %3930 = vmatprep.subr.mxu0 0.0
          %3931 = vmatpush1.msra.mxu0 0.0
          %3932 = vmatprep.subr.mxu0 0.0
          %3933 = vmatpush1.msra.mxu0 0.0
          %3934 = vmatprep.subr.mxu0 0.0
          %3935 = vmatpush1.msra.mxu0 0.0
          %3936 = vmatprep.subr.mxu0 0.0
          %3937 = vmatpush1.msra.mxu0 0.0
          %3938 = vmatprep.subr.mxu0 0.0
          %3939 = vmatpush1.msra.mxu0 0.0
          %3940 = vmatprep.subr.mxu0 0.0
          %3941 = vmatpush1.msra.mxu0 0.0
          %3942 = vmatprep.subr.mxu0 0.0
          %3943 = vmatpush1.msra.mxu0 0.0
          %3944 = vmatprep.subr.mxu0 0.0
          %3945 = vmatpush1.msra.mxu0 0.0
          %3946 = vmatprep.subr.mxu0 0.0
          %3947 = vmatpush1.msra.mxu0 0.0
          %3948 = vmatprep.subr.mxu0 0.0
          %3949 = vmatpush1.msra.mxu0 0.0
          %3950 = vmatprep.subr.mxu0 0.0
          %3951 = vmatpush1.msra.mxu0 0.0
          %3952 = vmatprep.subr.mxu0 0.0
          %3953 = vmatpush1.msra.mxu0 0.0
          %3954 = vmatprep.subr.mxu0 0.0
          %3955 = vmatpush1.msra.mxu0 0.0
          %3956 = vmatprep.subr.mxu0 0.0
          %3957 = vmatpush1.msra.mxu0 0.0
          %3958 = vmatprep.subr.mxu0 0.0
          %3959 = vmatpush1.msra.mxu0 0.0
          %3960 = vmatprep.subr.mxu0 0.0
          %3961 = vmatpush1.msra.mxu0 0.0
          %3962 = vmatprep.subr.mxu0 0.0
          %3963 = vmatpush1.msra.mxu0 0.0
          %3964 = vmatprep.subr.mxu0 0.0
          %3965 = vmatpush1.msra.mxu0 0.0
          %3966 = vmatprep.subr.mxu0 0.0
          %3967 = vmatpush1.msra.mxu0 0.0
          %3968 = vmatprep.subr.mxu0 0.0
          %3969 = vmatpush1.msra.mxu0 0.0
          %3970 = vmatprep.subr.mxu0 0.0
          %3971 = vmatpush1.msra.mxu0 0.0
          %3972 = vmatprep.subr.mxu0 0.0
          %3973 = vmatpush1.msra.mxu0 0.0
          %3974 = vmatprep.subr.mxu0 0.0
          %3975 = vmatpush1.msra.mxu0 0.0
          %3976 = vmatprep.subr.mxu0 0.0
          %3977 = vmatpush1.msra.mxu0 0.0
          %3978 = vmatprep.subr.mxu0 0.0
          %3979 = vmatpush1.msra.mxu0 0.0
          %3980 = vmatprep.mubr.f32.mxu0 0.0
          %3981 = vmatmul.mubr.f32.gmra.mrb[0].mxu0 %v2320
          %v3982 = vpop.f32.mrb[0].mxu0
          %v3983 = vadd.f32 0.0, %v3982
          %v3984 = vpop.f32.mrb[0].mxu0
          %3985 = vmatprep.mubr.f32.mxu0 0.0
          %3986 = vmatmul.mubr.f32.gmra.mrb[0].mxu0 %v2323
          %v3987 = vpop.f32.mrb[0].mxu0
          %v3988 = vadd.f32 0.0, %v3987
          %v3989 = vpop.f32.mrb[0].mxu0
          %3990 = vdwg.mxu0
          %3991 = vmatprep.subr.mxu0 0.0
          %3992 = vmatpush1.msra.mxu0 %v159
          %3993 = vmatprep.subr.mxu0 0.0
          %3994 = vmatpush1.msra.mxu0 %v160
          %3995 = vmatprep.subr.mxu0 0.0
          %3996 = vmatpush1.msra.mxu0 0.0
          %3997 = vmatprep.subr.mxu0 0.0
          %3998 = vmatpush1.msra.mxu0 0.0
          %3999 = vmatprep.subr.mxu0 0.0
          %4000 = vmatpush1.msra.mxu0 0.0
          %4001 = vmatprep.subr.mxu0 0.0
          %4002 = vmatpush1.msra.mxu0 0.0
          %4003 = vmatprep.subr.mxu0 0.0
          %4004 = vmatpush1.msra.mxu0 0.0
          %4005 = vmatprep.subr.mxu0 0.0
          %4006 = vmatpush1.msra.mxu0 0.0
          %4007 = vmatprep.subr.mxu0 0.0
          %4008 = vmatpush1.msra.mxu0 0.0
          %4009 = vmatprep.subr.mxu0 0.0
          %4010 = vmatpush1.msra.mxu0 0.0
          %4011 = vmatprep.subr.mxu0 0.0
          %4012 = vmatpush1.msra.mxu0 0.0
          %4013 = vmatprep.subr.mxu0 0.0
          %4014 = vmatpush1.msra.mxu0 0.0
          %4015 = vmatprep.subr.mxu0 0.0
          %4016 = vmatpush1.msra.mxu0 0.0
          %4017 = vmatprep.subr.mxu0 0.0
          %4018 = vmatpush1.msra.mxu0 0.0
          %4019 = vmatprep.subr.mxu0 0.0
          %4020 = vmatpush1.msra.mxu0 0.0
          %4021 = vmatprep.subr.mxu0 0.0
          %4022 = vmatpush1.msra.mxu0 0.0
          %4023 = vmatprep.subr.mxu0 0.0
          %4024 = vmatpush1.msra.mxu0 0.0
          %4025 = vmatprep.subr.mxu0 0.0
          %4026 = vmatpush1.msra.mxu0 0.0
          %4027 = vmatprep.subr.mxu0 0.0
          %4028 = vmatpush1.msra.mxu0 0.0
          %4029 = vmatprep.subr.mxu0 0.0
          %4030 = vmatpush1.msra.mxu0 0.0
          %4031 = vmatprep.subr.mxu0 0.0
          %4032 = vmatpush1.msra.mxu0 0.0
          %4033 = vmatprep.subr.mxu0 0.0
          %4034 = vmatpush1.msra.mxu0 0.0
          %4035 = vmatprep.subr.mxu0 0.0
          %4036 = vmatpush1.msra.mxu0 0.0
          %4037 = vmatprep.subr.mxu0 0.0
          %4038 = vmatpush1.msra.mxu0 0.0
          %4039 = vmatprep.subr.mxu0 0.0
          %4040 = vmatpush1.msra.mxu0 0.0
          %4041 = vmatprep.subr.mxu0 0.0
          %4042 = vmatpush1.msra.mxu0 0.0
          %4043 = vmatprep.subr.mxu0 0.0
          %4044 = vmatpush1.msra.mxu0 0.0
          %4045 = vmatprep.subr.mxu0 0.0
          %4046 = vmatpush1.msra.mxu0 0.0
          %4047 = vmatprep.subr.mxu0 0.0
          %4048 = vmatpush1.msra.mxu0 0.0
          %4049 = vmatprep.subr.mxu0 0.0
          %4050 = vmatpush1.msra.mxu0 0.0
          %4051 = vmatprep.subr.mxu0 0.0
          %4052 = vmatpush1.msra.mxu0 0.0
          %4053 = vmatprep.subr.mxu0 0.0
          %4054 = vmatpush1.msra.mxu0 0.0
          %4055 = vmatprep.mubr.f32.mxu0 0.0
          %4056 = vmatmul.mubr.f32.gmra.mrb[0].mxu0 %v2401
          %v4057 = vpop.f32.mrb[0].mxu0
          %v4058 = vadd.f32 0.0, %v4057
          %v4059 = vpop.f32.mrb[0].mxu0
          %4060 = vmatprep.mubr.f32.mxu0 0.0
          %4061 = vmatmul.mubr.f32.gmra.mrb[0].mxu0 %v2404
          %v4062 = vpop.f32.mrb[0].mxu0
          %v4063 = vadd.f32 0.0, %v4062
          %v4064 = vpop.f32.mrb[0].mxu0
          %4065 = vdwg.mxu0
          %4066 = vmatprep.subr.mxu0 0.0
          %4067 = vmatpush1.msra.mxu0 %v159
          %4068 = vmatprep.subr.mxu0 0.0
          %4069 = vmatpush1.msra.mxu0 %v160
          %4070 = vmatprep.subr.mxu0 0.0
          %4071 = vmatpush1.msra.mxu0 0.0
          %4072 = vmatprep.subr.mxu0 0.0
          %4073 = vmatpush1.msra.mxu0 0.0
          %4074 = vmatprep.subr.mxu0 0.0
          %4075 = vmatpush1.msra.mxu0 0.0
          %4076 = vmatprep.subr.mxu0 0.0
          %4077 = vmatpush1.msra.mxu0 0.0
          %4078 = vmatprep.subr.mxu0 0.0
          %4079 = vmatpush1.msra.mxu0 0.0
          %4080 = vmatprep.subr.mxu0 0.0
          %4081 = vmatpush1.msra.mxu0 0.0
          %4082 = vmatprep.subr.mxu0 0.0
          %4083 = vmatpush1.msra.mxu0 0.0
          %4084 = vmatprep.subr.mxu0 0.0
          %4085 = vmatpush1.msra.mxu0 0.0
          %4086 = vmatprep.subr.mxu0 0.0
          %4087 = vmatpush1.msra.mxu0 0.0
          %4088 = vmatprep.subr.mxu0 0.0
          %4089 = vmatpush1.msra.mxu0 0.0
          %4090 = vmatprep.subr.mxu0 0.0
          %4091 = vmatpush1.msra.mxu0 0.0
          %4092 = vmatprep.subr.mxu0 0.0
          %4093 = vmatpush1.msra.mxu0 0.0
          %4094 = vmatprep.subr.mxu0 0.0
          %4095 = vmatpush1.msra.mxu0 0.0
          %4096 = vmatprep.subr.mxu0 0.0
          %4097 = vmatpush1.msra.mxu0 0.0
          %4098 = vmatprep.subr.mxu0 0.0
          %4099 = vmatpush1.msra.mxu0 0.0
          %4100 = vmatprep.subr.mxu0 0.0
          %4101 = vmatpush1.msra.mxu0 0.0
          %4102 = vmatprep.subr.mxu0 0.0
          %4103 = vmatpush1.msra.mxu0 0.0
          %4104 = vmatprep.subr.mxu0 0.0
          %4105 = vmatpush1.msra.mxu0 0.0
          %4106 = vmatprep.subr.mxu0 0.0
          %4107 = vmatpush1.msra.mxu0 0.0
          %4108 = vmatprep.subr.mxu0 0.0
          %4109 = vmatpush1.msra.mxu0 0.0
          %4110 = vmatprep.subr.mxu0 0.0
          %4111 = vmatpush1.msra.mxu0 0.0
          %4112 = vmatprep.subr.mxu0 0.0
          %4113 = vmatpush1.msra.mxu0 0.0
          %4114 = vmatprep.subr.mxu0 0.0
          %4115 = vmatpush1.msra.mxu0 0.0
          %4116 = vmatprep.subr.mxu0 0.0
          %4117 = vmatpush1.msra.mxu0 0.0
          %4118 = vmatprep.subr.mxu0 0.0
          %4119 = vmatpush1.msra.mxu0 0.0
          %4120 = vmatprep.subr.mxu0 0.0
          %4121 = vmatpush1.msra.mxu0 0.0
          %4122 = vmatprep.subr.mxu0 0.0
          %4123 = vmatpush1.msra.mxu0 0.0
          %4124 = vmatprep.subr.mxu0 0.0
          %4125 = vmatpush1.msra.mxu0 0.0
          %4126 = vmatprep.subr.mxu0 0.0
          %4127 = vmatpush1.msra.mxu0 0.0
          %4128 = vmatprep.subr.mxu0 0.0
          %4129 = vmatpush1.msra.mxu0 0.0
          %4130 = vmatprep.mubr.f32.mxu0 0.0
          %4131 = vmatmul.mubr.f32.gmra.mrb[0].mxu0 %v2482
          %v4132 = vpop.f32.mrb[0].mxu0
          %v4133 = vadd.f32 0.0, %v4132
          %v4134 = vpop.f32.mrb[0].mxu0
          %4135 = vmatprep.mubr.f32.mxu0 0.0
          %4136 = vmatmul.mubr.f32.gmra.mrb[0].mxu0 %v2485
          %v4137 = vpop.f32.mrb[0].mxu0
          %v4138 = vadd.f32 0.0, %v4137
          %v4139 = vpop.f32.mrb[0].mxu0
          %4140 = vdwg.mxu0
          %4141 = vmatprep.subr.mxu0 0.0
          %4142 = vmatpush1.msra.mxu0 %v159
          %4143 = vmatprep.subr.mxu0 0.0
          %4144 = vmatpush1.msra.mxu0 %v160
          %4145 = vmatprep.subr.mxu0 0.0
          %4146 = vmatpush1.msra.mxu0 0.0
          %4147 = vmatprep.subr.mxu0 0.0
          %4148 = vmatpush1.msra.mxu0 0.0
          %4149 = vmatprep.subr.mxu0 0.0
          %4150 = vmatpush1.msra.mxu0 0.0
          %4151 = vmatprep.subr.mxu0 0.0
          %4152 = vmatpush1.msra.mxu0 0.0
          %4153 = vmatprep.subr.mxu0 0.0
          %4154 = vmatpush1.msra.mxu0 0.0
          %4155 = vmatprep.subr.mxu0 0.0
          %4156 = vmatpush1.msra.mxu0 0.0
          %4157 = vmatprep.subr.mxu0 0.0
          %4158 = vmatpush1.msra.mxu0 0.0
          %4159 = vmatprep.subr.mxu0 0.0
          %4160 = vmatpush1.msra.mxu0 0.0
          %4161 = vmatprep.subr.mxu0 0.0
          %4162 = vmatpush1.msra.mxu0 0.0
          %4163 = vmatprep.subr.mxu0 0.0
          %4164 = vmatpush1.msra.mxu0 0.0
          %4165 = vmatprep.subr.mxu0 0.0
          %4166 = vmatpush1.msra.mxu0 0.0
          %4167 = vmatprep.subr.mxu0 0.0
          %4168 = vmatpush1.msra.mxu0 0.0
          %4169 = vmatprep.subr.mxu0 0.0
          %4170 = vmatpush1.msra.mxu0 0.0
          %4171 = vmatprep.subr.mxu0 0.0
          %4172 = vmatpush1.msra.mxu0 0.0
          %4173 = vmatprep.subr.mxu0 0.0
          %4174 = vmatpush1.msra.mxu0 0.0
          %4175 = vmatprep.subr.mxu0 0.0
          %4176 = vmatpush1.msra.mxu0 0.0
          %4177 = vmatprep.subr.mxu0 0.0
          %4178 = vmatpush1.msra.mxu0 0.0
          %4179 = vmatprep.subr.mxu0 0.0
          %4180 = vmatpush1.msra.mxu0 0.0
          %4181 = vmatprep.subr.mxu0 0.0
          %4182 = vmatpush1.msra.mxu0 0.0
          %4183 = vmatprep.subr.mxu0 0.0
          %4184 = vmatpush1.msra.mxu0 0.0
          %4185 = vmatprep.subr.mxu0 0.0
          %4186 = vmatpush1.msra.mxu0 0.0
          %4187 = vmatprep.subr.mxu0 0.0
          %4188 = vmatpush1.msra.mxu0 0.0
          %4189 = vmatprep.subr.mxu0 0.0
          %4190 = vmatpush1.msra.mxu0 0.0
          %4191 = vmatprep.subr.mxu0 0.0
          %4192 = vmatpush1.msra.mxu0 0.0
          %4193 = vmatprep.subr.mxu0 0.0
          %4194 = vmatpush1.msra.mxu0 0.0
          %4195 = vmatprep.subr.mxu0 0.0
          %4196 = vmatpush1.msra.mxu0 0.0
          %4197 = vmatprep.subr.mxu0 0.0
          %4198 = vmatpush1.msra.mxu0 0.0
          %4199 = vmatprep.subr.mxu0 0.0
          %4200 = vmatpush1.msra.mxu0 0.0
          %4201 = vmatprep.subr.mxu0 0.0
          %4202 = vmatpush1.msra.mxu0 0.0
          %4203 = vmatprep.subr.mxu0 0.0
          %4204 = vmatpush1.msra.mxu0 0.0
          %4205 = vmatprep.mubr.f32.mxu0 0.0
          %4206 = vmatmul.mubr.f32.gmra.mrb[0].mxu0 %v2563
          %v4207 = vpop.f32.mrb[0].mxu0
          %v4208 = vadd.f32 0.0, %v4207
          %v4209 = vpop.f32.mrb[0].mxu0
          %4210 = vmatprep.mubr.f32.mxu0 0.0
          %4211 = vmatmul.mubr.f32.gmra.mrb[0].mxu0 %v2566
          %v4212 = vpop.f32.mrb[0].mxu0
          %v4213 = vadd.f32 0.0, %v4212
          %v4214 = vpop.f32.mrb[0].mxu0
          %4215 = vdwg.mxu0
          %4216 = vmatprep.subr.mxu0 0.0
          %4217 = vmatpush1.msra.mxu0 %v159
          %4218 = vmatprep.subr.mxu0 0.0
          %4219 = vmatpush1.msra.mxu0 %v160
          %4220 = vmatprep.subr.mxu0 0.0
          %4221 = vmatpush1.msra.mxu0 0.0
          %4222 = vmatprep.subr.mxu0 0.0
          %4223 = vmatpush1.msra.mxu0 0.0
          %4224 = vmatprep.subr.mxu0 0.0
          %4225 = vmatpush1.msra.mxu0 0.0
          %4226 = vmatprep.subr.mxu0 0.0
          %4227 = vmatpush1.msra.mxu0 0.0
          %4228 = vmatprep.subr.mxu0 0.0
          %4229 = vmatpush1.msra.mxu0 0.0
          %4230 = vmatprep.subr.mxu0 0.0
          %4231 = vmatpush1.msra.mxu0 0.0
          %4232 = vmatprep.subr.mxu0 0.0
          %4233 = vmatpush1.msra.mxu0 0.0
          %4234 = vmatprep.subr.mxu0 0.0
          %4235 = vmatpush1.msra.mxu0 0.0
          %4236 = vmatprep.subr.mxu0 0.0
          %4237 = vmatpush1.msra.mxu0 0.0
          %4238 = vmatprep.subr.mxu0 0.0
          %4239 = vmatpush1.msra.mxu0 0.0
          %4240 = vmatprep.subr.mxu0 0.0
          %4241 = vmatpush1.msra.mxu0 0.0
          %4242 = vmatprep.subr.mxu0 0.0
          %4243 = vmatpush1.msra.mxu0 0.0
          %4244 = vmatprep.subr.mxu0 0.0
          %4245 = vmatpush1.msra.mxu0 0.0
          %4246 = vmatprep.subr.mxu0 0.0
          %4247 = vmatpush1.msra.mxu0 0.0
          %4248 = vmatprep.subr.mxu0 0.0
          %4249 = vmatpush1.msra.mxu0 0.0
          %4250 = vmatprep.subr.mxu0 0.0
          %4251 = vmatpush1.msra.mxu0 0.0
          %4252 = vmatprep.subr.mxu0 0.0
          %4253 = vmatpush1.msra.mxu0 0.0
          %4254 = vmatprep.subr.mxu0 0.0
          %4255 = vmatpush1.msra.mxu0 0.0
          %4256 = vmatprep.subr.mxu0 0.0
          %4257 = vmatpush1.msra.mxu0 0.0
          %4258 = vmatprep.subr.mxu0 0.0
          %4259 = vmatpush1.msra.mxu0 0.0
          %4260 = vmatprep.subr.mxu0 0.0
          %4261 = vmatpush1.msra.mxu0 0.0
          %4262 = vmatprep.subr.mxu0 0.0
          %4263 = vmatpush1.msra.mxu0 0.0
          %4264 = vmatprep.subr.mxu0 0.0
          %4265 = vmatpush1.msra.mxu0 0.0
          %4266 = vmatprep.subr.mxu0 0.0
          %4267 = vmatpush1.msra.mxu0 0.0
          %4268 = vmatprep.subr.mxu0 0.0
          %4269 = vmatpush1.msra.mxu0 0.0
          %4270 = vmatprep.subr.mxu0 0.0
          %4271 = vmatpush1.msra.mxu0 0.0
          %4272 = vmatprep.subr.mxu0 0.0
          %4273 = vmatpush1.msra.mxu0 0.0
          %4274 = vmatprep.subr.mxu0 0.0
          %4275 = vmatpush1.msra.mxu0 0.0
          %4276 = vmatprep.subr.mxu0 0.0
          %4277 = vmatpush1.msra.mxu0 0.0
          %4278 = vmatprep.subr.mxu0 0.0
          %4279 = vmatpush1.msra.mxu0 0.0
          %4280 = vmatprep.mubr.f32.mxu0 0.0
          %4281 = vmatmul.mubr.f32.gmra.mrb[0].mxu0 %v2644
          %v4282 = vpop.f32.mrb[0].mxu0
          %v4283 = vadd.f32 0.0, %v4282
          %v4284 = vpop.f32.mrb[0].mxu0
          %4285 = vmatprep.mubr.f32.mxu0 0.0
          %4286 = vmatmul.mubr.f32.gmra.mrb[0].mxu0 %v2647
          %v4287 = vpop.f32.mrb[0].mxu0
          %v4288 = vadd.f32 0.0, %v4287
          %v4289 = vpop.f32.mrb[0].mxu0
          %4290 = vdwg.mxu0
          %4291 = vmatprep.subr.mxu0 0.0
          %4292 = vmatpush1.msra.mxu0 %v159
          %4293 = vmatprep.subr.mxu0 0.0
          %4294 = vmatpush1.msra.mxu0 %v160
          %4295 = vmatprep.subr.mxu0 0.0
          %4296 = vmatpush1.msra.mxu0 0.0
          %4297 = vmatprep.subr.mxu0 0.0
          %4298 = vmatpush1.msra.mxu0 0.0
          %4299 = vmatprep.subr.mxu0 0.0
          %4300 = vmatpush1.msra.mxu0 0.0
          %4301 = vmatprep.subr.mxu0 0.0
          %4302 = vmatpush1.msra.mxu0 0.0
          %4303 = vmatprep.subr.mxu0 0.0
          %4304 = vmatpush1.msra.mxu0 0.0
          %4305 = vmatprep.subr.mxu0 0.0
          %4306 = vmatpush1.msra.mxu0 0.0
          %4307 = vmatprep.subr.mxu0 0.0
          %4308 = vmatpush1.msra.mxu0 0.0
          %4309 = vmatprep.subr.mxu0 0.0
          %4310 = vmatpush1.msra.mxu0 0.0
          %4311 = vmatprep.subr.mxu0 0.0
          %4312 = vmatpush1.msra.mxu0 0.0
          %4313 = vmatprep.subr.mxu0 0.0
          %4314 = vmatpush1.msra.mxu0 0.0
          %4315 = vmatprep.subr.mxu0 0.0
          %4316 = vmatpush1.msra.mxu0 0.0
          %4317 = vmatprep.subr.mxu0 0.0
          %4318 = vmatpush1.msra.mxu0 0.0
          %4319 = vmatprep.subr.mxu0 0.0
          %4320 = vmatpush1.msra.mxu0 0.0
          %4321 = vmatprep.subr.mxu0 0.0
          %4322 = vmatpush1.msra.mxu0 0.0
          %4323 = vmatprep.subr.mxu0 0.0
          %4324 = vmatpush1.msra.mxu0 0.0
          %4325 = vmatprep.subr.mxu0 0.0
          %4326 = vmatpush1.msra.mxu0 0.0
          %4327 = vmatprep.subr.mxu0 0.0
          %4328 = vmatpush1.msra.mxu0 0.0
          %4329 = vmatprep.subr.mxu0 0.0
          %4330 = vmatpush1.msra.mxu0 0.0
          %4331 = vmatprep.subr.mxu0 0.0
          %4332 = vmatpush1.msra.mxu0 0.0
          %4333 = vmatprep.subr.mxu0 0.0
          %4334 = vmatpush1.msra.mxu0 0.0
          %4335 = vmatprep.subr.mxu0 0.0
          %4336 = vmatpush1.msra.mxu0 0.0
          %4337 = vmatprep.subr.mxu0 0.0
          %4338 = vmatpush1.msra.mxu0 0.0
          %4339 = vmatprep.subr.mxu0 0.0
          %4340 = vmatpush1.msra.mxu0 0.0
          %4341 = vmatprep.subr.mxu0 0.0
          %4342 = vmatpush1.msra.mxu0 0.0
          %4343 = vmatprep.subr.mxu0 0.0
          %4344 = vmatpush1.msra.mxu0 0.0
          %4345 = vmatprep.subr.mxu0 0.0
          %4346 = vmatpush1.msra.mxu0 0.0
          %4347 = vmatprep.subr.mxu0 0.0
          %4348 = vmatpush1.msra.mxu0 0.0
          %4349 = vmatprep.subr.mxu0 0.0
          %4350 = vmatpush1.msra.mxu0 0.0
          %4351 = vmatprep.subr.mxu0 0.0
          %4352 = vmatpush1.msra.mxu0 0.0
          %4353 = vmatprep.subr.mxu0 0.0
          %4354 = vmatpush1.msra.mxu0 0.0
          %4355 = vmatprep.mubr.f32.mxu0 0.0
          %4356 = vmatmul.mubr.f32.gmra.mrb[0].mxu0 %v2725
          %v4357 = vpop.f32.mrb[0].mxu0
          %v4358 = vadd.f32 0.0, %v4357
          %v4359 = vpop.f32.mrb[0].mxu0
          %4360 = vmatprep.mubr.f32.mxu0 0.0
          %4361 = vmatmul.mubr.f32.gmra.mrb[0].mxu0 %v2728
          %v4362 = vpop.f32.mrb[0].mxu0
          %v4363 = vadd.f32 0.0, %v4362
          %v4364 = vpop.f32.mrb[0].mxu0
          %4365 = vdwg.mxu0
          %4366 = vmatprep.subr.mxu0 0.0
          %4367 = vmatpush1.msra.mxu0 %v159
          %4368 = vmatprep.subr.mxu0 0.0
          %4369 = vmatpush1.msra.mxu0 %v160
          %4370 = vmatprep.subr.mxu0 0.0
          %4371 = vmatpush1.msra.mxu0 0.0
          %4372 = vmatprep.subr.mxu0 0.0
          %4373 = vmatpush1.msra.mxu0 0.0
          %4374 = vmatprep.subr.mxu0 0.0
          %4375 = vmatpush1.msra.mxu0 0.0
          %4376 = vmatprep.subr.mxu0 0.0
          %4377 = vmatpush1.msra.mxu0 0.0
          %4378 = vmatprep.subr.mxu0 0.0
          %4379 = vmatpush1.msra.mxu0 0.0
          %4380 = vmatprep.subr.mxu0 0.0
          %4381 = vmatpush1.msra.mxu0 0.0
          %4382 = vmatprep.subr.mxu0 0.0
          %4383 = vmatpush1.msra.mxu0 0.0
          %4384 = vmatprep.subr.mxu0 0.0
          %4385 = vmatpush1.msra.mxu0 0.0
          %4386 = vmatprep.subr.mxu0 0.0
          %4387 = vmatpush1.msra.mxu0 0.0
          %4388 = vmatprep.subr.mxu0 0.0
          %4389 = vmatpush1.msra.mxu0 0.0
          %4390 = vmatprep.subr.mxu0 0.0
          %4391 = vmatpush1.msra.mxu0 0.0
          %4392 = vmatprep.subr.mxu0 0.0
          %4393 = vmatpush1.msra.mxu0 0.0
          %4394 = vmatprep.subr.mxu0 0.0
          %4395 = vmatpush1.msra.mxu0 0.0
          %4396 = vmatprep.subr.mxu0 0.0
          %4397 = vmatpush1.msra.mxu0 0.0
          %4398 = vmatprep.subr.mxu0 0.0
          %4399 = vmatpush1.msra.mxu0 0.0
          %4400 = vmatprep.subr.mxu0 0.0
          %4401 = vmatpush1.msra.mxu0 0.0
          %4402 = vmatprep.subr.mxu0 0.0
          %4403 = vmatpush1.msra.mxu0 0.0
          %4404 = vmatprep.subr.mxu0 0.0
          %4405 = vmatpush1.msra.mxu0 0.0
          %4406 = vmatprep.subr.mxu0 0.0
          %4407 = vmatpush1.msra.mxu0 0.0
          %4408 = vmatprep.subr.mxu0 0.0
          %4409 = vmatpush1.msra.mxu0 0.0
          %4410 = vmatprep.subr.mxu0 0.0
          %4411 = vmatpush1.msra.mxu0 0.0
          %4412 = vmatprep.subr.mxu0 0.0
          %4413 = vmatpush1.msra.mxu0 0.0
          %4414 = vmatprep.subr.mxu0 0.0
          %4415 = vmatpush1.msra.mxu0 0.0
          %4416 = vmatprep.subr.mxu0 0.0
          %4417 = vmatpush1.msra.mxu0 0.0
          %4418 = vmatprep.subr.mxu0 0.0
          %4419 = vmatpush1.msra.mxu0 0.0
          %4420 = vmatprep.subr.mxu0 0.0
          %4421 = vmatpush1.msra.mxu0 0.0
          %4422 = vmatprep.subr.mxu0 0.0
          %4423 = vmatpush1.msra.mxu0 0.0
          %4424 = vmatprep.subr.mxu0 0.0
          %4425 = vmatpush1.msra.mxu0 0.0
          %4426 = vmatprep.subr.mxu0 0.0
          %4427 = vmatpush1.msra.mxu0 0.0
          %4428 = vmatprep.subr.mxu0 0.0
          %4429 = vmatpush1.msra.mxu0 0.0
          %4430 = vmatprep.mubr.f32.mxu0 0.0
          %4431 = vmatmul.mubr.f32.gmra.mrb[0].mxu0 %v2806
          %v4432 = vpop.f32.mrb[0].mxu0
          %v4433 = vadd.f32 0.0, %v4432
          %v4434 = vpop.f32.mrb[0].mxu0
          %4435 = vmatprep.mubr.f32.mxu0 0.0
          %4436 = vmatmul.mubr.f32.gmra.mrb[0].mxu0 %v2809
          %v4437 = vpop.f32.mrb[0].mxu0
          %v4438 = vadd.f32 0.0, %v4437
          %v4439 = vpop.f32.mrb[0].mxu0
          %4440 = vdwg.mxu0
          %4441 = vmatprep.subr.mxu0 0.0
          %4442 = vmatpush1.msra.mxu0 %v159
          %4443 = vmatprep.subr.mxu0 0.0
          %4444 = vmatpush1.msra.mxu0 %v160
          %4445 = vmatprep.subr.mxu0 0.0
          %4446 = vmatpush1.msra.mxu0 0.0
          %4447 = vmatprep.subr.mxu0 0.0
          %4448 = vmatpush1.msra.mxu0 0.0
          %4449 = vmatprep.subr.mxu0 0.0
          %4450 = vmatpush1.msra.mxu0 0.0
          %4451 = vmatprep.subr.mxu0 0.0
          %4452 = vmatpush1.msra.mxu0 0.0
          %4453 = vmatprep.subr.mxu0 0.0
          %4454 = vmatpush1.msra.mxu0 0.0
          %4455 = vmatprep.subr.mxu0 0.0
          %4456 = vmatpush1.msra.mxu0 0.0
          %4457 = vmatprep.subr.mxu0 0.0
          %4458 = vmatpush1.msra.mxu0 0.0
          %4459 = vmatprep.subr.mxu0 0.0
          %4460 = vmatpush1.msra.mxu0 0.0
          %4461 = vmatprep.subr.mxu0 0.0
          %4462 = vmatpush1.msra.mxu0 0.0
          %4463 = vmatprep.subr.mxu0 0.0
          %4464 = vmatpush1.msra.mxu0 0.0
          %4465 = vmatprep.subr.mxu0 0.0
          %4466 = vmatpush1.msra.mxu0 0.0
          %4467 = vmatprep.subr.mxu0 0.0
          %4468 = vmatpush1.msra.mxu0 0.0
          %4469 = vmatprep.subr.mxu0 0.0
          %4470 = vmatpush1.msra.mxu0 0.0
          %4471 = vmatprep.subr.mxu0 0.0
          %4472 = vmatpush1.msra.mxu0 0.0
          %4473 = vmatprep.subr.mxu0 0.0
          %4474 = vmatpush1.msra.mxu0 0.0
          %4475 = vmatprep.subr.mxu0 0.0
          %4476 = vmatpush1.msra.mxu0 0.0
          %4477 = vmatprep.subr.mxu0 0.0
          %4478 = vmatpush1.msra.mxu0 0.0
          %4479 = vmatprep.subr.mxu0 0.0
          %4480 = vmatpush1.msra.mxu0 0.0
          %4481 = vmatprep.subr.mxu0 0.0
          %4482 = vmatpush1.msra.mxu0 0.0
          %4483 = vmatprep.subr.mxu0 0.0
          %4484 = vmatpush1.msra.mxu0 0.0
          %4485 = vmatprep.subr.mxu0 0.0
          %4486 = vmatpush1.msra.mxu0 0.0
          %4487 = vmatprep.subr.mxu0 0.0
          %4488 = vmatpush1.msra.mxu0 0.0
          %4489 = vmatprep.subr.mxu0 0.0
          %4490 = vmatpush1.msra.mxu0 0.0
          %4491 = vmatprep.subr.mxu0 0.0
          %4492 = vmatpush1.msra.mxu0 0.0
          %4493 = vmatprep.subr.mxu0 0.0
          %4494 = vmatpush1.msra.mxu0 0.0
          %4495 = vmatprep.subr.mxu0 0.0
          %4496 = vmatpush1.msra.mxu0 0.0
          %4497 = vmatprep.subr.mxu0 0.0
          %4498 = vmatpush1.msra.mxu0 0.0
          %4499 = vmatprep.subr.mxu0 0.0
          %4500 = vmatpush1.msra.mxu0 0.0
          %4501 = vmatprep.subr.mxu0 0.0
          %4502 = vmatpush1.msra.mxu0 0.0
          %4503 = vmatprep.subr.mxu0 0.0
          %4504 = vmatpush1.msra.mxu0 0.0
          %4505 = vmatprep.mubr.f32.mxu0 0.0
          %4506 = vmatmul.mubr.f32.gmra.mrb[0].mxu0 %v2887
          %v4507 = vpop.f32.mrb[0].mxu0
          %v4508 = vadd.f32 0.0, %v4507
          %v4509 = vpop.f32.mrb[0].mxu0
          %4510 = vmatprep.mubr.f32.mxu0 0.0
          %4511 = vmatmul.mubr.f32.gmra.mrb[0].mxu0 %v2890
          %v4512 = vpop.f32.mrb[0].mxu0
          %v4513 = vadd.f32 0.0, %v4512
          %v4514 = vpop.f32.mrb[0].mxu0
          %4515 = vdwg.mxu0
          %4516 = vmatprep.subr.mxu0 0.0
          %4517 = vmatpush1.msra.mxu0 %v159
          %4518 = vmatprep.subr.mxu0 0.0
          %4519 = vmatpush1.msra.mxu0 %v160
          %4520 = vmatprep.subr.mxu0 0.0
          %4521 = vmatpush1.msra.mxu0 0.0
          %4522 = vmatprep.subr.mxu0 0.0
          %4523 = vmatpush1.msra.mxu0 0.0
          %4524 = vmatprep.subr.mxu0 0.0
          %4525 = vmatpush1.msra.mxu0 0.0
          %4526 = vmatprep.subr.mxu0 0.0
          %4527 = vmatpush1.msra.mxu0 0.0
          %4528 = vmatprep.subr.mxu0 0.0
          %4529 = vmatpush1.msra.mxu0 0.0
          %4530 = vmatprep.subr.mxu0 0.0
          %4531 = vmatpush1.msra.mxu0 0.0
          %4532 = vmatprep.subr.mxu0 0.0
          %4533 = vmatpush1.msra.mxu0 0.0
          %4534 = vmatprep.subr.mxu0 0.0
          %4535 = vmatpush1.msra.mxu0 0.0
          %4536 = vmatprep.subr.mxu0 0.0
          %4537 = vmatpush1.msra.mxu0 0.0
          %4538 = vmatprep.subr.mxu0 0.0
          %4539 = vmatpush1.msra.mxu0 0.0
          %4540 = vmatprep.subr.mxu0 0.0
          %4541 = vmatpush1.msra.mxu0 0.0
          %4542 = vmatprep.subr.mxu0 0.0
          %4543 = vmatpush1.msra.mxu0 0.0
          %4544 = vmatprep.subr.mxu0 0.0
          %4545 = vmatpush1.msra.mxu0 0.0
          %4546 = vmatprep.subr.mxu0 0.0
          %4547 = vmatpush1.msra.mxu0 0.0
          %4548 = vmatprep.subr.mxu0 0.0
          %4549 = vmatpush1.msra.mxu0 0.0
          %4550 = vmatprep.subr.mxu0 0.0
          %4551 = vmatpush1.msra.mxu0 0.0
          %4552 = vmatprep.subr.mxu0 0.0
          %4553 = vmatpush1.msra.mxu0 0.0
          %4554 = vmatprep.subr.mxu0 0.0
          %4555 = vmatpush1.msra.mxu0 0.0
          %4556 = vmatprep.subr.mxu0 0.0
          %4557 = vmatpush1.msra.mxu0 0.0
          %4558 = vmatprep.subr.mxu0 0.0
          %4559 = vmatpush1.msra.mxu0 0.0
          %4560 = vmatprep.subr.mxu0 0.0
          %4561 = vmatpush1.msra.mxu0 0.0
          %4562 = vmatprep.subr.mxu0 0.0
          %4563 = vmatpush1.msra.mxu0 0.0
          %4564 = vmatprep.subr.mxu0 0.0
          %4565 = vmatpush1.msra.mxu0 0.0
          %4566 = vmatprep.subr.mxu0 0.0
          %4567 = vmatpush1.msra.mxu0 0.0
          %4568 = vmatprep.subr.mxu0 0.0
          %4569 = vmatpush1.msra.mxu0 0.0
          %4570 = vmatprep.subr.mxu0 0.0
          %4571 = vmatpush1.msra.mxu0 0.0
          %4572 = vmatprep.subr.mxu0 0.0
          %4573 = vmatpush1.msra.mxu0 0.0
          %4574 = vmatprep.subr.mxu0 0.0
          %4575 = vmatpush1.msra.mxu0 0.0
          %4576 = vmatprep.subr.mxu0 0.0
          %4577 = vmatpush1.msra.mxu0 0.0
          %4578 = vmatprep.subr.mxu0 0.0
          %4579 = vmatpush1.msra.mxu0 0.0
          %4580 = vmatprep.mubr.f32.mxu0 0.0
          %4581 = vmatmul.mubr.f32.gmra.mrb[0].mxu0 %v2968
          %v4582 = vpop.f32.mrb[0].mxu0
          %v4583 = vadd.f32 0.0, %v4582
          %v4584 = vpop.f32.mrb[0].mxu0
          %4585 = vmatprep.mubr.f32.mxu0 0.0
          %4586 = vmatmul.mubr.f32.gmra.mrb[0].mxu0 %v2971
          %v4587 = vpop.f32.mrb[0].mxu0
          %v4588 = vadd.f32 0.0, %v4587
          %v4589 = vpop.f32.mrb[0].mxu0
          %4590 = vdwg.mxu0
          %4591 = vmatprep.subr.mxu0 0.0
          %4592 = vmatpush1.msra.mxu0 %v159
          %4593 = vmatprep.subr.mxu0 0.0
          %4594 = vmatpush1.msra.mxu0 %v160
          %4595 = vmatprep.subr.mxu0 0.0
          %4596 = vmatpush1.msra.mxu0 0.0
          %4597 = vmatprep.subr.mxu0 0.0
          %4598 = vmatpush1.msra.mxu0 0.0
          %4599 = vmatprep.subr.mxu0 0.0
          %4600 = vmatpush1.msra.mxu0 0.0
          %4601 = vmatprep.subr.mxu0 0.0
          %4602 = vmatpush1.msra.mxu0 0.0
          %4603 = vmatprep.subr.mxu0 0.0
          %4604 = vmatpush1.msra.mxu0 0.0
          %4605 = vmatprep.subr.mxu0 0.0
          %4606 = vmatpush1.msra.mxu0 0.0
          %4607 = vmatprep.subr.mxu0 0.0
          %4608 = vmatpush1.msra.mxu0 0.0
          %4609 = vmatprep.subr.mxu0 0.0
          %4610 = vmatpush1.msra.mxu0 0.0
          %4611 = vmatprep.subr.mxu0 0.0
          %4612 = vmatpush1.msra.mxu0 0.0
          %4613 = vmatprep.subr.mxu0 0.0
          %4614 = vmatpush1.msra.mxu0 0.0
          %4615 = vmatprep.subr.mxu0 0.0
          %4616 = vmatpush1.msra.mxu0 0.0
          %4617 = vmatprep.subr.mxu0 0.0
          %4618 = vmatpush1.msra.mxu0 0.0
          %4619 = vmatprep.subr.mxu0 0.0
          %4620 = vmatpush1.msra.mxu0 0.0
          %4621 = vmatprep.subr.mxu0 0.0
          %4622 = vmatpush1.msra.mxu0 0.0
          %4623 = vmatprep.subr.mxu0 0.0
          %4624 = vmatpush1.msra.mxu0 0.0
          %4625 = vmatprep.subr.mxu0 0.0
          %4626 = vmatpush1.msra.mxu0 0.0
          %4627 = vmatprep.subr.mxu0 0.0
          %4628 = vmatpush1.msra.mxu0 0.0
          %4629 = vmatprep.subr.mxu0 0.0
          %4630 = vmatpush1.msra.mxu0 0.0
          %4631 = vmatprep.subr.mxu0 0.0
          %4632 = vmatpush1.msra.mxu0 0.0
          %4633 = vmatprep.subr.mxu0 0.0
          %4634 = vmatpush1.msra.mxu0 0.0
          %4635 = vmatprep.subr.mxu0 0.0
          %4636 = vmatpush1.msra.mxu0 0.0
          %4637 = vmatprep.subr.mxu0 0.0
          %4638 = vmatpush1.msra.mxu0 0.0
          %4639 = vmatprep.subr.mxu0 0.0
          %4640 = vmatpush1.msra.mxu0 0.0
          %4641 = vmatprep.subr.mxu0 0.0
          %4642 = vmatpush1.msra.mxu0 0.0
          %4643 = vmatprep.subr.mxu0 0.0
          %4644 = vmatpush1.msra.mxu0 0.0
          %4645 = vmatprep.subr.mxu0 0.0
          %4646 = vmatpush1.msra.mxu0 0.0
          %4647 = vmatprep.subr.mxu0 0.0
          %4648 = vmatpush1.msra.mxu0 0.0
          %4649 = vmatprep.subr.mxu0 0.0
          %4650 = vmatpush1.msra.mxu0 0.0
          %4651 = vmatprep.subr.mxu0 0.0
          %4652 = vmatpush1.msra.mxu0 0.0
          %4653 = vmatprep.subr.mxu0 0.0
          %4654 = vmatpush1.msra.mxu0 0.0
          %4655 = vmatprep.mubr.f32.mxu0 0.0
          %4656 = vmatmul.mubr.f32.gmra.mrb[0].mxu0 %v3049
          %v4657 = vpop.f32.mrb[0].mxu0
          %v4658 = vadd.f32 0.0, %v4657
          %v4659 = vpop.f32.mrb[0].mxu0
          %4660 = vmatprep.mubr.f32.mxu0 0.0
          %4661 = vmatmul.mubr.f32.gmra.mrb[0].mxu0 %v3052
          %v4662 = vpop.f32.mrb[0].mxu0
          %v4663 = vadd.f32 0.0, %v4662
          %v4664 = vpop.f32.mrb[0].mxu0
          %4665 = vdwg.mxu0
          %4666 = vmatprep.subr.mxu0 0.0
          %4667 = vmatpush1.msra.mxu0 %v159
          %4668 = vmatprep.subr.mxu0 0.0
          %4669 = vmatpush1.msra.mxu0 %v160
          %4670 = vmatprep.subr.mxu0 0.0
          %4671 = vmatpush1.msra.mxu0 0.0
          %4672 = vmatprep.subr.mxu0 0.0
          %4673 = vmatpush1.msra.mxu0 0.0
          %4674 = vmatprep.subr.mxu0 0.0
          %4675 = vmatpush1.msra.mxu0 0.0
          %4676 = vmatprep.subr.mxu0 0.0
          %4677 = vmatpush1.msra.mxu0 0.0
          %4678 = vmatprep.subr.mxu0 0.0
          %4679 = vmatpush1.msra.mxu0 0.0
          %4680 = vmatprep.subr.mxu0 0.0
          %4681 = vmatpush1.msra.mxu0 0.0
          %4682 = vmatprep.subr.mxu0 0.0
          %4683 = vmatpush1.msra.mxu0 0.0
          %4684 = vmatprep.subr.mxu0 0.0
          %4685 = vmatpush1.msra.mxu0 0.0
          %4686 = vmatprep.subr.mxu0 0.0
          %4687 = vmatpush1.msra.mxu0 0.0
          %4688 = vmatprep.subr.mxu0 0.0
          %4689 = vmatpush1.msra.mxu0 0.0
          %4690 = vmatprep.subr.mxu0 0.0
          %4691 = vmatpush1.msra.mxu0 0.0
          %4692 = vmatprep.subr.mxu0 0.0
          %4693 = vmatpush1.msra.mxu0 0.0
          %4694 = vmatprep.subr.mxu0 0.0
          %4695 = vmatpush1.msra.mxu0 0.0
          %4696 = vmatprep.subr.mxu0 0.0
          %4697 = vmatpush1.msra.mxu0 0.0
          %4698 = vmatprep.subr.mxu0 0.0
          %4699 = vmatpush1.msra.mxu0 0.0
          %4700 = vmatprep.subr.mxu0 0.0
          %4701 = vmatpush1.msra.mxu0 0.0
          %4702 = vmatprep.subr.mxu0 0.0
          %4703 = vmatpush1.msra.mxu0 0.0
          %4704 = vmatprep.subr.mxu0 0.0
          %4705 = vmatpush1.msra.mxu0 0.0
          %4706 = vmatprep.subr.mxu0 0.0
          %4707 = vmatpush1.msra.mxu0 0.0
          %4708 = vmatprep.subr.mxu0 0.0
          %4709 = vmatpush1.msra.mxu0 0.0
          %4710 = vmatprep.subr.mxu0 0.0
          %4711 = vmatpush1.msra.mxu0 0.0
          %4712 = vmatprep.subr.mxu0 0.0
          %4713 = vmatpush1.msra.mxu0 0.0
          %4714 = vmatprep.subr.mxu0 0.0
          %4715 = vmatpush1.msra.mxu0 0.0
          %4716 = vmatprep.subr.mxu0 0.0
          %4717 = vmatpush1.msra.mxu0 0.0
          %4718 = vmatprep.subr.mxu0 0.0
          %4719 = vmatpush1.msra.mxu0 0.0
          %4720 = vmatprep.subr.mxu0 0.0
          %4721 = vmatpush1.msra.mxu0 0.0
          %4722 = vmatprep.subr.mxu0 0.0
          %4723 = vmatpush1.msra.mxu0 0.0
          %4724 = vmatprep.subr.mxu0 0.0
          %4725 = vmatpush1.msra.mxu0 0.0
          %4726 = vmatprep.subr.mxu0 0.0
          %4727 = vmatpush1.msra.mxu0 0.0
          %4728 = vmatprep.subr.mxu0 0.0
          %4729 = vmatpush1.msra.mxu0 0.0
          %4730 = vmatprep.mubr.f32.mxu0 0.0
          %4731 = vmatmul.mubr.f32.gmra.mrb[0].mxu0 %v3130
          %v4732 = vpop.f32.mrb[0].mxu0
          %v4733 = vadd.f32 0.0, %v4732
          %v4734 = vpop.f32.mrb[0].mxu0
          %4735 = vmatprep.mubr.f32.mxu0 0.0
          %4736 = vmatmul.mubr.f32.gmra.mrb[0].mxu0 %v3133
          %v4737 = vpop.f32.mrb[0].mxu0
          %v4738 = vadd.f32 0.0, %v4737
          %v4739 = vpop.f32.mrb[0].mxu0
          %4740 = vdwg.mxu0
          %v4741 = vmul.f32 %v1881, %v3608
          %v4742 = vmul.f32 %v1882, %v3613
          %v4743 = vmul.f32 %v1883, %v3683
          %v4744 = vmul.f32 %v1884, %v3688
          %v4745 = vmul.f32 %v1885, %v3758
          %v4746 = vmul.f32 %v1886, %v3763
          %v4747 = vmul.f32 %v1887, %v3833
          %v4748 = vmul.f32 %v1888, %v3838
          %v4749 = vmul.f32 %v1889, %v3908
          %v4750 = vmul.f32 %v1890, %v3913
          %v4751 = vmul.f32 %v1891, %v3983
          %v4752 = vmul.f32 %v1892, %v3988
          %v4753 = vmul.f32 %v1893, %v4058
          %v4754 = vmul.f32 %v1894, %v4063
          %v4755 = vmul.f32 %v1895, %v4133
          %v4756 = vmul.f32 %v1896, %v4138
          %v4757 = vmul.f32 %v1897, %v4208
          %v4758 = vmul.f32 %v1898, %v4213
          %v4759 = vmul.f32 %v1899, %v4283
          %v4760 = vmul.f32 %v1900, %v4288
          %v4761 = vmul.f32 %v1901, %v4358
          %v4762 = vmul.f32 %v1902, %v4363
          %v4763 = vmul.f32 %v1903, %v4433
          %v4764 = vmul.f32 %v1904, %v4438
          %v4765 = vmul.f32 %v1905, %v4508
          %v4766 = vmul.f32 %v1906, %v4513
          %v4767 = vmul.f32 %v1907, %v4583
          %v4768 = vmul.f32 %v1908, %v4588
          %v4769 = vmul.f32 %v1909, %v4658
          %v4770 = vmul.f32 %v1910, %v4663
          %v4771 = vmul.f32 %v1911, %v4733
          %v4772 = vmul.f32 %v1912, %v4738
          %v4773 = vsel %vm1913, %v4741, 0.0
          %4774 = vadd.xlane.f32.xlu0 %v4773
          %v4775 = vpop.xlane.xlu0 %4774
          %v4776 = vsel %vm1913, %v4742, 0.0
          %4777 = vadd.xlane.f32.xlu0 %v4776
          %v4778 = vpop.xlane.xlu0 %4777
          %v4779 = vsel %vm1913, %v4743, 0.0
          %4780 = vadd.xlane.f32.xlu0 %v4779
          %v4781 = vpop.xlane.xlu0 %4780
          %v4782 = vsel %vm1913, %v4744, 0.0
          %4783 = vadd.xlane.f32.xlu0 %v4782
          %v4784 = vpop.xlane.xlu0 %4783
          %v4785 = vsel %vm1913, %v4745, 0.0
          %4786 = vadd.xlane.f32.xlu0 %v4785
          %v4787 = vpop.xlane.xlu0 %4786
          %v4788 = vsel %vm1913, %v4746, 0.0
          %4789 = vadd.xlane.f32.xlu0 %v4788
          %v4790 = vpop.xlane.xlu0 %4789
          %v4791 = vsel %vm1913, %v4747, 0.0
          %4792 = vadd.xlane.f32.xlu0 %v4791
          %v4793 = vpop.xlane.xlu0 %4792
          %v4794 = vsel %vm1913, %v4748, 0.0
          %4795 = vadd.xlane.f32.xlu0 %v4794
          %v4796 = vpop.xlane.xlu0 %4795
          %v4797 = vsel %vm1913, %v4749, 0.0
          %4798 = vadd.xlane.f32.xlu0 %v4797
          %v4799 = vpop.xlane.xlu0 %4798
          %v4800 = vsel %vm1913, %v4750, 0.0
          %4801 = vadd.xlane.f32.xlu0 %v4800
          %v4802 = vpop.xlane.xlu0 %4801
          %v4803 = vsel %vm1913, %v4751, 0.0
          %4804 = vadd.xlane.f32.xlu0 %v4803
          %v4805 = vpop.xlane.xlu0 %4804
          %v4806 = vsel %vm1913, %v4752, 0.0
          %4807 = vadd.xlane.f32.xlu0 %v4806
          %v4808 = vpop.xlane.xlu0 %4807
          %v4809 = vsel %vm1913, %v4753, 0.0
          %4810 = vadd.xlane.f32.xlu0 %v4809
          %v4811 = vpop.xlane.xlu0 %4810
          %v4812 = vsel %vm1913, %v4754, 0.0
          %4813 = vadd.xlane.f32.xlu0 %v4812
          %v4814 = vpop.xlane.xlu0 %4813
          %v4815 = vsel %vm1913, %v4755, 0.0
          %4816 = vadd.xlane.f32.xlu0 %v4815
          %v4817 = vpop.xlane.xlu0 %4816
          %v4818 = vsel %vm1913, %v4756, 0.0
          %4819 = vadd.xlane.f32.xlu0 %v4818
          %v4820 = vpop.xlane.xlu0 %4819
          %v4821 = vsel %vm1913, %v4757, 0.0
          %4822 = vadd.xlane.f32.xlu0 %v4821
          %v4823 = vpop.xlane.xlu0 %4822
          %v4824 = vsel %vm1913, %v4758, 0.0
          %4825 = vadd.xlane.f32.xlu0 %v4824
          %v4826 = vpop.xlane.xlu0 %4825
          %v4827 = vsel %vm1913, %v4759, 0.0
          %4828 = vadd.xlane.f32.xlu0 %v4827
          %v4829 = vpop.xlane.xlu0 %4828
          %v4830 = vsel %vm1913, %v4760, 0.0
          %4831 = vadd.xlane.f32.xlu0 %v4830
          %v4832 = vpop.xlane.xlu0 %4831
          %v4833 = vsel %vm1913, %v4761, 0.0
          %4834 = vadd.xlane.f32.xlu0 %v4833
          %v4835 = vpop.xlane.xlu0 %4834
          %v4836 = vsel %vm1913, %v4762, 0.0
          %4837 = vadd.xlane.f32.xlu0 %v4836
          %v4838 = vpop.xlane.xlu0 %4837
          %v4839 = vsel %vm1913, %v4763, 0.0
          %4840 = vadd.xlane.f32.xlu0 %v4839
          %v4841 = vpop.xlane.xlu0 %4840
          %v4842 = vsel %vm1913, %v4764, 0.0
          %4843 = vadd.xlane.f32.xlu0 %v4842
          %v4844 = vpop.xlane.xlu0 %4843
          %v4845 = vsel %vm1913, %v4765, 0.0
          %4846 = vadd.xlane.f32.xlu0 %v4845
          %v4847 = vpop.xlane.xlu0 %4846
          %v4848 = vsel %vm1913, %v4766, 0.0
          %4849 = vadd.xlane.f32.xlu0 %v4848
          %v4850 = vpop.xlane.xlu0 %4849
          %v4851 = vsel %vm1913, %v4767, 0.0
          %4852 = vadd.xlane.f32.xlu0 %v4851
          %v4853 = vpop.xlane.xlu0 %4852
          %v4854 = vsel %vm1913, %v4768, 0.0
          %4855 = vadd.xlane.f32.xlu0 %v4854
          %v4856 = vpop.xlane.xlu0 %4855
          %v4857 = vsel %vm1913, %v4769, 0.0
          %4858 = vadd.xlane.f32.xlu0 %v4857
          %v4859 = vpop.xlane.xlu0 %4858
          %v4860 = vsel %vm1913, %v4770, 0.0
          %4861 = vadd.xlane.f32.xlu0 %v4860
          %v4862 = vpop.xlane.xlu0 %4861
          %v4863 = vsel %vm1913, %v4771, 0.0
          %4864 = vadd.xlane.f32.xlu0 %v4863
          %v4865 = vpop.xlane.xlu0 %4864
          %v4866 = vsel %vm1913, %v4772, 0.0
          %4867 = vadd.xlane.f32.xlu0 %v4866
          %v4868 = vpop.xlane.xlu0 %4867
          %v4901 = vlaneseq
          %v4902 = vshrl.u32 %v4901, 7
          %v4903 = vsub.s32 %v149, %v4902
          %v4904 = vrot.slane %v4775, %v4903
          %v4905 = vlaneseq
          %v4906 = vshrl.u32 %v4905, 7
          %v4907 = vsub.s32 %v3374, %v4906
          %v4908 = vrot.slane %v4778, %v4907
          %v4909 = vsel %vm3379, %v4908, %v4904
          %v4910 = vlaneseq
          %v4911 = vshrl.u32 %v4910, 7
          %v4912 = vsub.s32 %v149, %v4911
          %v4913 = vrot.slane %v4781, %v4912
          %v4914 = vlaneseq
          %v4915 = vshrl.u32 %v4914, 7
          %v4916 = vsub.s32 %v3374, %v4915
          %v4917 = vrot.slane %v4784, %v4916
          %v4918 = vsel %vm3379, %v4917, %v4913
          %v4919 = vlaneseq
          %v4920 = vshrl.u32 %v4919, 7
          %v4921 = vsub.s32 %v149, %v4920
          %v4922 = vrot.slane %v4787, %v4921
          %v4923 = vlaneseq
          %v4924 = vshrl.u32 %v4923, 7
          %v4925 = vsub.s32 %v3374, %v4924
          %v4926 = vrot.slane %v4790, %v4925
          %v4927 = vsel %vm3379, %v4926, %v4922
          %v4928 = vlaneseq
          %v4929 = vshrl.u32 %v4928, 7
          %v4930 = vsub.s32 %v149, %v4929
          %v4931 = vrot.slane %v4793, %v4930
          %v4932 = vlaneseq
          %v4933 = vshrl.u32 %v4932, 7
          %v4934 = vsub.s32 %v3374, %v4933
          %v4935 = vrot.slane %v4796, %v4934
          %v4936 = vsel %vm3379, %v4935, %v4931
          %v4937 = vlaneseq
          %v4938 = vshrl.u32 %v4937, 7
          %v4939 = vsub.s32 %v149, %v4938
          %v4940 = vrot.slane %v4799, %v4939
          %v4941 = vlaneseq
          %v4942 = vshrl.u32 %v4941, 7
          %v4943 = vsub.s32 %v3374, %v4942
          %v4944 = vrot.slane %v4802, %v4943
          %v4945 = vsel %vm3379, %v4944, %v4940
          %v4946 = vlaneseq
          %v4947 = vshrl.u32 %v4946, 7
          %v4948 = vsub.s32 %v149, %v4947
          %v4949 = vrot.slane %v4805, %v4948
          %v4950 = vlaneseq
          %v4951 = vshrl.u32 %v4950, 7
          %v4952 = vsub.s32 %v3374, %v4951
          %v4953 = vrot.slane %v4808, %v4952
          %v4954 = vsel %vm3379, %v4953, %v4949
          %v4955 = vlaneseq
          %v4956 = vshrl.u32 %v4955, 7
          %v4957 = vsub.s32 %v149, %v4956
          %v4958 = vrot.slane %v4811, %v4957
          %v4959 = vlaneseq
          %v4960 = vshrl.u32 %v4959, 7
          %v4961 = vsub.s32 %v3374, %v4960
          %v4962 = vrot.slane %v4814, %v4961
          %v4963 = vsel %vm3379, %v4962, %v4958
          %v4964 = vlaneseq
          %v4965 = vshrl.u32 %v4964, 7
          %v4966 = vsub.s32 %v149, %v4965
          %v4967 = vrot.slane %v4817, %v4966
          %v4968 = vlaneseq
          %v4969 = vshrl.u32 %v4968, 7
          %v4970 = vsub.s32 %v3374, %v4969
          %v4971 = vrot.slane %v4820, %v4970
          %v4972 = vsel %vm3379, %v4971, %v4967
          %v4973 = vlaneseq
          %v4974 = vshrl.u32 %v4973, 7
          %v4975 = vsub.s32 %v149, %v4974
          %v4976 = vrot.slane %v4823, %v4975
          %v4977 = vlaneseq
          %v4978 = vshrl.u32 %v4977, 7
          %v4979 = vsub.s32 %v3374, %v4978
          %v4980 = vrot.slane %v4826, %v4979
          %v4981 = vsel %vm3379, %v4980, %v4976
          %v4982 = vlaneseq
          %v4983 = vshrl.u32 %v4982, 7
          %v4984 = vsub.s32 %v149, %v4983
          %v4985 = vrot.slane %v4829, %v4984
          %v4986 = vlaneseq
          %v4987 = vshrl.u32 %v4986, 7
          %v4988 = vsub.s32 %v3374, %v4987
          %v4989 = vrot.slane %v4832, %v4988
          %v4990 = vsel %vm3379, %v4989, %v4985
          %v4991 = vlaneseq
          %v4992 = vshrl.u32 %v4991, 7
          %v4993 = vsub.s32 %v149, %v4992
          %v4994 = vrot.slane %v4835, %v4993
          %v4995 = vlaneseq
          %v4996 = vshrl.u32 %v4995, 7
          %v4997 = vsub.s32 %v3374, %v4996
          %v4998 = vrot.slane %v4838, %v4997
          %v4999 = vsel %vm3379, %v4998, %v4994
          %v5000 = vlaneseq
          %v5001 = vshrl.u32 %v5000, 7
          %v5002 = vsub.s32 %v149, %v5001
          %v5003 = vrot.slane %v4841, %v5002
          %v5004 = vlaneseq
          %v5005 = vshrl.u32 %v5004, 7
          %v5006 = vsub.s32 %v3374, %v5005
          %v5007 = vrot.slane %v4844, %v5006
          %v5008 = vsel %vm3379, %v5007, %v5003
          %v5009 = vlaneseq
          %v5010 = vshrl.u32 %v5009, 7
          %v5011 = vsub.s32 %v149, %v5010
          %v5012 = vrot.slane %v4847, %v5011
          %v5013 = vlaneseq
          %v5014 = vshrl.u32 %v5013, 7
          %v5015 = vsub.s32 %v3374, %v5014
          %v5016 = vrot.slane %v4850, %v5015
          %v5017 = vsel %vm3379, %v5016, %v5012
          %v5018 = vlaneseq
          %v5019 = vshrl.u32 %v5018, 7
          %v5020 = vsub.s32 %v149, %v5019
          %v5021 = vrot.slane %v4853, %v5020
          %v5022 = vlaneseq
          %v5023 = vshrl.u32 %v5022, 7
          %v5024 = vsub.s32 %v3374, %v5023
          %v5025 = vrot.slane %v4856, %v5024
          %v5026 = vsel %vm3379, %v5025, %v5021
          %v5027 = vlaneseq
          %v5028 = vshrl.u32 %v5027, 7
          %v5029 = vsub.s32 %v149, %v5028
          %v5030 = vrot.slane %v4859, %v5029
          %v5031 = vlaneseq
          %v5032 = vshrl.u32 %v5031, 7
          %v5033 = vsub.s32 %v3374, %v5032
          %v5034 = vrot.slane %v4862, %v5033
          %v5035 = vsel %vm3379, %v5034, %v5030
          %v5036 = vlaneseq
          %v5037 = vshrl.u32 %v5036, 7
          %v5038 = vsub.s32 %v149, %v5037
          %v5039 = vrot.slane %v4865, %v5038
          %v5040 = vlaneseq
          %v5041 = vshrl.u32 %v5040, 7
          %v5042 = vsub.s32 %v3374, %v5041
          %v5043 = vrot.slane %v4868, %v5042
          %v5044 = vsel %vm3379, %v5043, %v5039
          %v5045 = vsel %vm3516, %v4918, %v4909
          %v5046 = vsel %vm3518, %v4927, %v5045
          %v5047 = vsel %vm3520, %v4936, %v5046
          %v5048 = vsel %vm3522, %v4945, %v5047
          %v5049 = vsel %vm3524, %v4954, %v5048
          %v5050 = vsel %vm3526, %v4963, %v5049
          %v5051 = vsel %vm3528, %v4972, %v5050
          %v5052 = vsel %vm3516, %v4990, %v4981
          %v5053 = vsel %vm3518, %v4999, %v5052
          %v5054 = vsel %vm3520, %v5008, %v5053
          %v5055 = vsel %vm3522, %v5017, %v5054
          %v5056 = vsel %vm3524, %v5026, %v5055
          %v5057 = vsel %vm3526, %v5035, %v5056
          %v5058 = vsel %vm3528, %v5044, %v5057
          %v5061 = vadd.f32 %v159, %v5051
          %v5062 = vadd.f32 %v160, %v5058
        $region33: #{_lambda_.1} parent=23 // loop_footer
          %s156 = sadd.s32 1, %s152
        $region34: #{_lambda_.1} parent=23 // loop_footer_branch
          %151 = sbr.rel target = $region30
        $region35: #{_lambda_.1} parent=23 // loop_exit
          _
        %vm5063 = vcmask 130048
        %5064 = vst.msk [vmem:[%s134] sm:$0xff] %vm5063, %v157
        %5065 = vst.msk [vmem:[%s134 + $0x8] sm:$0xff] %vm5063, %v158
        %s5066 = scalar_lea.vmem %s134, 16 [#allocation5]
        %5067 = vst.msk [vmem:[%s5066] sm:$0xff] %vm5063, %v159
        %5068 = vst.msk [vmem:[%s5066 + $0x8] sm:$0xff] %vm5063, %v160
        %s5069 = sand.u32 %s52, 1
        %s5070 = scalar_lea.sflag [#allocation4], %s5069
        %s5071 = sand.u32 %s52, 1
        %s5072 = smul.addr %s5071, 32
        %s5073 = scalar_lea.vmem [#allocation5], %s5072
        // Predicated region
        $region36: #{_lambda_.1} parent=23 // pred_check
          %p5074 = pneg %p62
        $region37: #{_lambda_.1} parent=23 // pred_check_branch
          %5076 = sbr.rel (%p5074) target = $region39
        $region38: #{_lambda_.1} parent=23 // pred_region
          %s5078 = ssub.s32 512, 512
          %5079 = vsyncadd %s5070, %s5078
          %s5080 = smul.addr %s18, 4
          %s5081 = smul.addr %s5080, 128
          %s5082 = scalar_lea.hbm %s1, %s5081
          %s5083 = sshll.u32 %s5073, 4
          %s5084 = int_to_ptr.vmem [resolvable:$true] %s5083
          %5089 = dma.vmem_to_hbm [thread:$0]  %s5084, 512, %s5082, %s5070, 128, 128, 8
        $region39: #{_lambda_.1} parent=23 // pred_fallthru
          _
      $region24: #{_lambda_.1} parent=5 // pred_fallthru
        _
      %p5090 = scmp.le.s32.totalorder 2, %s13
      // Predicated region
      $region40: #{_lambda_.1} parent=5 // pred_check
        %p5091 = pneg %p5090
      $region41: #{_lambda_.1} parent=5 // pred_check_branch
        %5093 = sbr.rel (%p5091) target = $region43
      $region42: #{_lambda_.1} parent=5 // pred_region
        %s5094 = ssub.s32 %s13, 2
        // Predicated region
        $region44: #{_lambda_.1} parent=42 // pred_check
          %p5095 = pneg %p68
        $region45: #{_lambda_.1} parent=42 // pred_check_branch
          %5097 = sbr.rel (%p5095) target = $region47
        $region46: #{_lambda_.1} parent=42 // pred_region
          %s5098 = sand.u32 %s53, 1
          %s5099 = scalar_lea.sflag [#allocation4], %s5098
          %s5100 = sand.u32 %s53, 1
          %s5101 = smul.addr %s5100, 32
          %s5102 = scalar_lea.vmem [#allocation5], %s5101
          %5103 = dma.done %s5099, 512
        $region47: #{_lambda_.1} parent=42 // pred_fallthru
          _
      $region43: #{_lambda_.1} parent=5 // pred_fallthru
        _
    $region6: #{_lambda_.1} parent=1 // loop_footer
      %s17 = sadd.s32 1, %s13
    $region7: #{_lambda_.1} parent=1 // loop_footer_branch
      %12 = sbr.rel target = $region3
    $region8: #{_lambda_.1} parent=1 // loop_exit
      _
    %5104 = vsyncpa [#allocation3], 1
    %s5105 = scalar_lea.sflag [#allocation3], 1
    %5106 = vsyncpa %s5105, 1
    %5107 = vsyncpa [#allocation4], 1
    %s5108 = scalar_lea.sflag [#allocation4], 1
    %5109 = vsyncpa %s5108, 1

</llo_original>
